<compile_context>
chip_gen: v7x
topology: tpu7x:2x2x1
jax: 0.10.0
libtpu: 0.0.40
codegen_flags: <defaults>
</compile_context>

<pallas_src>
import functools

import jax
import jax.numpy as jnp
from jax.experimental import pallas as pl
from jax.experimental.pallas import tpu as pltpu


# ----------------------------------------------------------------------------
# Kernel: ONE ReUnit applied to one batch block per grid step.
# Grid = (batch_blocks, depth); residual stream persists in acc_ref across the
# depth axis (last / fastest grid axis).
# ----------------------------------------------------------------------------
def _reunit_unit_kernel(x_ref,
                        ln1w_ref, ln1b_ref,
                        qkvw_ref,
                        projw_ref, projb_ref,
                        ln2w_ref, ln2b_ref,
                        fc1w_ref, fc1b_ref,
                        fc2w_ref, fc2b_ref,
                        o_ref,
                        acc_ref,
                        *, num_heads: int, eps: float, approx_gelu: bool):
    bb, N, D = x_ref.shape
    H = num_heads
    hd = D // H
    M = bb * N                                 # batch rows folded into matmul M
    u = pl.program_id(1)                       # unit index (depth axis)

    mm_dtype = qkvw_ref.dtype                  # matmul operand dtype (bf16-capable)

    # Initialize the VMEM-resident residual stream from the input at unit 0.
    @pl.when(u == 0)
    def _():
        acc_ref[...] = x_ref[...].reshape(M, D).astype(jnp.float32)

    x = acc_ref[...]                           # (M, D) f32 residual stream

    def layernorm(v, w, b):                    # v: (M, F) f32; w/b: (1, F)
        mu = jnp.mean(v, axis=-1, keepdims=True)
        var = jnp.mean(jnp.square(v - mu), axis=-1, keepdims=True)
        return (v - mu) * jax.lax.rsqrt(var + eps) * w.astype(jnp.float32) \
            + b.astype(jnp.float32)

    def split_heads(t):                        # (M, D) -> (bb*H, N, hd)
        # TODO(synk): audit the relayout cost of these axis swaps with
        # pl.lower_as_mlir; pltpu.einshape is a cheaper alternative if the
        # XLU/vxpose traffic shows up at production D / head sizes.
        t = t.reshape(bb, N, H, hd)
        t = jnp.transpose(t, (0, 2, 1, 3))
        return t.reshape(bb * H, N, hd)

    # --- attention branch ----------------------------------------------------
    h = layernorm(x, ln1w_ref[0], ln1b_ref[0])                           # (M, D)
    qkv = jnp.dot(h.astype(mm_dtype), qkvw_ref[0],
                  preferred_element_type=jnp.float32)                    # (M, 3D)
    q = qkv[:, 0 * D:1 * D]        # softmax scale pre-folded into qkv_w q-cols
    k = qkv[:, 1 * D:2 * D]
    v = qkv[:, 2 * D:3 * D]

    qh = split_heads(q.astype(mm_dtype))                                 # (bb*H, N, hd)
    kh = split_heads(k.astype(mm_dtype))
    vh = split_heads(v.astype(mm_dtype))

    # Q.K^T contracting the head dim — no explicit transpose of K.
    s = jnp.einsum('bqd,bkd->bqk', qh, kh,
                   preferred_element_type=jnp.float32)                   # (bb*H, N, N)
    s = s - jnp.max(s, axis=-1, keepdims=True)
    p = jnp.exp(s)
    p = p * pl.reciprocal(jnp.sum(p, axis=-1, keepdims=True), approx=True)

    o = jnp.einsum('bqk,bkd->bqd', p.astype(mm_dtype), vh,
                   preferred_element_type=jnp.float32)                   # (bb*H, N, hd)
    o = jnp.transpose(o.reshape(bb, H, N, hd), (0, 2, 1, 3)).reshape(M, D)

    attn = jnp.dot(o.astype(mm_dtype), projw_ref[0],
                   preferred_element_type=jnp.float32) \
        + projb_ref[0].astype(jnp.float32)
    x = x + attn                               # residual (drop_path = identity)

    # --- MLP branch -----------------------------------------------------------
    h = layernorm(x, ln2w_ref[0], ln2b_ref[0])
    h = jnp.dot(h.astype(mm_dtype), fc1w_ref[0],
                preferred_element_type=jnp.float32) \
        + fc1b_ref[0].astype(jnp.float32)
    if approx_gelu:
        h = jax.nn.gelu(h, approximate=True)   # tanh path -> EUP slot
    else:
        # Exact-erf GELU = PyTorch nn.GELU() default (bit-parity path).
        h = jax.nn.gelu(h, approximate=False)
    h = jnp.dot(h.astype(mm_dtype), fc2w_ref[0],
                preferred_element_type=jnp.float32) \
        + fc2b_ref[0].astype(jnp.float32)
    x = x + h                                  # residual

    acc_ref[...] = x                           # keep stream resident in VMEM

    @pl.when(u == pl.num_programs(1) - 1)
    def _():
        o_ref[...] = x.reshape(bb, N, D).astype(o_ref.dtype)


# ----------------------------------------------------------------------------
# Helpers: core detection, VMEM budgeting, parameter preparation.
# ----------------------------------------------------------------------------
def _detect_num_tensorcores():
    """2 TensorCores per chip on v7x; 1 on v5e/v6e.  Fallback: 1."""
    try:
        kind = jax.devices()[0].device_kind.lower()
    except Exception:
        return 1
    return 2 if "v7" in kind else 1


def _vmem_limit_bytes(block_b, N, D, hidden, num_heads, x_itemsize, w_itemsize):
    """Per-step VMEM estimate (double-buffered per-unit weights, IO blocks,
    residual scratch, transient activations) with ~30% headroom."""
    M = block_b * N
    f32 = 4
    w_unit = (4 * D                       # ln1 / ln2 weight+bias
              + D * 3 * D                 # qkv
              + D * D + D                 # proj w + b
              + D * hidden + hidden       # fc1 w + b
              + hidden * D + D)           # fc2 w + b
    weights = 2 * w_unit * w_itemsize                       # double-buffered
    xio = 2 * 2 * block_b * N * D * x_itemsize              # in + out, 2 bufs
    acc = M * D * f32                                       # residual scratch
    trans = (M * 3 * D                                      # qkv
             + 3 * M * D                                    # q/k/v heads
             + 2 * block_b * num_heads * N * N              # scores + probs
             + M * hidden + 2 * M * D) * f32                # mlp hidden + temps
    est = int(1.3 * (weights + xio + acc + trans))
    # Clamp to a range valid on every current generation (v7x: 64 MiB per TC).
    return max(min(est, 64 << 20), 16 << 20)


def prepare_params(params, *, num_heads, weight_dtype=None):
    """One-time parameter prep for the kernel:
      * fold the attention softmax scale (head_dim^-0.5) into the q-columns of
        qkv_w (removes an (M, D) VPU multiply per unit at runtime);
      * optionally cast the big matmul weights to `weight_dtype` (e.g. bf16 for
        the native bf16 MXU path).  Biases / LayerNorm params stay f32.
    """
    D = params["qkv_w"].shape[1]
    hd = D // num_heads
    scale = hd ** -0.5
    col_scale = jnp.concatenate([jnp.full((D,), scale, jnp.float32),
                                 jnp.ones((2 * D,), jnp.float32)])
    out = dict(params)
    qkv_dtype = params["qkv_w"].dtype if weight_dtype is None else weight_dtype
    out["qkv_w"] = (params["qkv_w"].astype(jnp.float32) * col_scale).astype(qkv_dtype)
    if weight_dtype is not None:
        for name in ("proj_w", "fc1_w", "fc2_w"):
            out[name] = params[name].astype(weight_dtype)
    return out


# ----------------------------------------------------------------------------
# Wrapper: one pallas_call for a stack of `depth` ReUnits (depth >= 1).
# ----------------------------------------------------------------------------
def reunit_forward(x, params, *, num_heads, block_b=None, approx_gelu=True,
                   eps=1e-5):
    """Apply `depth` fused ReUnits to x of shape (B, N, D).

    `params` must be pre-processed with `prepare_params` (scale folded into
    qkv_w).  Per-unit weights carry a leading `depth` axis; depth=1 is exactly
    the PyTorch ReUnit module.
    """
    B, N, D = x.shape
    depth = params["qkv_w"].shape[0]
    hidden = params["fc1_w"].shape[-1]
    assert D % num_heads == 0

    if block_b is None:
        cores = _detect_num_tensorcores()
        # Single-TC chips (v5e/v6e): keep the whole batch in one step (bigger
        # matmul M, no pointless pipeline overhead).  Dual-TC (v7x): >=2 batch
        # blocks so the "parallel" axis shards across both cores.
        block_b = B if (cores <= 1 or B == 1) else max(1, B // cores)
    block_b = max(1, min(block_b, B))
    while B % block_b:
        block_b -= 1
    n_b_blocks = B // block_b
    grid = (n_b_blocks, depth)      # depth last => innermost / sequential

    weight_names = ("ln1_w", "ln1_b", "qkv_w", "proj_w", "proj_b",
                    "ln2_w", "ln2_b", "fc1_w", "fc1_b", "fc2_w", "fc2_b")
    weights = tuple(params[n] for n in weight_names)

    def unit_spec(w):
        nd = w.ndim
        # One unit's slice per grid step; Pallas double-buffers it, so unit
        # u+1's weight DMA overlaps unit u's compute.
        return pl.BlockSpec((1,) + tuple(w.shape[1:]),
                            lambda b, u, _nd=nd: (u,) + (0,) * (_nd - 1))

    kernel = functools.partial(_reunit_unit_kernel, num_heads=num_heads,
                               eps=eps, approx_gelu=approx_gelu)

    x_itemsize = jnp.dtype(x.dtype).itemsize
    w_itemsize = jnp.dtype(params["qkv_w"].dtype).itemsize
    vmem_bytes = _vmem_limit_bytes(block_b, N, D, hidden, num_heads,
                                   x_itemsize, w_itemsize)

    # Advisory cost estimate for XLA's scheduler around this heavy fused call.
    flops = (2 * depth * B * N * (3 * D * D + D * D + 2 * D * hidden)
             + 4 * depth * B * N * N * D)
    transcendentals = depth * B * (num_heads * N * N + N * hidden)
    weight_bytes = sum(int(w.size) * jnp.dtype(w.dtype).itemsize for w in weights)
    bytes_accessed = 2 * B * N * D * x_itemsize + weight_bytes * n_b_blocks

    return pl.pallas_call(
        kernel,
        out_shape=jax.ShapeDtypeStruct((B, N, D), x.dtype),
        grid=grid,
        in_specs=[pl.BlockSpec((block_b, N, D), lambda b, u: (b, 0, 0))]
                 + [unit_spec(w) for w in weights],
        out_specs=pl.BlockSpec((block_b, N, D), lambda b, u: (b, 0, 0)),
        scratch_shapes=[pltpu.VMEM((block_b * N, D), jnp.float32)],
        compiler_params=pltpu.CompilerParams(
            dimension_semantics=("parallel", "arbitrary"),
            vmem_limit_bytes=vmem_bytes),
        cost_estimate=pl.CostEstimate(flops=flops,
                                      transcendentals=transcendentals,
                                      bytes_accessed=bytes_accessed),
    )(x, *weights)


# ----------------------------------------------------------------------------
# Pure-JAX reference (mirrors the PyTorch ReUnit forward).
# ----------------------------------------------------------------------------
def reunit_reference(x, p, u, *, num_heads, eps=1e-5, approx_gelu=True):
    B, N, D = x.shape
    H = num_heads
    hd = D // H
    scale = hd ** -0.5

    def ln(v, w, b):
        mu = v.mean(-1, keepdims=True)
        var = ((v - mu) ** 2).mean(-1, keepdims=True)
        return (v - mu) / jnp.sqrt(var + eps) * w + b

    h = ln(x, p["ln1_w"][u], p["ln1_b"][u])
    qkv = h @ p["qkv_w"][u]
    q, k, v = qkv[..., :D], qkv[..., D:2 * D], qkv[..., 2 * D:]

    def heads(t):
        return t.reshape(B, N, H, hd).transpose(0, 2, 1, 3)

    q, k, v = heads(q) * scale, heads(k), heads(v)
    att = jax.nn.softmax(jnp.einsum('bhqd,bhkd->bhqk', q, k), axis=-1)
    o = jnp.einsum('bhqk,bhkd->bhqd', att, v).transpose(0, 2, 1, 3).reshape(B, N, D)
    x = x + o @ p["proj_w"][u] + p["proj_b"][u]

    h = ln(x, p["ln2_w"][u], p["ln2_b"][u])
    h = jax.nn.gelu(h @ p["fc1_w"][u] + p["fc1_b"][u], approximate=approx_gelu)
    return x + h @ p["fc2_w"][u] + p["fc2_b"][u]


# ----------------------------------------------------------------------------
# Deterministic parameter construction (shapes from ReUnit.__init__, stacked
# along a leading `depth` axis so a whole block stack can be fused in one call).
# ----------------------------------------------------------------------------
def init_reunit_stack_params(key, dim, depth=1, mlp_ratio=4.0, dtype=jnp.float32):
    hidden = int(dim * mlp_ratio)
    k = jax.random.split(key, 4)

    def tn(kk, shape, std=0.02):
        return (jax.random.truncated_normal(kk, -2.0, 2.0, shape, jnp.float32)
                * std).astype(dtype)

    return {
        "ln1_w": jnp.ones((depth, 1, dim), dtype),
        "ln1_b": jnp.zeros((depth, 1, dim), dtype),
        "qkv_w": tn(k[0], (depth, dim, 3 * dim)),          # qkv_bias=False
        "proj_w": tn(k[1], (depth, dim, dim)),
        "proj_b": jnp.zeros((depth, 1, dim), dtype),
        "ln2_w": jnp.ones((depth, 1, dim), dtype),
        "ln2_b": jnp.zeros((depth, 1, dim), dtype),
        "fc1_w": tn(k[2], (depth, dim, hidden)),
        "fc1_b": jnp.zeros((depth, 1, hidden), dtype),
        "fc2_w": tn(k[3], (depth, hidden, dim)),
        "fc2_b": jnp.zeros((depth, 1, dim), dtype),
    }


# ----------------------------------------------------------------------------
if __name__ == "__main__":
    B, N, D = 4, 8, 32              # batch, tokens, embed dim
    NUM_HEADS = 4

    key = jax.random.PRNGKey(0)
    kx, kp1, kp2 = jax.random.split(key, 3)
    x = jax.random.normal(kx, (B, N, D), jnp.float32)

    # --- single ReUnit (depth=1): exactly the PyTorch module (f32 weights) ---
    p1 = init_reunit_stack_params(kp1, D, depth=1)
    p1_prep = prepare_params(p1, num_heads=NUM_HEADS)        # fold softmax scale
    y = reunit_forward(x, p1_prep, num_heads=NUM_HEADS, approx_gelu=True)
    jax.block_until_ready(y)
    y_ref = reunit_reference(x, p1, 0, num_heads=NUM_HEADS, approx_gelu=True)
    err = float(jnp.max(jnp.abs(y - y_ref)))
    assert err < 1e-2, err

    # --- bf16 matmul-operand (production MXU) path, loose check vs f32 ref ---
    p1_bf16 = prepare_params(p1, num_heads=NUM_HEADS, weight_dtype=jnp.bfloat16)
    y_bf16 = reunit_forward(x, p1_bf16, num_heads=NUM_HEADS)
    jax.block_until_ready(y_bf16)
    err_bf16 = float(jnp.max(jnp.abs(y_bf16.astype(jnp.float32) - y_ref)))
    assert err_bf16 < 5e-2, err_bf16

    # --- depth=2 stack fused into ONE pallas_call, weights streamed per unit --
    p2 = init_reunit_stack_params(kp2, D, depth=2)
    p2_prep = prepare_params(p2, num_heads=NUM_HEADS)
    y2 = reunit_forward(x, p2_prep, num_heads=NUM_HEADS)
    jax.block_until_ready(y2)
    y2_ref = x
    for uidx in range(2):
        y2_ref = reunit_reference(y2_ref, p2, uidx, num_heads=NUM_HEADS,
                                  approx_gelu=True)
    err2 = float(jnp.max(jnp.abs(y2 - y2_ref)))
    assert err2 < 1e-2, err2

    print("KERNEL_OK")
</pallas_src>

<mosaic_0001>
module attributes {stable_mosaic.version = 11 : i64} {
  func.func @_reunit_unit_kernel(%arg0: i32, %arg1: i32, %arg2: memref<4x8x32xf32, #tpu.memory_space<vmem>>, %arg3: memref<1x1x32xf32, #tpu.memory_space<vmem>>, %arg4: memref<1x1x32xf32, #tpu.memory_space<vmem>>, %arg5: memref<1x32x96xf32, #tpu.memory_space<vmem>>, %arg6: memref<1x32x32xf32, #tpu.memory_space<vmem>>, %arg7: memref<1x1x32xf32, #tpu.memory_space<vmem>>, %arg8: memref<1x1x32xf32, #tpu.memory_space<vmem>>, %arg9: memref<1x1x32xf32, #tpu.memory_space<vmem>>, %arg10: memref<1x32x128xf32, #tpu.memory_space<vmem>>, %arg11: memref<1x1x128xf32, #tpu.memory_space<vmem>>, %arg12: memref<1x128x32xf32, #tpu.memory_space<vmem>>, %arg13: memref<1x1x32xf32, #tpu.memory_space<vmem>>, %arg14: memref<4x8x32xf32, #tpu.memory_space<vmem>>, %arg15: memref<32x32xf32, #tpu.memory_space<vmem>>) attributes {dimension_semantics = [#tpu.dimension_semantics<parallel>, #tpu.dimension_semantics<arbitrary>], iteration_bounds = array<i64: 1, 1>, scalar_prefetch = 0 : i64, scratch_operands = 1 : i64, tpu.core_type = #tpu.core_type<tc>, window_params = [{transform_indices = @transform_0, window_bounds = array<i64: 4, 8, 32>}, {transform_indices = @transform_1, window_bounds = array<i64: 1, 1, 32>}, {transform_indices = @transform_2, window_bounds = array<i64: 1, 1, 32>}, {transform_indices = @transform_3, window_bounds = array<i64: 1, 32, 96>}, {transform_indices = @transform_4, window_bounds = array<i64: 1, 32, 32>}, {transform_indices = @transform_5, window_bounds = array<i64: 1, 1, 32>}, {transform_indices = @transform_6, window_bounds = array<i64: 1, 1, 32>}, {transform_indices = @transform_7, window_bounds = array<i64: 1, 1, 32>}, {transform_indices = @transform_8, window_bounds = array<i64: 1, 32, 128>}, {transform_indices = @transform_9, window_bounds = array<i64: 1, 1, 128>}, {transform_indices = @transform_10, window_bounds = array<i64: 1, 128, 32>}, {transform_indices = @transform_11, window_bounds = array<i64: 1, 1, 32>}, {transform_indices = @transform_12, window_bounds = array<i64: 4, 8, 32>}]} {
    %c0_i32 = arith.constant 0 : i32
    %0 = arith.cmpi eq, %arg1, %c0_i32 : i32
    %1 = arith.extui %0 : i1 to i32
    %c0_i32_0 = arith.constant 0 : i32
    %2 = arith.cmpi ne, %1, %c0_i32_0 : i32
    scf.if %2 {
      %c0_60 = arith.constant 0 : index
      %c0_61 = arith.constant 0 : index
      %c0_62 = arith.constant 0 : index
      %126 = vector.load %arg2[%c0_60, %c0_61, %c0_62] : memref<4x8x32xf32, #tpu.memory_space<vmem>>, vector<4x8x32xf32>
      %127 = vector.shape_cast %126 : vector<4x8x32xf32> to vector<32x32xf32>
      %c0_63 = arith.constant 0 : index
      %c0_64 = arith.constant 0 : index
      %128 = vector.load %arg15[%c0_63, %c0_64] : memref<32x32xf32, #tpu.memory_space<vmem>>, vector<32x32xf32>
      tpu.vector_store %arg15[%c0_63, %c0_64], %127 {strides = array<i32>} : memref<32x32xf32, #tpu.memory_space<vmem>>, vector<32x32xf32>,
    } else {
    }
    %c0 = arith.constant 0 : index
    %c0_1 = arith.constant 0 : index
    %3 = vector.load %arg15[%c0, %c0_1] : memref<32x32xf32, #tpu.memory_space<vmem>>, vector<32x32xf32>
    %c0_2 = arith.constant 0 : index
    %c0_3 = arith.constant 0 : index
    %c0_4 = arith.constant 0 : index
    %4 = vector.load %arg3[%c0_2, %c0_3, %c0_4] : memref<1x1x32xf32, #tpu.memory_space<vmem>>, vector<1x1x32xf32>
    %5 = vector.shape_cast %4 : vector<1x1x32xf32> to vector<1x32xf32>
    %c0_5 = arith.constant 0 : index
    %c0_6 = arith.constant 0 : index
    %c0_7 = arith.constant 0 : index
    %6 = vector.load %arg4[%c0_5, %c0_6, %c0_7] : memref<1x1x32xf32, #tpu.memory_space<vmem>>, vector<1x1x32xf32>
    %7 = vector.shape_cast %6 : vector<1x1x32xf32> to vector<1x32xf32>
    %cst = arith.constant dense<0.000000e+00> : vector<32xf32>
    %8 = vector.multi_reduction <add>, %3, %cst [1] : vector<32x32xf32> to vector<32xf32>
    %9 = vector.shape_cast %8 : vector<32xf32> to vector<32x1xf32>
    %cst_8 = arith.constant 3.200000e+01 : f32
    %10 = vector.broadcast %cst_8 : f32 to vector<32x1xf32>
    %11 = arith.divf %9, %10 : vector<32x1xf32>
    %12 = vector.broadcast %11 : vector<32x1xf32> to vector<32x32xf32>
    %13 = arith.subf %3, %12 : vector<32x32xf32>
    %14 = arith.mulf %13, %13 : vector<32x32xf32>
    %cst_9 = arith.constant dense<0.000000e+00> : vector<32xf32>
    %15 = vector.multi_reduction <add>, %14, %cst_9 [1] : vector<32x32xf32> to vector<32xf32>
    %16 = vector.shape_cast %15 : vector<32xf32> to vector<32x1xf32>
    %cst_10 = arith.constant 3.200000e+01 : f32
    %17 = vector.broadcast %cst_10 : f32 to vector<32x1xf32>
    %18 = arith.divf %16, %17 : vector<32x1xf32>
    %19 = vector.broadcast %11 : vector<32x1xf32> to vector<32x32xf32>
    %20 = arith.subf %3, %19 : vector<32x32xf32>
    %cst_11 = arith.constant 9.99999974E-6 : f32
    %21 = vector.broadcast %cst_11 : f32 to vector<32x1xf32>
    %22 = arith.addf %18, %21 : vector<32x1xf32>
    %23 = math.rsqrt %22 : vector<32x1xf32>
    %24 = vector.broadcast %23 : vector<32x1xf32> to vector<32x32xf32>
    %25 = arith.mulf %20, %24 : vector<32x32xf32>
    %26 = vector.broadcast %5 : vector<1x32xf32> to vector<32x32xf32>
    %27 = arith.mulf %25, %26 : vector<32x32xf32>
    %28 = vector.broadcast %7 : vector<1x32xf32> to vector<32x32xf32>
    %29 = arith.addf %27, %28 : vector<32x32xf32>
    %c0_12 = arith.constant 0 : index
    %c0_13 = arith.constant 0 : index
    %c0_14 = arith.constant 0 : index
    %30 = vector.load %arg5[%c0_12, %c0_13, %c0_14] : memref<1x32x96xf32, #tpu.memory_space<vmem>>, vector<1x32x96xf32>
    %31 = vector.shape_cast %30 : vector<1x32x96xf32> to vector<32x96xf32>
    %cst_15 = arith.constant dense<0.000000e+00> : vector<32x96xf32>
    %32 = tpu.matmul %29, %31, %cst_15 {dimension_numbers = #tpu.dot_dimension_numbers<[1], [0], [0], [1], [0, 0, 1, 1], [], []>} : vector<32x32xf32>, vector<32x96xf32>, vector<32x96xf32> -> vector<32x96xf32>
    %33 = vector.extract_strided_slice %32 {offsets = [0, 0], sizes = [32, 32], strides = [1, 1]} : vector<32x96xf32> to vector<32x32xf32>
    %34 = vector.extract_strided_slice %32 {offsets = [0, 32], sizes = [32, 32], strides = [1, 1]} : vector<32x96xf32> to vector<32x32xf32>
    %35 = vector.extract_strided_slice %32 {offsets = [0, 64], sizes = [32, 32], strides = [1, 1]} : vector<32x96xf32> to vector<32x32xf32>
    %36 = vector.shape_cast %33 : vector<32x32xf32> to vector<4x8x4x8xf32>
    %37 = tpu.transpose %36, [0, 2, 1, 3] : vector<4x8x4x8xf32> -> vector<4x4x8x8xf32>
    %38 = vector.shape_cast %37 : vector<4x4x8x8xf32> to vector<16x8x8xf32>
    %39 = vector.shape_cast %34 : vector<32x32xf32> to vector<4x8x4x8xf32>
    %40 = tpu.transpose %39, [0, 2, 1, 3] : vector<4x8x4x8xf32> -> vector<4x4x8x8xf32>
    %41 = vector.shape_cast %40 : vector<4x4x8x8xf32> to vector<16x8x8xf32>
    %42 = vector.shape_cast %35 : vector<32x32xf32> to vector<4x8x4x8xf32>
    %43 = tpu.transpose %42, [0, 2, 1, 3] : vector<4x8x4x8xf32> -> vector<4x4x8x8xf32>
    %44 = vector.shape_cast %43 : vector<4x4x8x8xf32> to vector<16x8x8xf32>
    "tpu.trace_start"() <{level = 10 : i32, message = "bqd,bkd->bqk"}> : () -> ()
    %cst_16 = arith.constant dense<0.000000e+00> : vector<16x8x8xf32>
    %45 = tpu.matmul %38, %41, %cst_16 {dimension_numbers = #tpu.dot_dimension_numbers<[2], [2], [1], [1], [0, 0, 0, 1, 1, 1], [0], [0]>} : vector<16x8x8xf32>, vector<16x8x8xf32>, vector<16x8x8xf32> -> vector<16x8x8xf32>
    "tpu.trace_stop"() : () -> ()
    %cst_17 = arith.constant dense<0xFF800000> : vector<16x8xf32>
    %46 = vector.multi_reduction <maximumf>, %45, %cst_17 [2] : vector<16x8x8xf32> to vector<16x8xf32>
    %47 = vector.shape_cast %46 : vector<16x8xf32> to vector<16x8x1xf32>
    %48 = vector.broadcast %47 : vector<16x8x1xf32> to vector<16x8x8xf32>
    %49 = arith.subf %45, %48 : vector<16x8x8xf32>
    %50 = math.exp %49 : vector<16x8x8xf32>
    %cst_18 = arith.constant dense<0.000000e+00> : vector<16x8xf32>
    %51 = vector.multi_reduction <add>, %50, %cst_18 [2] : vector<16x8x8xf32> to vector<16x8xf32>
    %52 = vector.shape_cast %51 : vector<16x8xf32> to vector<16x8x1xf32>
    %53 = tpu.reciprocal %52 {approx = true} : vector<16x8x1xf32> -> vector<16x8x1xf32>
    %54 = vector.broadcast %53 : vector<16x8x1xf32> to vector<16x8x8xf32>
    %55 = arith.mulf %50, %54 : vector<16x8x8xf32>
    "tpu.trace_start"() <{level = 10 : i32, message = "bqk,bkd->bqd"}> : () -> ()
    %cst_19 = arith.constant dense<0.000000e+00> : vector<16x8x8xf32>
    %56 = tpu.matmul %55, %44, %cst_19 {dimension_numbers = #tpu.dot_dimension_numbers<[2], [1], [1], [2], [0, 0, 0, 1, 1, 2], [0], [0]>} : vector<16x8x8xf32>, vector<16x8x8xf32>, vector<16x8x8xf32> -> vector<16x8x8xf32>
    "tpu.trace_stop"() : () -> ()
    %57 = vector.shape_cast %56 : vector<16x8x8xf32> to vector<4x4x8x8xf32>
    %58 = tpu.transpose %57, [0, 2, 1, 3] : vector<4x4x8x8xf32> -> vector<4x8x4x8xf32>
    %59 = vector.shape_cast %58 : vector<4x8x4x8xf32> to vector<32x32xf32>
    %c0_20 = arith.constant 0 : index
    %c0_21 = arith.constant 0 : index
    %c0_22 = arith.constant 0 : index
    %60 = vector.load %arg6[%c0_20, %c0_21, %c0_22] : memref<1x32x32xf32, #tpu.memory_space<vmem>>, vector<1x32x32xf32>
    %61 = vector.shape_cast %60 : vector<1x32x32xf32> to vector<32x32xf32>
    %cst_23 = arith.constant dense<0.000000e+00> : vector<32x32xf32>
    %62 = tpu.matmul %59, %61, %cst_23 {dimension_numbers = #tpu.dot_dimension_numbers<[1], [0], [0], [1], [0, 0, 1, 1], [], []>} : vector<32x32xf32>, vector<32x32xf32>, vector<32x32xf32> -> vector<32x32xf32>
    %c0_24 = arith.constant 0 : index
    %c0_25 = arith.constant 0 : index
    %c0_26 = arith.constant 0 : index
    %63 = vector.load %arg7[%c0_24, %c0_25, %c0_26] : memref<1x1x32xf32, #tpu.memory_space<vmem>>, vector<1x1x32xf32>
    %64 = vector.shape_cast %63 : vector<1x1x32xf32> to vector<1x32xf32>
    %65 = vector.broadcast %64 : vector<1x32xf32> to vector<32x32xf32>
    %66 = arith.addf %62, %65 : vector<32x32xf32>
    %67 = arith.addf %3, %66 : vector<32x32xf32>
    %c0_27 = arith.constant 0 : index
    %c0_28 = arith.constant 0 : index
    %c0_29 = arith.constant 0 : index
    %68 = vector.load %arg8[%c0_27, %c0_28, %c0_29] : memref<1x1x32xf32, #tpu.memory_space<vmem>>, vector<1x1x32xf32>
    %69 = vector.shape_cast %68 : vector<1x1x32xf32> to vector<1x32xf32>
    %c0_30 = arith.constant 0 : index
    %c0_31 = arith.constant 0 : index
    %c0_32 = arith.constant 0 : index
    %70 = vector.load %arg9[%c0_30, %c0_31, %c0_32] : memref<1x1x32xf32, #tpu.memory_space<vmem>>, vector<1x1x32xf32>
    %71 = vector.shape_cast %70 : vector<1x1x32xf32> to vector<1x32xf32>
    %cst_33 = arith.constant dense<0.000000e+00> : vector<32xf32>
    %72 = vector.multi_reduction <add>, %67, %cst_33 [1] : vector<32x32xf32> to vector<32xf32>
    %73 = vector.shape_cast %72 : vector<32xf32> to vector<32x1xf32>
    %cst_34 = arith.constant 3.200000e+01 : f32
    %74 = vector.broadcast %cst_34 : f32 to vector<32x1xf32>
    %75 = arith.divf %73, %74 : vector<32x1xf32>
    %76 = vector.broadcast %75 : vector<32x1xf32> to vector<32x32xf32>
    %77 = arith.subf %67, %76 : vector<32x32xf32>
    %78 = arith.mulf %77, %77 : vector<32x32xf32>
    %cst_35 = arith.constant dense<0.000000e+00> : vector<32xf32>
    %79 = vector.multi_reduction <add>, %78, %cst_35 [1] : vector<32x32xf32> to vector<32xf32>
    %80 = vector.shape_cast %79 : vector<32xf32> to vector<32x1xf32>
    %cst_36 = arith.constant 3.200000e+01 : f32
    %81 = vector.broadcast %cst_36 : f32 to vector<32x1xf32>
    %82 = arith.divf %80, %81 : vector<32x1xf32>
    %83 = vector.broadcast %75 : vector<32x1xf32> to vector<32x32xf32>
    %84 = arith.subf %67, %83 : vector<32x32xf32>
    %cst_37 = arith.constant 9.99999974E-6 : f32
    %85 = vector.broadcast %cst_37 : f32 to vector<32x1xf32>
    %86 = arith.addf %82, %85 : vector<32x1xf32>
    %87 = math.rsqrt %86 : vector<32x1xf32>
    %88 = vector.broadcast %87 : vector<32x1xf32> to vector<32x32xf32>
    %89 = arith.mulf %84, %88 : vector<32x32xf32>
    %90 = vector.broadcast %69 : vector<1x32xf32> to vector<32x32xf32>
    %91 = arith.mulf %89, %90 : vector<32x32xf32>
    %92 = vector.broadcast %71 : vector<1x32xf32> to vector<32x32xf32>
    %93 = arith.addf %91, %92 : vector<32x32xf32>
    %c0_38 = arith.constant 0 : index
    %c0_39 = arith.constant 0 : index
    %c0_40 = arith.constant 0 : index
    %94 = vector.load %arg10[%c0_38, %c0_39, %c0_40] : memref<1x32x128xf32, #tpu.memory_space<vmem>>, vector<1x32x128xf32>
    %95 = vector.shape_cast %94 : vector<1x32x128xf32> to vector<32x128xf32>
    %cst_41 = arith.constant dense<0.000000e+00> : vector<32x128xf32>
    %96 = tpu.matmul %93, %95, %cst_41 {dimension_numbers = #tpu.dot_dimension_numbers<[1], [0], [0], [1], [0, 0, 1, 1], [], []>} : vector<32x32xf32>, vector<32x128xf32>, vector<32x128xf32> -> vector<32x128xf32>
    %c0_42 = arith.constant 0 : index
    %c0_43 = arith.constant 0 : index
    %c0_44 = arith.constant 0 : index
    %97 = vector.load %arg11[%c0_42, %c0_43, %c0_44] : memref<1x1x128xf32, #tpu.memory_space<vmem>>, vector<1x1x128xf32>
    %98 = vector.shape_cast %97 : vector<1x1x128xf32> to vector<1x128xf32>
    %99 = vector.broadcast %98 : vector<1x128xf32> to vector<32x128xf32>
    %100 = arith.addf %96, %99 : vector<32x128xf32>
    %101 = arith.mulf %100, %100 : vector<32x128xf32>
    %102 = arith.mulf %100, %101 : vector<32x128xf32>
    %cst_45 = arith.constant 4.471500e-02 : f32
    %103 = vector.broadcast %cst_45 : f32 to vector<32x128xf32>
    %104 = arith.mulf %103, %102 : vector<32x128xf32>
    %105 = arith.addf %100, %104 : vector<32x128xf32>
    %cst_46 = arith.constant 0.797884583 : f32
    %106 = vector.broadcast %cst_46 : f32 to vector<32x128xf32>
    %107 = arith.mulf %106, %105 : vector<32x128xf32>
    %108 = math.tanh %107 : vector<32x128xf32>
    %cst_47 = arith.constant 1.000000e+00 : f32
    %109 = vector.broadcast %cst_47 : f32 to vector<32x128xf32>
    %110 = arith.addf %109, %108 : vector<32x128xf32>
    %cst_48 = arith.constant 5.000000e-01 : f32
    %111 = vector.broadcast %cst_48 : f32 to vector<32x128xf32>
    %112 = arith.mulf %111, %110 : vector<32x128xf32>
    %113 = arith.mulf %100, %112 : vector<32x128xf32>
    %c0_49 = arith.constant 0 : index
    %c0_50 = arith.constant 0 : index
    %c0_51 = arith.constant 0 : index
    %114 = vector.load %arg12[%c0_49, %c0_50, %c0_51] : memref<1x128x32xf32, #tpu.memory_space<vmem>>, vector<1x128x32xf32>
    %115 = vector.shape_cast %114 : vector<1x128x32xf32> to vector<128x32xf32>
    %cst_52 = arith.constant dense<0.000000e+00> : vector<32x32xf32>
    %116 = tpu.matmul %113, %115, %cst_52 {dimension_numbers = #tpu.dot_dimension_numbers<[1], [0], [0], [1], [0, 0, 1, 1], [], []>} : vector<32x128xf32>, vector<128x32xf32>, vector<32x32xf32> -> vector<32x32xf32>
    %c0_53 = arith.constant 0 : index
    %c0_54 = arith.constant 0 : index
    %c0_55 = arith.constant 0 : index
    %117 = vector.load %arg13[%c0_53, %c0_54, %c0_55] : memref<1x1x32xf32, #tpu.memory_space<vmem>>, vector<1x1x32xf32>
    %118 = vector.shape_cast %117 : vector<1x1x32xf32> to vector<1x32xf32>
    %119 = vector.broadcast %118 : vector<1x32xf32> to vector<32x32xf32>
    %120 = arith.addf %116, %119 : vector<32x32xf32>
    %121 = arith.addf %67, %120 : vector<32x32xf32>
    %c0_56 = arith.constant 0 : index
    %c0_57 = arith.constant 0 : index
    %122 = vector.load %arg15[%c0_56, %c0_57] : memref<32x32xf32, #tpu.memory_space<vmem>>, vector<32x32xf32>
    tpu.vector_store %arg15[%c0_56, %c0_57], %121 {strides = array<i32>} : memref<32x32xf32, #tpu.memory_space<vmem>>, vector<32x32xf32>,
    %c0_i32_58 = arith.constant 0 : i32
    %123 = arith.cmpi eq, %arg1, %c0_i32_58 : i32
    %124 = arith.extui %123 : i1 to i32
    %c0_i32_59 = arith.constant 0 : i32
    %125 = arith.cmpi ne, %124, %c0_i32_59 : i32
    scf.if %125 {
      %126 = vector.shape_cast %121 : vector<32x32xf32> to vector<4x8x32xf32>
      %c0_60 = arith.constant 0 : index
      %c0_61 = arith.constant 0 : index
      %c0_62 = arith.constant 0 : index
      %127 = vector.load %arg14[%c0_60, %c0_61, %c0_62] : memref<4x8x32xf32, #tpu.memory_space<vmem>>, vector<4x8x32xf32>
      tpu.vector_store %arg14[%c0_60, %c0_61, %c0_62], %126 {strides = array<i32>} : memref<4x8x32xf32, #tpu.memory_space<vmem>>, vector<4x8x32xf32>,
    } else {
    }
    return
  }
  func.func @transform_0(%arg0: i32, %arg1: i32) -> (i32, i32, i32) {
    %c0_i32 = arith.constant 0 : i32
    %c0_i32_0 = arith.constant 0 : i32
    %c0_i32_1 = arith.constant 0 : i32
    return %arg0, %c0_i32, %c0_i32_0 : i32, i32, i32
  }
  func.func @transform_1(%arg0: i32, %arg1: i32) -> (i32, i32, i32) {
    %c0_i32 = arith.constant 0 : i32
    %c0_i32_0 = arith.constant 0 : i32
    %c0_i32_1 = arith.constant 0 : i32
    return %arg1, %c0_i32, %c0_i32_0 : i32, i32, i32
  }
  func.func @transform_2(%arg0: i32, %arg1: i32) -> (i32, i32, i32) {
    %c0_i32 = arith.constant 0 : i32
    %c0_i32_0 = arith.constant 0 : i32
    %c0_i32_1 = arith.constant 0 : i32
    return %arg1, %c0_i32, %c0_i32_0 : i32, i32, i32
  }
  func.func @transform_3(%arg0: i32, %arg1: i32) -> (i32, i32, i32) {
    %c0_i32 = arith.constant 0 : i32
    %c0_i32_0 = arith.constant 0 : i32
    %c0_i32_1 = arith.constant 0 : i32
    return %arg1, %c0_i32, %c0_i32_0 : i32, i32, i32
  }
  func.func @transform_4(%arg0: i32, %arg1: i32) -> (i32, i32, i32) {
    %c0_i32 = arith.constant 0 : i32
    %c0_i32_0 = arith.constant 0 : i32
    %c0_i32_1 = arith.constant 0 : i32
    return %arg1, %c0_i32, %c0_i32_0 : i32, i32, i32
  }
  func.func @transform_5(%arg0: i32, %arg1: i32) -> (i32, i32, i32) {
    %c0_i32 = arith.constant 0 : i32
    %c0_i32_0 = arith.constant 0 : i32
    %c0_i32_1 = arith.constant 0 : i32
    return %arg1, %c0_i32, %c0_i32_0 : i32, i32, i32
  }
  func.func @transform_6(%arg0: i32, %arg1: i32) -> (i32, i32, i32) {
    %c0_i32 = arith.constant 0 : i32
    %c0_i32_0 = arith.constant 0 : i32
    %c0_i32_1 = arith.constant 0 : i32
    return %arg1, %c0_i32, %c0_i32_0 : i32, i32, i32
  }
  func.func @transform_7(%arg0: i32, %arg1: i32) -> (i32, i32, i32) {
    %c0_i32 = arith.constant 0 : i32
    %c0_i32_0 = arith.constant 0 : i32
    %c0_i32_1 = arith.constant 0 : i32
    return %arg1, %c0_i32, %c0_i32_0 : i32, i32, i32
  }
  func.func @transform_8(%arg0: i32, %arg1: i32) -> (i32, i32, i32) {
    %c0_i32 = arith.constant 0 : i32
    %c0_i32_0 = arith.constant 0 : i32
    %c0_i32_1 = arith.constant 0 : i32
    return %arg1, %c0_i32, %c0_i32_0 : i32, i32, i32
  }
  func.func @transform_9(%arg0: i32, %arg1: i32) -> (i32, i32, i32) {
    %c0_i32 = arith.constant 0 : i32
    %c0_i32_0 = arith.constant 0 : i32
    %c0_i32_1 = arith.constant 0 : i32
    return %arg1, %c0_i32, %c0_i32_0 : i32, i32, i32
  }
  func.func @transform_10(%arg0: i32, %arg1: i32) -> (i32, i32, i32) {
    %c0_i32 = arith.constant 0 : i32
    %c0_i32_0 = arith.constant 0 : i32
    %c0_i32_1 = arith.constant 0 : i32
    return %arg1, %c0_i32, %c0_i32_0 : i32, i32, i32
  }
  func.func @transform_11(%arg0: i32, %arg1: i32) -> (i32, i32, i32) {
    %c0_i32 = arith.constant 0 : i32
    %c0_i32_0 = arith.constant 0 : i32
    %c0_i32_1 = arith.constant 0 : i32
    return %arg1, %c0_i32, %c0_i32_0 : i32, i32, i32
  }
  func.func @transform_12(%arg0: i32, %arg1: i32) -> (i32, i32, i32) {
    %c0_i32 = arith.constant 0 : i32
    %c0_i32_0 = arith.constant 0 : i32
    %c0_i32_1 = arith.constant 0 : i32
    return %arg0, %c0_i32, %c0_i32_0 : i32, i32, i32
  }
}

</mosaic_0001>

<llo_original>
// kernel: tpu_custom_call.1
$region0: #{tpu_custom_call.1}
  #allocation0 [shape = 'u32[]', space=smem, size = 0x4, offset = 0x4, fixed_abs, tag = 'smem constant byte address 0x4 - core index']
  #allocation1 [shape = 'u32[144,128]{1,0:T(1,128)}', space=vmem, size = 0x12000, scoped, tag = 'internal scratch']
  #allocation2 [shape = 'f32[32,32]{1,0:T(8,128)}', space=vmem, size = 0x4000, scoped, tag = 'scratch operand']
  %s0 = inlined_call_operand.vmem [shape: f32[4,8,32], index: 0, kind: input, shape index: {}]
  %s1 = inlined_call_operand.vmem [shape: f32[1,1,32], index: 1, kind: input, shape index: {}]
  %s2 = inlined_call_operand.vmem [shape: f32[1,1,32], index: 2, kind: input, shape index: {}]
  %s3 = inlined_call_operand.vmem [shape: f32[1,32,96], index: 3, kind: input, shape index: {}]
  %s4 = inlined_call_operand.vmem [shape: f32[1,32,32], index: 4, kind: input, shape index: {}]
  %s5 = inlined_call_operand.vmem [shape: f32[1,1,32], index: 5, kind: input, shape index: {}]
  %s6 = inlined_call_operand.vmem [shape: f32[1,1,32], index: 6, kind: input, shape index: {}]
  %s7 = inlined_call_operand.vmem [shape: f32[1,1,32], index: 7, kind: input, shape index: {}]
  %s8 = inlined_call_operand.vmem [shape: f32[1,32,128], index: 8, kind: input, shape index: {}]
  %s9 = inlined_call_operand.vmem [shape: f32[1,1,128], index: 9, kind: input, shape index: {}]
  %s10 = inlined_call_operand.vmem [shape: f32[1,128,32], index: 10, kind: input, shape index: {}]
  %s11 = inlined_call_operand.vmem [shape: f32[1,1,32], index: 11, kind: input, shape index: {}]
  %s12 = inlined_call_operand.hbm [shape: f32[4,8,32], index: 12, kind: output, shape index: {}]
  %s13 = sld [smem:[#allocation0]]
  $region66: #{tpu_custom_call.1} parent=0
    _
  %s15 = ssub.s32 1, %s13
  %s16 = scalar_select 0, %s15, %s13
  $region1: #{tpu_custom_call.1} parent=0
    #allocation3 [shape = 'u8[16384]{0}', space=vmem, size = 0x4000, scoped, tag = 'output window, operand 0, single buffered']
    #allocation4 [shape = 's32[1]{0}', space=sflag, size = 0x4, scoped, tag = 'scoped memory for tpu_custom_call.1']
    %17 = vsyncpa [#allocation4], 0
    // Predicated region
    $region2: #{tpu_custom_call.1} parent=1 // pred_check
      _
    $region3: #{tpu_custom_call.1} parent=1 // pred_check_branch
      %19 = sbr.rel (0) target = $region5
    $region4: #{tpu_custom_call.1} parent=1 // pred_region
      _
    $region5: #{tpu_custom_call.1} parent=1 // pred_fallthru
      _
    // Predicated region
    $region6: #{tpu_custom_call.1} parent=1 // pred_check
      _
    $region7: #{tpu_custom_call.1} parent=1 // pred_check_branch
      %21 = sbr.rel (0) target = $region9
    $region8: #{tpu_custom_call.1} parent=1 // pred_region
      _
    $region9: #{tpu_custom_call.1} parent=1 // pred_fallthru
      _
    // Predicated region
    $region10: #{tpu_custom_call.1} parent=1 // pred_check
      _
    $region11: #{tpu_custom_call.1} parent=1 // pred_check_branch
      %23 = sbr.rel (0) target = $region13
    $region12: #{tpu_custom_call.1} parent=1 // pred_region
      _
    $region13: #{tpu_custom_call.1} parent=1 // pred_fallthru
      _
    // Predicated region
    $region14: #{tpu_custom_call.1} parent=1 // pred_check
      _
    $region15: #{tpu_custom_call.1} parent=1 // pred_check_branch
      %25 = sbr.rel (0) target = $region17
    $region16: #{tpu_custom_call.1} parent=1 // pred_region
      _
    $region17: #{tpu_custom_call.1} parent=1 // pred_fallthru
      _
    // Predicated region
    $region18: #{tpu_custom_call.1} parent=1 // pred_check
      _
    $region19: #{tpu_custom_call.1} parent=1 // pred_check_branch
      %27 = sbr.rel (0) target = $region21
    $region20: #{tpu_custom_call.1} parent=1 // pred_region
      _
    $region21: #{tpu_custom_call.1} parent=1 // pred_fallthru
      _
    // Predicated region
    $region22: #{tpu_custom_call.1} parent=1 // pred_check
      _
    $region23: #{tpu_custom_call.1} parent=1 // pred_check_branch
      %29 = sbr.rel (0) target = $region25
    $region24: #{tpu_custom_call.1} parent=1 // pred_region
      _
    $region25: #{tpu_custom_call.1} parent=1 // pred_fallthru
      _
    // Predicated region
    $region26: #{tpu_custom_call.1} parent=1 // pred_check
      _
    $region27: #{tpu_custom_call.1} parent=1 // pred_check_branch
      %31 = sbr.rel (0) target = $region29
    $region28: #{tpu_custom_call.1} parent=1 // pred_region
      _
    $region29: #{tpu_custom_call.1} parent=1 // pred_fallthru
      _
    // Predicated region
    $region30: #{tpu_custom_call.1} parent=1 // pred_check
      _
    $region31: #{tpu_custom_call.1} parent=1 // pred_check_branch
      %33 = sbr.rel (0) target = $region33
    $region32: #{tpu_custom_call.1} parent=1 // pred_region
      _
    $region33: #{tpu_custom_call.1} parent=1 // pred_fallthru
      _
    // Predicated region
    $region34: #{tpu_custom_call.1} parent=1 // pred_check
      _
    $region35: #{tpu_custom_call.1} parent=1 // pred_check_branch
      %35 = sbr.rel (0) target = $region37
    $region36: #{tpu_custom_call.1} parent=1 // pred_region
      _
    $region37: #{tpu_custom_call.1} parent=1 // pred_fallthru
      _
    // Predicated region
    $region38: #{tpu_custom_call.1} parent=1 // pred_check
      _
    $region39: #{tpu_custom_call.1} parent=1 // pred_check_branch
      %37 = sbr.rel (0) target = $region41
    $region40: #{tpu_custom_call.1} parent=1 // pred_region
      _
    $region41: #{tpu_custom_call.1} parent=1 // pred_fallthru
      _
    // Predicated region
    $region42: #{tpu_custom_call.1} parent=1 // pred_check
      _
    $region43: #{tpu_custom_call.1} parent=1 // pred_check_branch
      %39 = sbr.rel (0) target = $region45
    $region44: #{tpu_custom_call.1} parent=1 // pred_region
      _
    $region45: #{tpu_custom_call.1} parent=1 // pred_fallthru
      _
    // Predicated region
    $region46: #{tpu_custom_call.1} parent=1 // pred_check
      _
    $region47: #{tpu_custom_call.1} parent=1 // pred_check_branch
      %41 = sbr.rel (0) target = $region49
    $region48: #{tpu_custom_call.1} parent=1 // pred_region
      _
    $region49: #{tpu_custom_call.1} parent=1 // pred_fallthru
      _
    %p42 = scmp.eq.s32.totalorder 0, 0
    // Predicated region
    $region50: #{tpu_custom_call.1} parent=1 // pred_check
      %p43 = pneg %p42
    $region51: #{tpu_custom_call.1} parent=1 // pred_check_branch
      %45 = sbr.rel (%p43) target = $region53
    $region52: #{tpu_custom_call.1} parent=1 // pred_region
      %v46 = vld [vmem:[%s0] sm:$0xff]
      %v47 = vld [vmem:[%s0 + $0x8] sm:$0xff]
      %v48 = vld [vmem:[%s0 + $0x10] sm:$0xff]
      %v49 = vld [vmem:[%s0 + $0x18] sm:$0xff]
      %vm50 = vcmask 261120
      %51 = vst.msk [vmem:[#allocation2] sm:$0xff] %vm50, %v46
      %52 = vst.msk [vmem:[#allocation2 + $0x8] sm:$0xff] %vm50, %v47
      %53 = vst.msk [vmem:[#allocation2 + $0x10] sm:$0xff] %vm50, %v48
      %54 = vst.msk [vmem:[#allocation2 + $0x18] sm:$0xff] %vm50, %v49
    $region53: #{tpu_custom_call.1} parent=1 // pred_fallthru
      _
    %v55 = vld [vmem:[#allocation2] sm:$0xff]
    %v56 = vld [vmem:[#allocation2 + $0x8] sm:$0xff]
    %v57 = vld [vmem:[#allocation2 + $0x10] sm:$0xff]
    %v58 = vld [vmem:[#allocation2 + $0x18] sm:$0xff]
    %v59 = vld [vmem:[%s1] sm:$0x1]
    %v60 = vld [vmem:[%s2] sm:$0x1]
    %vm61 = vcmask 261120
    %v62 = vsel %vm61, %v55, 0.0
    %63 = vadd.xlane.f32.xlu0 %v62
    %v64 = vpop.xlane.xlu0 %63
    %v65 = vsel %vm61, %v56, 0.0
    %66 = vadd.xlane.f32.xlu0 %v65
    %v67 = vpop.xlane.xlu0 %66
    %v68 = vsel %vm61, %v57, 0.0
    %69 = vadd.xlane.f32.xlu0 %v68
    %v70 = vpop.xlane.xlu0 %69
    %v71 = vsel %vm61, %v58, 0.0
    %72 = vadd.xlane.f32.xlu0 %v71
    %v73 = vpop.xlane.xlu0 %72
    %v74 = vrcp.pop 32.0
    %v75 = vmul.f32 %v64, %v74
    %v76 = vmul.f32 %v67, %v74
    %v77 = vmul.f32 %v70, %v74
    %v78 = vmul.f32 %v73, %v74
    %v79 = vsub.f32 %v55, %v75
    %v80 = vsub.f32 %v56, %v76
    %v81 = vsub.f32 %v57, %v77
    %v82 = vsub.f32 %v58, %v78
    %v83 = vmul.f32 %v79, %v79
    %v84 = vmul.f32 %v80, %v80
    %v85 = vmul.f32 %v81, %v81
    %v86 = vmul.f32 %v82, %v82
    %v87 = vsel %vm61, %v83, 0.0
    %88 = vadd.xlane.f32.xlu0 %v87
    %v89 = vpop.xlane.xlu0 %88
    %v90 = vsel %vm61, %v84, 0.0
    %91 = vadd.xlane.f32.xlu0 %v90
    %v92 = vpop.xlane.xlu0 %91
    %v93 = vsel %vm61, %v85, 0.0
    %94 = vadd.xlane.f32.xlu0 %v93
    %v95 = vpop.xlane.xlu0 %94
    %v96 = vsel %vm61, %v86, 0.0
    %97 = vadd.xlane.f32.xlu0 %v96
    %v98 = vpop.xlane.xlu0 %97
    %v99 = vmul.f32 %v89, %v74
    %v100 = vmul.f32 %v92, %v74
    %v101 = vmul.f32 %v95, %v74
    %v102 = vmul.f32 %v98, %v74
    %v103 = vadd.f32 %v99, 1e-05
    %v104 = vadd.f32 %v100, 1e-05
    %v105 = vadd.f32 %v101, 1e-05
    %v106 = vadd.f32 %v102, 1e-05
    %v107 = vrsqrt.pop %v103
    %v108 = vrsqrt.pop %v104
    %v109 = vrsqrt.pop %v105
    %v110 = vrsqrt.pop %v106
    %v111 = vmul.f32 %v79, %v107
    %v112 = vmul.f32 %v80, %v108
    %v113 = vmul.f32 %v81, %v109
    %v114 = vmul.f32 %v82, %v110
    %v116 = vlaneseq
    %v117 = vshrl.u32 %v116, 7
    %v118 = vsub.s32 0, %v117
    %v119 = vrot.slane %v59, %v118
    %v121 = vmul.f32 %v111, %v119
    %v122 = vmul.f32 %v112, %v119
    %v123 = vmul.f32 %v113, %v119
    %v124 = vmul.f32 %v114, %v119
    %v126 = vlaneseq
    %v127 = vshrl.u32 %v126, 7
    %v128 = vsub.s32 0, %v127
    %v129 = vrot.slane %v60, %v128
    %v131 = vadd.f32 %v121, %v129
    %v132 = vadd.f32 %v122, %v129
    %v133 = vadd.f32 %v123, %v129
    %v134 = vadd.f32 %v124, %v129
    %v135 = vld [vmem:[%s3] sm:$0xff]
    %v136 = vld [vmem:[%s3 + $0x8] sm:$0xff]
    %v137 = vld [vmem:[%s3 + $0x10] sm:$0xff]
    %v138 = vld [vmem:[%s3 + $0x18] sm:$0xff]
    %v140 = vsel %vm61, %v131, 0
    %v143 = vsel %vm61, %v132, 0
    %v146 = vsel %vm61, %v133, 0
    %v149 = vsel %vm61, %v134, 0
    %151 = vmatprep.subr.mxu0 0.0
    %152 = vmatpush1.msra.mxu0 %v135
    %153 = vmatprep.subr.mxu0 0.0
    %154 = vmatpush1.msra.mxu0 %v136
    %155 = vmatprep.subr.mxu0 0.0
    %156 = vmatpush1.msra.mxu0 %v137
    %157 = vmatprep.subr.mxu0 0.0
    %158 = vmatpush1.msra.mxu0 %v138
    %159 = vmatprep.subr.mxu0 0.0
    %160 = vmatpush1.msra.mxu0 0.0
    %161 = vmatprep.subr.mxu0 0.0
    %162 = vmatpush1.msra.mxu0 0.0
    %163 = vmatprep.subr.mxu0 0.0
    %164 = vmatpush1.msra.mxu0 0.0
    %165 = vmatprep.subr.mxu0 0.0
    %166 = vmatpush1.msra.mxu0 0.0
    %167 = vmatprep.subr.mxu0 0.0
    %168 = vmatpush1.msra.mxu0 0.0
    %169 = vmatprep.subr.mxu0 0.0
    %170 = vmatpush1.msra.mxu0 0.0
    %171 = vmatprep.subr.mxu0 0.0
    %172 = vmatpush1.msra.mxu0 0.0
    %173 = vmatprep.subr.mxu0 0.0
    %174 = vmatpush1.msra.mxu0 0.0
    %175 = vmatprep.subr.mxu0 0.0
    %176 = vmatpush1.msra.mxu0 0.0
    %177 = vmatprep.subr.mxu0 0.0
    %178 = vmatpush1.msra.mxu0 0.0
    %179 = vmatprep.subr.mxu0 0.0
    %180 = vmatpush1.msra.mxu0 0.0
    %181 = vmatprep.subr.mxu0 0.0
    %182 = vmatpush1.msra.mxu0 0.0
    %183 = vmatprep.subr.mxu0 0.0
    %184 = vmatpush1.msra.mxu0 0.0
    %185 = vmatprep.subr.mxu0 0.0
    %186 = vmatpush1.msra.mxu0 0.0
    %187 = vmatprep.subr.mxu0 0.0
    %188 = vmatpush1.msra.mxu0 0.0
    %189 = vmatprep.subr.mxu0 0.0
    %190 = vmatpush1.msra.mxu0 0.0
    %191 = vmatprep.subr.mxu0 0.0
    %192 = vmatpush1.msra.mxu0 0.0
    %193 = vmatprep.subr.mxu0 0.0
    %194 = vmatpush1.msra.mxu0 0.0
    %195 = vmatprep.subr.mxu0 0.0
    %196 = vmatpush1.msra.mxu0 0.0
    %197 = vmatprep.subr.mxu0 0.0
    %198 = vmatpush1.msra.mxu0 0.0
    %199 = vmatprep.subr.mxu0 0.0
    %200 = vmatpush1.msra.mxu0 0.0
    %201 = vmatprep.subr.mxu0 0.0
    %202 = vmatpush1.msra.mxu0 0.0
    %203 = vmatprep.subr.mxu0 0.0
    %204 = vmatpush1.msra.mxu0 0.0
    %205 = vmatprep.subr.mxu0 0.0
    %206 = vmatpush1.msra.mxu0 0.0
    %207 = vmatprep.subr.mxu0 0.0
    %208 = vmatpush1.msra.mxu0 0.0
    %209 = vmatprep.subr.mxu0 0.0
    %210 = vmatpush1.msra.mxu0 0.0
    %211 = vmatprep.subr.mxu0 0.0
    %212 = vmatpush1.msra.mxu0 0.0
    %213 = vmatprep.subr.mxu0 0.0
    %214 = vmatpush1.msra.mxu0 0.0
    %215 = vmatprep.mubr.f32.mxu0 0.0
    %216 = vmatmul.mubr.f32.gmra.mrb[0].mxu0 %v140
    %v217 = vpop.f32.mrb[0].mxu0
    %v218 = vadd.f32 0.0, %v217
    %v219 = vpop.f32.mrb[0].mxu0
    %220 = vmatprep.mubr.f32.mxu0 0.0
    %221 = vmatmul.mubr.f32.gmra.mrb[0].mxu0 %v143
    %v222 = vpop.f32.mrb[0].mxu0
    %v223 = vadd.f32 0.0, %v222
    %v224 = vpop.f32.mrb[0].mxu0
    %225 = vmatprep.mubr.f32.mxu0 0.0
    %226 = vmatmul.mubr.f32.gmra.mrb[0].mxu0 %v146
    %v227 = vpop.f32.mrb[0].mxu0
    %v228 = vadd.f32 0.0, %v227
    %v229 = vpop.f32.mrb[0].mxu0
    %230 = vmatprep.mubr.f32.mxu0 0.0
    %231 = vmatmul.mubr.f32.gmra.mrb[0].mxu0 %v149
    %v232 = vpop.f32.mrb[0].mxu0
    %v233 = vadd.f32 0.0, %v232
    %v234 = vpop.f32.mrb[0].mxu0
    %235 = vdwg.mxu0
    %240 = vrot.lane.b32.xlu0 %v218, 120
    %v241 = vpop.permute.xlu0 %240
    %242 = vrot.lane.b32.xlu0 %v223, 120
    %v243 = vpop.permute.xlu0 %242
    %244 = vrot.lane.b32.xlu0 %v228, 120
    %v245 = vpop.permute.xlu0 %244
    %246 = vrot.lane.b32.xlu0 %v233, 120
    %v247 = vpop.permute.xlu0 %246
    %252 = vrot.lane.b32.xlu0 %v218, 112
    %v253 = vpop.permute.xlu0 %252
    %254 = vrot.lane.b32.xlu0 %v223, 112
    %v255 = vpop.permute.xlu0 %254
    %256 = vrot.lane.b32.xlu0 %v228, 112
    %v257 = vpop.permute.xlu0 %256
    %258 = vrot.lane.b32.xlu0 %v233, 112
    %v259 = vpop.permute.xlu0 %258
    %264 = vrot.lane.b32.xlu0 %v218, 104
    %v265 = vpop.permute.xlu0 %264
    %266 = vrot.lane.b32.xlu0 %v223, 104
    %v267 = vpop.permute.xlu0 %266
    %268 = vrot.lane.b32.xlu0 %v228, 104
    %v269 = vpop.permute.xlu0 %268
    %270 = vrot.lane.b32.xlu0 %v233, 104
    %v271 = vpop.permute.xlu0 %270
    %v276 = vcombine.low %v218, %v253
    %v277 = vcombine.high %v218, %v253
    %v279 = vunpack.c.l.s4 1983009808
    %v280 = vunpack.c.0.s8 %v279
    %v281 = vlaneseq
    %v282 = vshrl.u32 %v281, 7
    %v283 = vsub.s32 %v280, %v282
    %v284 = vrot.slane %v276, %v283
    %v286 = vunpack.c.l.s4 1983009808
    %v287 = vunpack.c.0.s8 %v286
    %v288 = vlaneseq
    %v289 = vshrl.u32 %v288, 7
    %v290 = vsub.s32 %v287, %v289
    %v291 = vrot.slane %v277, %v290
    %v292 = vcombine.low %v241, %v265
    %v293 = vcombine.high %v241, %v265
    %v295 = vunpack.c.l.s4 1983009808
    %v296 = vunpack.c.0.s8 %v295
    %v297 = vlaneseq
    %v298 = vshrl.u32 %v297, 7
    %v299 = vsub.s32 %v296, %v298
    %v300 = vrot.slane %v292, %v299
    %v302 = vunpack.c.l.s4 1983009808
    %v303 = vunpack.c.0.s8 %v302
    %v304 = vlaneseq
    %v305 = vshrl.u32 %v304, 7
    %v306 = vsub.s32 %v303, %v305
    %v307 = vrot.slane %v293, %v306
    %v308 = vcombine.low %v284, %v300
    %v309 = vcombine.high %v284, %v300
    %v311 = vunpack.c.l.s4 1934713408
    %v312 = vunpack.c.0.s8 %v311
    %v313 = vlaneseq
    %v314 = vshrl.u32 %v313, 7
    %v315 = vsub.s32 %v312, %v314
    %v316 = vrot.slane %v308, %v315
    %v318 = vunpack.c.l.s4 1934713408
    %v319 = vunpack.c.0.s8 %v318
    %v320 = vlaneseq
    %v321 = vshrl.u32 %v320, 7
    %v322 = vsub.s32 %v319, %v321
    %v323 = vrot.slane %v309, %v322
    %v324 = vcombine.low %v291, %v307
    %v325 = vcombine.high %v291, %v307
    %v327 = vunpack.c.l.s4 1934713408
    %v328 = vunpack.c.0.s8 %v327
    %v329 = vlaneseq
    %v330 = vshrl.u32 %v329, 7
    %v331 = vsub.s32 %v328, %v330
    %v332 = vrot.slane %v324, %v331
    %v334 = vunpack.c.l.s4 1934713408
    %v335 = vunpack.c.0.s8 %v334
    %v336 = vlaneseq
    %v337 = vshrl.u32 %v336, 7
    %v338 = vsub.s32 %v335, %v337
    %v339 = vrot.slane %v325, %v338
    %v340 = vcombine.high %v316, 0.0
    %v341 = vcombine.high %v323, 0.0
    %v342 = vcombine.high %v332, 0.0
    %v343 = vcombine.high %v339, 0.0
    %v344 = vcombine.low %v223, %v255
    %v345 = vcombine.high %v223, %v255
    %v347 = vunpack.c.l.s4 1983009808
    %v348 = vunpack.c.0.s8 %v347
    %v349 = vlaneseq
    %v350 = vshrl.u32 %v349, 7
    %v351 = vsub.s32 %v348, %v350
    %v352 = vrot.slane %v344, %v351
    %v354 = vunpack.c.l.s4 1983009808
    %v355 = vunpack.c.0.s8 %v354
    %v356 = vlaneseq
    %v357 = vshrl.u32 %v356, 7
    %v358 = vsub.s32 %v355, %v357
    %v359 = vrot.slane %v345, %v358
    %v360 = vcombine.low %v243, %v267
    %v361 = vcombine.high %v243, %v267
    %v363 = vunpack.c.l.s4 1983009808
    %v364 = vunpack.c.0.s8 %v363
    %v365 = vlaneseq
    %v366 = vshrl.u32 %v365, 7
    %v367 = vsub.s32 %v364, %v366
    %v368 = vrot.slane %v360, %v367
    %v370 = vunpack.c.l.s4 1983009808
    %v371 = vunpack.c.0.s8 %v370
    %v372 = vlaneseq
    %v373 = vshrl.u32 %v372, 7
    %v374 = vsub.s32 %v371, %v373
    %v375 = vrot.slane %v361, %v374
    %v376 = vcombine.low %v352, %v368
    %v377 = vcombine.high %v352, %v368
    %v379 = vunpack.c.l.s4 1934713408
    %v380 = vunpack.c.0.s8 %v379
    %v381 = vlaneseq
    %v382 = vshrl.u32 %v381, 7
    %v383 = vsub.s32 %v380, %v382
    %v384 = vrot.slane %v376, %v383
    %v386 = vunpack.c.l.s4 1934713408
    %v387 = vunpack.c.0.s8 %v386
    %v388 = vlaneseq
    %v389 = vshrl.u32 %v388, 7
    %v390 = vsub.s32 %v387, %v389
    %v391 = vrot.slane %v377, %v390
    %v392 = vcombine.low %v359, %v375
    %v393 = vcombine.high %v359, %v375
    %v395 = vunpack.c.l.s4 1934713408
    %v396 = vunpack.c.0.s8 %v395
    %v397 = vlaneseq
    %v398 = vshrl.u32 %v397, 7
    %v399 = vsub.s32 %v396, %v398
    %v400 = vrot.slane %v392, %v399
    %v402 = vunpack.c.l.s4 1934713408
    %v403 = vunpack.c.0.s8 %v402
    %v404 = vlaneseq
    %v405 = vshrl.u32 %v404, 7
    %v406 = vsub.s32 %v403, %v405
    %v407 = vrot.slane %v393, %v406
    %v408 = vcombine.high %v384, 0.0
    %v409 = vcombine.high %v391, 0.0
    %v410 = vcombine.high %v400, 0.0
    %v411 = vcombine.high %v407, 0.0
    %v412 = vcombine.low %v228, %v257
    %v413 = vcombine.high %v228, %v257
    %v415 = vunpack.c.l.s4 1983009808
    %v416 = vunpack.c.0.s8 %v415
    %v417 = vlaneseq
    %v418 = vshrl.u32 %v417, 7
    %v419 = vsub.s32 %v416, %v418
    %v420 = vrot.slane %v412, %v419
    %v422 = vunpack.c.l.s4 1983009808
    %v423 = vunpack.c.0.s8 %v422
    %v424 = vlaneseq
    %v425 = vshrl.u32 %v424, 7
    %v426 = vsub.s32 %v423, %v425
    %v427 = vrot.slane %v413, %v426
    %v428 = vcombine.low %v245, %v269
    %v429 = vcombine.high %v245, %v269
    %v431 = vunpack.c.l.s4 1983009808
    %v432 = vunpack.c.0.s8 %v431
    %v433 = vlaneseq
    %v434 = vshrl.u32 %v433, 7
    %v435 = vsub.s32 %v432, %v434
    %v436 = vrot.slane %v428, %v435
    %v438 = vunpack.c.l.s4 1983009808
    %v439 = vunpack.c.0.s8 %v438
    %v440 = vlaneseq
    %v441 = vshrl.u32 %v440, 7
    %v442 = vsub.s32 %v439, %v441
    %v443 = vrot.slane %v429, %v442
    %v444 = vcombine.low %v420, %v436
    %v445 = vcombine.high %v420, %v436
    %v447 = vunpack.c.l.s4 1934713408
    %v448 = vunpack.c.0.s8 %v447
    %v449 = vlaneseq
    %v450 = vshrl.u32 %v449, 7
    %v451 = vsub.s32 %v448, %v450
    %v452 = vrot.slane %v444, %v451
    %v454 = vunpack.c.l.s4 1934713408
    %v455 = vunpack.c.0.s8 %v454
    %v456 = vlaneseq
    %v457 = vshrl.u32 %v456, 7
    %v458 = vsub.s32 %v455, %v457
    %v459 = vrot.slane %v445, %v458
    %v460 = vcombine.low %v427, %v443
    %v461 = vcombine.high %v427, %v443
    %v463 = vunpack.c.l.s4 1934713408
    %v464 = vunpack.c.0.s8 %v463
    %v465 = vlaneseq
    %v466 = vshrl.u32 %v465, 7
    %v467 = vsub.s32 %v464, %v466
    %v468 = vrot.slane %v460, %v467
    %v470 = vunpack.c.l.s4 1934713408
    %v471 = vunpack.c.0.s8 %v470
    %v472 = vlaneseq
    %v473 = vshrl.u32 %v472, 7
    %v474 = vsub.s32 %v471, %v473
    %v475 = vrot.slane %v461, %v474
    %v476 = vcombine.high %v452, 0.0
    %v477 = vcombine.high %v459, 0.0
    %v478 = vcombine.high %v468, 0.0
    %v479 = vcombine.high %v475, 0.0
    %v480 = vcombine.low %v233, %v259
    %v481 = vcombine.high %v233, %v259
    %v483 = vunpack.c.l.s4 1983009808
    %v484 = vunpack.c.0.s8 %v483
    %v485 = vlaneseq
    %v486 = vshrl.u32 %v485, 7
    %v487 = vsub.s32 %v484, %v486
    %v488 = vrot.slane %v480, %v487
    %v490 = vunpack.c.l.s4 1983009808
    %v491 = vunpack.c.0.s8 %v490
    %v492 = vlaneseq
    %v493 = vshrl.u32 %v492, 7
    %v494 = vsub.s32 %v491, %v493
    %v495 = vrot.slane %v481, %v494
    %v496 = vcombine.low %v247, %v271
    %v497 = vcombine.high %v247, %v271
    %v499 = vunpack.c.l.s4 1983009808
    %v500 = vunpack.c.0.s8 %v499
    %v501 = vlaneseq
    %v502 = vshrl.u32 %v501, 7
    %v503 = vsub.s32 %v500, %v502
    %v504 = vrot.slane %v496, %v503
    %v506 = vunpack.c.l.s4 1983009808
    %v507 = vunpack.c.0.s8 %v506
    %v508 = vlaneseq
    %v509 = vshrl.u32 %v508, 7
    %v510 = vsub.s32 %v507, %v509
    %v511 = vrot.slane %v497, %v510
    %v512 = vcombine.low %v488, %v504
    %v513 = vcombine.high %v488, %v504
    %v515 = vunpack.c.l.s4 1934713408
    %v516 = vunpack.c.0.s8 %v515
    %v517 = vlaneseq
    %v518 = vshrl.u32 %v517, 7
    %v519 = vsub.s32 %v516, %v518
    %v520 = vrot.slane %v512, %v519
    %v522 = vunpack.c.l.s4 1934713408
    %v523 = vunpack.c.0.s8 %v522
    %v524 = vlaneseq
    %v525 = vshrl.u32 %v524, 7
    %v526 = vsub.s32 %v523, %v525
    %v527 = vrot.slane %v513, %v526
    %v528 = vcombine.low %v495, %v511
    %v529 = vcombine.high %v495, %v511
    %v531 = vunpack.c.l.s4 1934713408
    %v532 = vunpack.c.0.s8 %v531
    %v533 = vlaneseq
    %v534 = vshrl.u32 %v533, 7
    %v535 = vsub.s32 %v532, %v534
    %v536 = vrot.slane %v528, %v535
    %v538 = vunpack.c.l.s4 1934713408
    %v539 = vunpack.c.0.s8 %v538
    %v540 = vlaneseq
    %v541 = vshrl.u32 %v540, 7
    %v542 = vsub.s32 %v539, %v541
    %v543 = vrot.slane %v529, %v542
    %v544 = vcombine.high %v520, 0.0
    %v545 = vcombine.high %v527, 0.0
    %v546 = vcombine.high %v536, 0.0
    %v547 = vcombine.high %v543, 0.0
    %v548 = vcombine.low %v316, %v323
    %v550 = vunpack.c.l.s4 1983009808
    %v551 = vunpack.c.0.s8 %v550
    %v552 = vlaneseq
    %v553 = vshrl.u32 %v552, 7
    %v554 = vsub.s32 %v551, %v553
    %v555 = vrot.slane %v548, %v554
    %v556 = vcombine.low %v340, %v341
    %v558 = vunpack.c.l.s4 1983009808
    %v559 = vunpack.c.0.s8 %v558
    %v560 = vlaneseq
    %v561 = vshrl.u32 %v560, 7
    %v562 = vsub.s32 %v559, %v561
    %v563 = vrot.slane %v556, %v562
    %v564 = vcombine.low %v332, %v339
    %v566 = vunpack.c.l.s4 1983009808
    %v567 = vunpack.c.0.s8 %v566
    %v568 = vlaneseq
    %v569 = vshrl.u32 %v568, 7
    %v570 = vsub.s32 %v567, %v569
    %v571 = vrot.slane %v564, %v570
    %v572 = vcombine.low %v342, %v343
    %v574 = vunpack.c.l.s4 1983009808
    %v575 = vunpack.c.0.s8 %v574
    %v576 = vlaneseq
    %v577 = vshrl.u32 %v576, 7
    %v578 = vsub.s32 %v575, %v577
    %v579 = vrot.slane %v572, %v578
    %v580 = vcombine.low %v555, %v563
    %v581 = vcombine.high %v555, %v563
    %v583 = vunpack.c.l.s4 1934713408
    %v584 = vunpack.c.0.s8 %v583
    %v585 = vlaneseq
    %v586 = vshrl.u32 %v585, 7
    %v587 = vsub.s32 %v584, %v586
    %v588 = vrot.slane %v580, %v587
    %v590 = vunpack.c.l.s4 1934713408
    %v591 = vunpack.c.0.s8 %v590
    %v592 = vlaneseq
    %v593 = vshrl.u32 %v592, 7
    %v594 = vsub.s32 %v591, %v593
    %v595 = vrot.slane %v581, %v594
    %v596 = vcombine.low %v571, %v579
    %v597 = vcombine.high %v571, %v579
    %v599 = vunpack.c.l.s4 1934713408
    %v600 = vunpack.c.0.s8 %v599
    %v601 = vlaneseq
    %v602 = vshrl.u32 %v601, 7
    %v603 = vsub.s32 %v600, %v602
    %v604 = vrot.slane %v596, %v603
    %v606 = vunpack.c.l.s4 1934713408
    %v607 = vunpack.c.0.s8 %v606
    %v608 = vlaneseq
    %v609 = vshrl.u32 %v608, 7
    %v610 = vsub.s32 %v607, %v609
    %v611 = vrot.slane %v597, %v610
    %v612 = vcombine.low %v588, %v604
    %v613 = vcombine.high %v588, %v604
    %v614 = vcombine.low %v595, %v611
    %v615 = vcombine.high %v595, %v611
    %v616 = vcombine.low %v384, %v391
    %v618 = vunpack.c.l.s4 1983009808
    %v619 = vunpack.c.0.s8 %v618
    %v620 = vlaneseq
    %v621 = vshrl.u32 %v620, 7
    %v622 = vsub.s32 %v619, %v621
    %v623 = vrot.slane %v616, %v622
    %v624 = vcombine.low %v408, %v409
    %v626 = vunpack.c.l.s4 1983009808
    %v627 = vunpack.c.0.s8 %v626
    %v628 = vlaneseq
    %v629 = vshrl.u32 %v628, 7
    %v630 = vsub.s32 %v627, %v629
    %v631 = vrot.slane %v624, %v630
    %v632 = vcombine.low %v400, %v407
    %v634 = vunpack.c.l.s4 1983009808
    %v635 = vunpack.c.0.s8 %v634
    %v636 = vlaneseq
    %v637 = vshrl.u32 %v636, 7
    %v638 = vsub.s32 %v635, %v637
    %v639 = vrot.slane %v632, %v638
    %v640 = vcombine.low %v410, %v411
    %v642 = vunpack.c.l.s4 1983009808
    %v643 = vunpack.c.0.s8 %v642
    %v644 = vlaneseq
    %v645 = vshrl.u32 %v644, 7
    %v646 = vsub.s32 %v643, %v645
    %v647 = vrot.slane %v640, %v646
    %v648 = vcombine.low %v623, %v631
    %v649 = vcombine.high %v623, %v631
    %v651 = vunpack.c.l.s4 1934713408
    %v652 = vunpack.c.0.s8 %v651
    %v653 = vlaneseq
    %v654 = vshrl.u32 %v653, 7
    %v655 = vsub.s32 %v652, %v654
    %v656 = vrot.slane %v648, %v655
    %v658 = vunpack.c.l.s4 1934713408
    %v659 = vunpack.c.0.s8 %v658
    %v660 = vlaneseq
    %v661 = vshrl.u32 %v660, 7
    %v662 = vsub.s32 %v659, %v661
    %v663 = vrot.slane %v649, %v662
    %v664 = vcombine.low %v639, %v647
    %v665 = vcombine.high %v639, %v647
    %v667 = vunpack.c.l.s4 1934713408
    %v668 = vunpack.c.0.s8 %v667
    %v669 = vlaneseq
    %v670 = vshrl.u32 %v669, 7
    %v671 = vsub.s32 %v668, %v670
    %v672 = vrot.slane %v664, %v671
    %v674 = vunpack.c.l.s4 1934713408
    %v675 = vunpack.c.0.s8 %v674
    %v676 = vlaneseq
    %v677 = vshrl.u32 %v676, 7
    %v678 = vsub.s32 %v675, %v677
    %v679 = vrot.slane %v665, %v678
    %v680 = vcombine.low %v656, %v672
    %v681 = vcombine.high %v656, %v672
    %v682 = vcombine.low %v663, %v679
    %v683 = vcombine.high %v663, %v679
    %v684 = vcombine.low %v452, %v459
    %v686 = vunpack.c.l.s4 1983009808
    %v687 = vunpack.c.0.s8 %v686
    %v688 = vlaneseq
    %v689 = vshrl.u32 %v688, 7
    %v690 = vsub.s32 %v687, %v689
    %v691 = vrot.slane %v684, %v690
    %v692 = vcombine.low %v476, %v477
    %v694 = vunpack.c.l.s4 1983009808
    %v695 = vunpack.c.0.s8 %v694
    %v696 = vlaneseq
    %v697 = vshrl.u32 %v696, 7
    %v698 = vsub.s32 %v695, %v697
    %v699 = vrot.slane %v692, %v698
    %v700 = vcombine.low %v468, %v475
    %v702 = vunpack.c.l.s4 1983009808
    %v703 = vunpack.c.0.s8 %v702
    %v704 = vlaneseq
    %v705 = vshrl.u32 %v704, 7
    %v706 = vsub.s32 %v703, %v705
    %v707 = vrot.slane %v700, %v706
    %v708 = vcombine.low %v478, %v479
    %v710 = vunpack.c.l.s4 1983009808
    %v711 = vunpack.c.0.s8 %v710
    %v712 = vlaneseq
    %v713 = vshrl.u32 %v712, 7
    %v714 = vsub.s32 %v711, %v713
    %v715 = vrot.slane %v708, %v714
    %v716 = vcombine.low %v691, %v699
    %v717 = vcombine.high %v691, %v699
    %v719 = vunpack.c.l.s4 1934713408
    %v720 = vunpack.c.0.s8 %v719
    %v721 = vlaneseq
    %v722 = vshrl.u32 %v721, 7
    %v723 = vsub.s32 %v720, %v722
    %v724 = vrot.slane %v716, %v723
    %v726 = vunpack.c.l.s4 1934713408
    %v727 = vunpack.c.0.s8 %v726
    %v728 = vlaneseq
    %v729 = vshrl.u32 %v728, 7
    %v730 = vsub.s32 %v727, %v729
    %v731 = vrot.slane %v717, %v730
    %v732 = vcombine.low %v707, %v715
    %v733 = vcombine.high %v707, %v715
    %v735 = vunpack.c.l.s4 1934713408
    %v736 = vunpack.c.0.s8 %v735
    %v737 = vlaneseq
    %v738 = vshrl.u32 %v737, 7
    %v739 = vsub.s32 %v736, %v738
    %v740 = vrot.slane %v732, %v739
    %v742 = vunpack.c.l.s4 1934713408
    %v743 = vunpack.c.0.s8 %v742
    %v744 = vlaneseq
    %v745 = vshrl.u32 %v744, 7
    %v746 = vsub.s32 %v743, %v745
    %v747 = vrot.slane %v733, %v746
    %v748 = vcombine.low %v724, %v740
    %v749 = vcombine.high %v724, %v740
    %v750 = vcombine.low %v731, %v747
    %v751 = vcombine.high %v731, %v747
    %v752 = vcombine.low %v520, %v527
    %v754 = vunpack.c.l.s4 1983009808
    %v755 = vunpack.c.0.s8 %v754
    %v756 = vlaneseq
    %v757 = vshrl.u32 %v756, 7
    %v758 = vsub.s32 %v755, %v757
    %v759 = vrot.slane %v752, %v758
    %v760 = vcombine.low %v544, %v545
    %v762 = vunpack.c.l.s4 1983009808
    %v763 = vunpack.c.0.s8 %v762
    %v764 = vlaneseq
    %v765 = vshrl.u32 %v764, 7
    %v766 = vsub.s32 %v763, %v765
    %v767 = vrot.slane %v760, %v766
    %v768 = vcombine.low %v536, %v543
    %v770 = vunpack.c.l.s4 1983009808
    %v771 = vunpack.c.0.s8 %v770
    %v772 = vlaneseq
    %v773 = vshrl.u32 %v772, 7
    %v774 = vsub.s32 %v771, %v773
    %v775 = vrot.slane %v768, %v774
    %v776 = vcombine.low %v546, %v547
    %v778 = vunpack.c.l.s4 1983009808
    %v779 = vunpack.c.0.s8 %v778
    %v780 = vlaneseq
    %v781 = vshrl.u32 %v780, 7
    %v782 = vsub.s32 %v779, %v781
    %v783 = vrot.slane %v776, %v782
    %v784 = vcombine.low %v759, %v767
    %v785 = vcombine.high %v759, %v767
    %v787 = vunpack.c.l.s4 1934713408
    %v788 = vunpack.c.0.s8 %v787
    %v789 = vlaneseq
    %v790 = vshrl.u32 %v789, 7
    %v791 = vsub.s32 %v788, %v790
    %v792 = vrot.slane %v784, %v791
    %v794 = vunpack.c.l.s4 1934713408
    %v795 = vunpack.c.0.s8 %v794
    %v796 = vlaneseq
    %v797 = vshrl.u32 %v796, 7
    %v798 = vsub.s32 %v795, %v797
    %v799 = vrot.slane %v785, %v798
    %v800 = vcombine.low %v775, %v783
    %v801 = vcombine.high %v775, %v783
    %v803 = vunpack.c.l.s4 1934713408
    %v804 = vunpack.c.0.s8 %v803
    %v805 = vlaneseq
    %v806 = vshrl.u32 %v805, 7
    %v807 = vsub.s32 %v804, %v806
    %v808 = vrot.slane %v800, %v807
    %v810 = vunpack.c.l.s4 1934713408
    %v811 = vunpack.c.0.s8 %v810
    %v812 = vlaneseq
    %v813 = vshrl.u32 %v812, 7
    %v814 = vsub.s32 %v811, %v813
    %v815 = vrot.slane %v801, %v814
    %v816 = vcombine.low %v792, %v808
    %v817 = vcombine.high %v792, %v808
    %v818 = vcombine.low %v799, %v815
    %v819 = vcombine.high %v799, %v815
    %820 = vrot.lane.b32.xlu0 %v218, 96
    %v821 = vpop.permute.xlu0 %820
    %822 = vrot.lane.b32.xlu0 %v223, 96
    %v823 = vpop.permute.xlu0 %822
    %824 = vrot.lane.b32.xlu0 %v228, 96
    %v825 = vpop.permute.xlu0 %824
    %826 = vrot.lane.b32.xlu0 %v233, 96
    %v827 = vpop.permute.xlu0 %826
    %828 = vrot.lane.b32.xlu0 %v241, 96
    %v829 = vpop.permute.xlu0 %828
    %830 = vrot.lane.b32.xlu0 %v243, 96
    %v831 = vpop.permute.xlu0 %830
    %832 = vrot.lane.b32.xlu0 %v245, 96
    %v833 = vpop.permute.xlu0 %832
    %834 = vrot.lane.b32.xlu0 %v247, 96
    %v835 = vpop.permute.xlu0 %834
    %836 = vrot.lane.b32.xlu0 %v253, 96
    %v837 = vpop.permute.xlu0 %836
    %838 = vrot.lane.b32.xlu0 %v255, 96
    %v839 = vpop.permute.xlu0 %838
    %840 = vrot.lane.b32.xlu0 %v257, 96
    %v841 = vpop.permute.xlu0 %840
    %842 = vrot.lane.b32.xlu0 %v259, 96
    %v843 = vpop.permute.xlu0 %842
    %844 = vrot.lane.b32.xlu0 %v265, 96
    %v845 = vpop.permute.xlu0 %844
    %846 = vrot.lane.b32.xlu0 %v267, 96
    %v847 = vpop.permute.xlu0 %846
    %848 = vrot.lane.b32.xlu0 %v269, 96
    %v849 = vpop.permute.xlu0 %848
    %850 = vrot.lane.b32.xlu0 %v271, 96
    %v851 = vpop.permute.xlu0 %850
    %v868 = vcombine.low %v821, %v837
    %v869 = vcombine.high %v821, %v837
    %v871 = vunpack.c.l.s4 1983009808
    %v872 = vunpack.c.0.s8 %v871
    %v873 = vlaneseq
    %v874 = vshrl.u32 %v873, 7
    %v875 = vsub.s32 %v872, %v874
    %v876 = vrot.slane %v868, %v875
    %v878 = vunpack.c.l.s4 1983009808
    %v879 = vunpack.c.0.s8 %v878
    %v880 = vlaneseq
    %v881 = vshrl.u32 %v880, 7
    %v882 = vsub.s32 %v879, %v881
    %v883 = vrot.slane %v869, %v882
    %v884 = vcombine.low %v829, %v845
    %v885 = vcombine.high %v829, %v845
    %v887 = vunpack.c.l.s4 1983009808
    %v888 = vunpack.c.0.s8 %v887
    %v889 = vlaneseq
    %v890 = vshrl.u32 %v889, 7
    %v891 = vsub.s32 %v888, %v890
    %v892 = vrot.slane %v884, %v891
    %v894 = vunpack.c.l.s4 1983009808
    %v895 = vunpack.c.0.s8 %v894
    %v896 = vlaneseq
    %v897 = vshrl.u32 %v896, 7
    %v898 = vsub.s32 %v895, %v897
    %v899 = vrot.slane %v885, %v898
    %v900 = vcombine.low %v876, %v892
    %v901 = vcombine.high %v876, %v892
    %v903 = vunpack.c.l.s4 1934713408
    %v904 = vunpack.c.0.s8 %v903
    %v905 = vlaneseq
    %v906 = vshrl.u32 %v905, 7
    %v907 = vsub.s32 %v904, %v906
    %v908 = vrot.slane %v900, %v907
    %v910 = vunpack.c.l.s4 1934713408
    %v911 = vunpack.c.0.s8 %v910
    %v912 = vlaneseq
    %v913 = vshrl.u32 %v912, 7
    %v914 = vsub.s32 %v911, %v913
    %v915 = vrot.slane %v901, %v914
    %v916 = vcombine.low %v883, %v899
    %v917 = vcombine.high %v883, %v899
    %v919 = vunpack.c.l.s4 1934713408
    %v920 = vunpack.c.0.s8 %v919
    %v921 = vlaneseq
    %v922 = vshrl.u32 %v921, 7
    %v923 = vsub.s32 %v920, %v922
    %v924 = vrot.slane %v916, %v923
    %v926 = vunpack.c.l.s4 1934713408
    %v927 = vunpack.c.0.s8 %v926
    %v928 = vlaneseq
    %v929 = vshrl.u32 %v928, 7
    %v930 = vsub.s32 %v927, %v929
    %v931 = vrot.slane %v917, %v930
    %v932 = vcombine.high %v908, 0.0
    %v933 = vcombine.high %v915, 0.0
    %v934 = vcombine.high %v924, 0.0
    %v935 = vcombine.high %v931, 0.0
    %v936 = vcombine.low %v823, %v839
    %v937 = vcombine.high %v823, %v839
    %v939 = vunpack.c.l.s4 1983009808
    %v940 = vunpack.c.0.s8 %v939
    %v941 = vlaneseq
    %v942 = vshrl.u32 %v941, 7
    %v943 = vsub.s32 %v940, %v942
    %v944 = vrot.slane %v936, %v943
    %v946 = vunpack.c.l.s4 1983009808
    %v947 = vunpack.c.0.s8 %v946
    %v948 = vlaneseq
    %v949 = vshrl.u32 %v948, 7
    %v950 = vsub.s32 %v947, %v949
    %v951 = vrot.slane %v937, %v950
    %v952 = vcombine.low %v831, %v847
    %v953 = vcombine.high %v831, %v847
    %v955 = vunpack.c.l.s4 1983009808
    %v956 = vunpack.c.0.s8 %v955
    %v957 = vlaneseq
    %v958 = vshrl.u32 %v957, 7
    %v959 = vsub.s32 %v956, %v958
    %v960 = vrot.slane %v952, %v959
    %v962 = vunpack.c.l.s4 1983009808
    %v963 = vunpack.c.0.s8 %v962
    %v964 = vlaneseq
    %v965 = vshrl.u32 %v964, 7
    %v966 = vsub.s32 %v963, %v965
    %v967 = vrot.slane %v953, %v966
    %v968 = vcombine.low %v944, %v960
    %v969 = vcombine.high %v944, %v960
    %v971 = vunpack.c.l.s4 1934713408
    %v972 = vunpack.c.0.s8 %v971
    %v973 = vlaneseq
    %v974 = vshrl.u32 %v973, 7
    %v975 = vsub.s32 %v972, %v974
    %v976 = vrot.slane %v968, %v975
    %v978 = vunpack.c.l.s4 1934713408
    %v979 = vunpack.c.0.s8 %v978
    %v980 = vlaneseq
    %v981 = vshrl.u32 %v980, 7
    %v982 = vsub.s32 %v979, %v981
    %v983 = vrot.slane %v969, %v982
    %v984 = vcombine.low %v951, %v967
    %v985 = vcombine.high %v951, %v967
    %v987 = vunpack.c.l.s4 1934713408
    %v988 = vunpack.c.0.s8 %v987
    %v989 = vlaneseq
    %v990 = vshrl.u32 %v989, 7
    %v991 = vsub.s32 %v988, %v990
    %v992 = vrot.slane %v984, %v991
    %v994 = vunpack.c.l.s4 1934713408
    %v995 = vunpack.c.0.s8 %v994
    %v996 = vlaneseq
    %v997 = vshrl.u32 %v996, 7
    %v998 = vsub.s32 %v995, %v997
    %v999 = vrot.slane %v985, %v998
    %v1000 = vcombine.high %v976, 0.0
    %v1001 = vcombine.high %v983, 0.0
    %v1002 = vcombine.high %v992, 0.0
    %v1003 = vcombine.high %v999, 0.0
    %v1004 = vcombine.low %v825, %v841
    %v1005 = vcombine.high %v825, %v841
    %v1007 = vunpack.c.l.s4 1983009808
    %v1008 = vunpack.c.0.s8 %v1007
    %v1009 = vlaneseq
    %v1010 = vshrl.u32 %v1009, 7
    %v1011 = vsub.s32 %v1008, %v1010
    %v1012 = vrot.slane %v1004, %v1011
    %v1014 = vunpack.c.l.s4 1983009808
    %v1015 = vunpack.c.0.s8 %v1014
    %v1016 = vlaneseq
    %v1017 = vshrl.u32 %v1016, 7
    %v1018 = vsub.s32 %v1015, %v1017
    %v1019 = vrot.slane %v1005, %v1018
    %v1020 = vcombine.low %v833, %v849
    %v1021 = vcombine.high %v833, %v849
    %v1023 = vunpack.c.l.s4 1983009808
    %v1024 = vunpack.c.0.s8 %v1023
    %v1025 = vlaneseq
    %v1026 = vshrl.u32 %v1025, 7
    %v1027 = vsub.s32 %v1024, %v1026
    %v1028 = vrot.slane %v1020, %v1027
    %v1030 = vunpack.c.l.s4 1983009808
    %v1031 = vunpack.c.0.s8 %v1030
    %v1032 = vlaneseq
    %v1033 = vshrl.u32 %v1032, 7
    %v1034 = vsub.s32 %v1031, %v1033
    %v1035 = vrot.slane %v1021, %v1034
    %v1036 = vcombine.low %v1012, %v1028
    %v1037 = vcombine.high %v1012, %v1028
    %v1039 = vunpack.c.l.s4 1934713408
    %v1040 = vunpack.c.0.s8 %v1039
    %v1041 = vlaneseq
    %v1042 = vshrl.u32 %v1041, 7
    %v1043 = vsub.s32 %v1040, %v1042
    %v1044 = vrot.slane %v1036, %v1043
    %v1046 = vunpack.c.l.s4 1934713408
    %v1047 = vunpack.c.0.s8 %v1046
    %v1048 = vlaneseq
    %v1049 = vshrl.u32 %v1048, 7
    %v1050 = vsub.s32 %v1047, %v1049
    %v1051 = vrot.slane %v1037, %v1050
    %v1052 = vcombine.low %v1019, %v1035
    %v1053 = vcombine.high %v1019, %v1035
    %v1055 = vunpack.c.l.s4 1934713408
    %v1056 = vunpack.c.0.s8 %v1055
    %v1057 = vlaneseq
    %v1058 = vshrl.u32 %v1057, 7
    %v1059 = vsub.s32 %v1056, %v1058
    %v1060 = vrot.slane %v1052, %v1059
    %v1062 = vunpack.c.l.s4 1934713408
    %v1063 = vunpack.c.0.s8 %v1062
    %v1064 = vlaneseq
    %v1065 = vshrl.u32 %v1064, 7
    %v1066 = vsub.s32 %v1063, %v1065
    %v1067 = vrot.slane %v1053, %v1066
    %v1068 = vcombine.high %v1044, 0.0
    %v1069 = vcombine.high %v1051, 0.0
    %v1070 = vcombine.high %v1060, 0.0
    %v1071 = vcombine.high %v1067, 0.0
    %v1072 = vcombine.low %v827, %v843
    %v1073 = vcombine.high %v827, %v843
    %v1075 = vunpack.c.l.s4 1983009808
    %v1076 = vunpack.c.0.s8 %v1075
    %v1077 = vlaneseq
    %v1078 = vshrl.u32 %v1077, 7
    %v1079 = vsub.s32 %v1076, %v1078
    %v1080 = vrot.slane %v1072, %v1079
    %v1082 = vunpack.c.l.s4 1983009808
    %v1083 = vunpack.c.0.s8 %v1082
    %v1084 = vlaneseq
    %v1085 = vshrl.u32 %v1084, 7
    %v1086 = vsub.s32 %v1083, %v1085
    %v1087 = vrot.slane %v1073, %v1086
    %v1088 = vcombine.low %v835, %v851
    %v1089 = vcombine.high %v835, %v851
    %v1091 = vunpack.c.l.s4 1983009808
    %v1092 = vunpack.c.0.s8 %v1091
    %v1093 = vlaneseq
    %v1094 = vshrl.u32 %v1093, 7
    %v1095 = vsub.s32 %v1092, %v1094
    %v1096 = vrot.slane %v1088, %v1095
    %v1098 = vunpack.c.l.s4 1983009808
    %v1099 = vunpack.c.0.s8 %v1098
    %v1100 = vlaneseq
    %v1101 = vshrl.u32 %v1100, 7
    %v1102 = vsub.s32 %v1099, %v1101
    %v1103 = vrot.slane %v1089, %v1102
    %v1104 = vcombine.low %v1080, %v1096
    %v1105 = vcombine.high %v1080, %v1096
    %v1107 = vunpack.c.l.s4 1934713408
    %v1108 = vunpack.c.0.s8 %v1107
    %v1109 = vlaneseq
    %v1110 = vshrl.u32 %v1109, 7
    %v1111 = vsub.s32 %v1108, %v1110
    %v1112 = vrot.slane %v1104, %v1111
    %v1114 = vunpack.c.l.s4 1934713408
    %v1115 = vunpack.c.0.s8 %v1114
    %v1116 = vlaneseq
    %v1117 = vshrl.u32 %v1116, 7
    %v1118 = vsub.s32 %v1115, %v1117
    %v1119 = vrot.slane %v1105, %v1118
    %v1120 = vcombine.low %v1087, %v1103
    %v1121 = vcombine.high %v1087, %v1103
    %v1123 = vunpack.c.l.s4 1934713408
    %v1124 = vunpack.c.0.s8 %v1123
    %v1125 = vlaneseq
    %v1126 = vshrl.u32 %v1125, 7
    %v1127 = vsub.s32 %v1124, %v1126
    %v1128 = vrot.slane %v1120, %v1127
    %v1130 = vunpack.c.l.s4 1934713408
    %v1131 = vunpack.c.0.s8 %v1130
    %v1132 = vlaneseq
    %v1133 = vshrl.u32 %v1132, 7
    %v1134 = vsub.s32 %v1131, %v1133
    %v1135 = vrot.slane %v1121, %v1134
    %v1136 = vcombine.high %v1112, 0.0
    %v1137 = vcombine.high %v1119, 0.0
    %v1138 = vcombine.high %v1128, 0.0
    %v1139 = vcombine.high %v1135, 0.0
    %v1140 = vcombine.low %v908, %v915
    %v1142 = vunpack.c.l.s4 1983009808
    %v1143 = vunpack.c.0.s8 %v1142
    %v1144 = vlaneseq
    %v1145 = vshrl.u32 %v1144, 7
    %v1146 = vsub.s32 %v1143, %v1145
    %v1147 = vrot.slane %v1140, %v1146
    %v1148 = vcombine.low %v932, %v933
    %v1150 = vunpack.c.l.s4 1983009808
    %v1151 = vunpack.c.0.s8 %v1150
    %v1152 = vlaneseq
    %v1153 = vshrl.u32 %v1152, 7
    %v1154 = vsub.s32 %v1151, %v1153
    %v1155 = vrot.slane %v1148, %v1154
    %v1156 = vcombine.low %v924, %v931
    %v1158 = vunpack.c.l.s4 1983009808
    %v1159 = vunpack.c.0.s8 %v1158
    %v1160 = vlaneseq
    %v1161 = vshrl.u32 %v1160, 7
    %v1162 = vsub.s32 %v1159, %v1161
    %v1163 = vrot.slane %v1156, %v1162
    %v1164 = vcombine.low %v934, %v935
    %v1166 = vunpack.c.l.s4 1983009808
    %v1167 = vunpack.c.0.s8 %v1166
    %v1168 = vlaneseq
    %v1169 = vshrl.u32 %v1168, 7
    %v1170 = vsub.s32 %v1167, %v1169
    %v1171 = vrot.slane %v1164, %v1170
    %v1172 = vcombine.low %v1147, %v1155
    %v1173 = vcombine.high %v1147, %v1155
    %v1175 = vunpack.c.l.s4 1934713408
    %v1176 = vunpack.c.0.s8 %v1175
    %v1177 = vlaneseq
    %v1178 = vshrl.u32 %v1177, 7
    %v1179 = vsub.s32 %v1176, %v1178
    %v1180 = vrot.slane %v1172, %v1179
    %v1182 = vunpack.c.l.s4 1934713408
    %v1183 = vunpack.c.0.s8 %v1182
    %v1184 = vlaneseq
    %v1185 = vshrl.u32 %v1184, 7
    %v1186 = vsub.s32 %v1183, %v1185
    %v1187 = vrot.slane %v1173, %v1186
    %v1188 = vcombine.low %v1163, %v1171
    %v1189 = vcombine.high %v1163, %v1171
    %v1191 = vunpack.c.l.s4 1934713408
    %v1192 = vunpack.c.0.s8 %v1191
    %v1193 = vlaneseq
    %v1194 = vshrl.u32 %v1193, 7
    %v1195 = vsub.s32 %v1192, %v1194
    %v1196 = vrot.slane %v1188, %v1195
    %v1198 = vunpack.c.l.s4 1934713408
    %v1199 = vunpack.c.0.s8 %v1198
    %v1200 = vlaneseq
    %v1201 = vshrl.u32 %v1200, 7
    %v1202 = vsub.s32 %v1199, %v1201
    %v1203 = vrot.slane %v1189, %v1202
    %v1204 = vcombine.low %v1180, %v1196
    %v1205 = vcombine.high %v1180, %v1196
    %v1206 = vcombine.low %v1187, %v1203
    %v1207 = vcombine.high %v1187, %v1203
    %v1208 = vcombine.low %v976, %v983
    %v1210 = vunpack.c.l.s4 1983009808
    %v1211 = vunpack.c.0.s8 %v1210
    %v1212 = vlaneseq
    %v1213 = vshrl.u32 %v1212, 7
    %v1214 = vsub.s32 %v1211, %v1213
    %v1215 = vrot.slane %v1208, %v1214
    %v1216 = vcombine.low %v1000, %v1001
    %v1218 = vunpack.c.l.s4 1983009808
    %v1219 = vunpack.c.0.s8 %v1218
    %v1220 = vlaneseq
    %v1221 = vshrl.u32 %v1220, 7
    %v1222 = vsub.s32 %v1219, %v1221
    %v1223 = vrot.slane %v1216, %v1222
    %v1224 = vcombine.low %v992, %v999
    %v1226 = vunpack.c.l.s4 1983009808
    %v1227 = vunpack.c.0.s8 %v1226
    %v1228 = vlaneseq
    %v1229 = vshrl.u32 %v1228, 7
    %v1230 = vsub.s32 %v1227, %v1229
    %v1231 = vrot.slane %v1224, %v1230
    %v1232 = vcombine.low %v1002, %v1003
    %v1234 = vunpack.c.l.s4 1983009808
    %v1235 = vunpack.c.0.s8 %v1234
    %v1236 = vlaneseq
    %v1237 = vshrl.u32 %v1236, 7
    %v1238 = vsub.s32 %v1235, %v1237
    %v1239 = vrot.slane %v1232, %v1238
    %v1240 = vcombine.low %v1215, %v1223
    %v1241 = vcombine.high %v1215, %v1223
    %v1243 = vunpack.c.l.s4 1934713408
    %v1244 = vunpack.c.0.s8 %v1243
    %v1245 = vlaneseq
    %v1246 = vshrl.u32 %v1245, 7
    %v1247 = vsub.s32 %v1244, %v1246
    %v1248 = vrot.slane %v1240, %v1247
    %v1250 = vunpack.c.l.s4 1934713408
    %v1251 = vunpack.c.0.s8 %v1250
    %v1252 = vlaneseq
    %v1253 = vshrl.u32 %v1252, 7
    %v1254 = vsub.s32 %v1251, %v1253
    %v1255 = vrot.slane %v1241, %v1254
    %v1256 = vcombine.low %v1231, %v1239
    %v1257 = vcombine.high %v1231, %v1239
    %v1259 = vunpack.c.l.s4 1934713408
    %v1260 = vunpack.c.0.s8 %v1259
    %v1261 = vlaneseq
    %v1262 = vshrl.u32 %v1261, 7
    %v1263 = vsub.s32 %v1260, %v1262
    %v1264 = vrot.slane %v1256, %v1263
    %v1266 = vunpack.c.l.s4 1934713408
    %v1267 = vunpack.c.0.s8 %v1266
    %v1268 = vlaneseq
    %v1269 = vshrl.u32 %v1268, 7
    %v1270 = vsub.s32 %v1267, %v1269
    %v1271 = vrot.slane %v1257, %v1270
    %v1272 = vcombine.low %v1248, %v1264
    %v1273 = vcombine.high %v1248, %v1264
    %v1274 = vcombine.low %v1255, %v1271
    %v1275 = vcombine.high %v1255, %v1271
    %v1276 = vcombine.low %v1044, %v1051
    %v1278 = vunpack.c.l.s4 1983009808
    %v1279 = vunpack.c.0.s8 %v1278
    %v1280 = vlaneseq
    %v1281 = vshrl.u32 %v1280, 7
    %v1282 = vsub.s32 %v1279, %v1281
    %v1283 = vrot.slane %v1276, %v1282
    %v1284 = vcombine.low %v1068, %v1069
    %v1286 = vunpack.c.l.s4 1983009808
    %v1287 = vunpack.c.0.s8 %v1286
    %v1288 = vlaneseq
    %v1289 = vshrl.u32 %v1288, 7
    %v1290 = vsub.s32 %v1287, %v1289
    %v1291 = vrot.slane %v1284, %v1290
    %v1292 = vcombine.low %v1060, %v1067
    %v1294 = vunpack.c.l.s4 1983009808
    %v1295 = vunpack.c.0.s8 %v1294
    %v1296 = vlaneseq
    %v1297 = vshrl.u32 %v1296, 7
    %v1298 = vsub.s32 %v1295, %v1297
    %v1299 = vrot.slane %v1292, %v1298
    %v1300 = vcombine.low %v1070, %v1071
    %v1302 = vunpack.c.l.s4 1983009808
    %v1303 = vunpack.c.0.s8 %v1302
    %v1304 = vlaneseq
    %v1305 = vshrl.u32 %v1304, 7
    %v1306 = vsub.s32 %v1303, %v1305
    %v1307 = vrot.slane %v1300, %v1306
    %v1308 = vcombine.low %v1283, %v1291
    %v1309 = vcombine.high %v1283, %v1291
    %v1311 = vunpack.c.l.s4 1934713408
    %v1312 = vunpack.c.0.s8 %v1311
    %v1313 = vlaneseq
    %v1314 = vshrl.u32 %v1313, 7
    %v1315 = vsub.s32 %v1312, %v1314
    %v1316 = vrot.slane %v1308, %v1315
    %v1318 = vunpack.c.l.s4 1934713408
    %v1319 = vunpack.c.0.s8 %v1318
    %v1320 = vlaneseq
    %v1321 = vshrl.u32 %v1320, 7
    %v1322 = vsub.s32 %v1319, %v1321
    %v1323 = vrot.slane %v1309, %v1322
    %v1324 = vcombine.low %v1299, %v1307
    %v1325 = vcombine.high %v1299, %v1307
    %v1327 = vunpack.c.l.s4 1934713408
    %v1328 = vunpack.c.0.s8 %v1327
    %v1329 = vlaneseq
    %v1330 = vshrl.u32 %v1329, 7
    %v1331 = vsub.s32 %v1328, %v1330
    %v1332 = vrot.slane %v1324, %v1331
    %v1334 = vunpack.c.l.s4 1934713408
    %v1335 = vunpack.c.0.s8 %v1334
    %v1336 = vlaneseq
    %v1337 = vshrl.u32 %v1336, 7
    %v1338 = vsub.s32 %v1335, %v1337
    %v1339 = vrot.slane %v1325, %v1338
    %v1340 = vcombine.low %v1316, %v1332
    %v1341 = vcombine.high %v1316, %v1332
    %v1342 = vcombine.low %v1323, %v1339
    %v1343 = vcombine.high %v1323, %v1339
    %v1344 = vcombine.low %v1112, %v1119
    %v1346 = vunpack.c.l.s4 1983009808
    %v1347 = vunpack.c.0.s8 %v1346
    %v1348 = vlaneseq
    %v1349 = vshrl.u32 %v1348, 7
    %v1350 = vsub.s32 %v1347, %v1349
    %v1351 = vrot.slane %v1344, %v1350
    %v1352 = vcombine.low %v1136, %v1137
    %v1354 = vunpack.c.l.s4 1983009808
    %v1355 = vunpack.c.0.s8 %v1354
    %v1356 = vlaneseq
    %v1357 = vshrl.u32 %v1356, 7
    %v1358 = vsub.s32 %v1355, %v1357
    %v1359 = vrot.slane %v1352, %v1358
    %v1360 = vcombine.low %v1128, %v1135
    %v1362 = vunpack.c.l.s4 1983009808
    %v1363 = vunpack.c.0.s8 %v1362
    %v1364 = vlaneseq
    %v1365 = vshrl.u32 %v1364, 7
    %v1366 = vsub.s32 %v1363, %v1365
    %v1367 = vrot.slane %v1360, %v1366
    %v1368 = vcombine.low %v1138, %v1139
    %v1370 = vunpack.c.l.s4 1983009808
    %v1371 = vunpack.c.0.s8 %v1370
    %v1372 = vlaneseq
    %v1373 = vshrl.u32 %v1372, 7
    %v1374 = vsub.s32 %v1371, %v1373
    %v1375 = vrot.slane %v1368, %v1374
    %v1376 = vcombine.low %v1351, %v1359
    %v1377 = vcombine.high %v1351, %v1359
    %v1379 = vunpack.c.l.s4 1934713408
    %v1380 = vunpack.c.0.s8 %v1379
    %v1381 = vlaneseq
    %v1382 = vshrl.u32 %v1381, 7
    %v1383 = vsub.s32 %v1380, %v1382
    %v1384 = vrot.slane %v1376, %v1383
    %v1386 = vunpack.c.l.s4 1934713408
    %v1387 = vunpack.c.0.s8 %v1386
    %v1388 = vlaneseq
    %v1389 = vshrl.u32 %v1388, 7
    %v1390 = vsub.s32 %v1387, %v1389
    %v1391 = vrot.slane %v1377, %v1390
    %v1392 = vcombine.low %v1367, %v1375
    %v1393 = vcombine.high %v1367, %v1375
    %v1395 = vunpack.c.l.s4 1934713408
    %v1396 = vunpack.c.0.s8 %v1395
    %v1397 = vlaneseq
    %v1398 = vshrl.u32 %v1397, 7
    %v1399 = vsub.s32 %v1396, %v1398
    %v1400 = vrot.slane %v1392, %v1399
    %v1402 = vunpack.c.l.s4 1934713408
    %v1403 = vunpack.c.0.s8 %v1402
    %v1404 = vlaneseq
    %v1405 = vshrl.u32 %v1404, 7
    %v1406 = vsub.s32 %v1403, %v1405
    %v1407 = vrot.slane %v1393, %v1406
    %v1408 = vcombine.low %v1384, %v1400
    %v1409 = vcombine.high %v1384, %v1400
    %v1410 = vcombine.low %v1391, %v1407
    %v1411 = vcombine.high %v1391, %v1407
    %1412 = vrot.lane.b32.xlu0 %v218, 64
    %v1413 = vpop.permute.xlu0 %1412
    %1414 = vrot.lane.b32.xlu0 %v223, 64
    %v1415 = vpop.permute.xlu0 %1414
    %1416 = vrot.lane.b32.xlu0 %v228, 64
    %v1417 = vpop.permute.xlu0 %1416
    %1418 = vrot.lane.b32.xlu0 %v233, 64
    %v1419 = vpop.permute.xlu0 %1418
    %1420 = vrot.lane.b32.xlu0 %v241, 64
    %v1421 = vpop.permute.xlu0 %1420
    %1422 = vrot.lane.b32.xlu0 %v243, 64
    %v1423 = vpop.permute.xlu0 %1422
    %1424 = vrot.lane.b32.xlu0 %v245, 64
    %v1425 = vpop.permute.xlu0 %1424
    %1426 = vrot.lane.b32.xlu0 %v247, 64
    %v1427 = vpop.permute.xlu0 %1426
    %1428 = vrot.lane.b32.xlu0 %v253, 64
    %v1429 = vpop.permute.xlu0 %1428
    %1430 = vrot.lane.b32.xlu0 %v255, 64
    %v1431 = vpop.permute.xlu0 %1430
    %1432 = vrot.lane.b32.xlu0 %v257, 64
    %v1433 = vpop.permute.xlu0 %1432
    %1434 = vrot.lane.b32.xlu0 %v259, 64
    %v1435 = vpop.permute.xlu0 %1434
    %1436 = vrot.lane.b32.xlu0 %v265, 64
    %v1437 = vpop.permute.xlu0 %1436
    %1438 = vrot.lane.b32.xlu0 %v267, 64
    %v1439 = vpop.permute.xlu0 %1438
    %1440 = vrot.lane.b32.xlu0 %v269, 64
    %v1441 = vpop.permute.xlu0 %1440
    %1442 = vrot.lane.b32.xlu0 %v271, 64
    %v1443 = vpop.permute.xlu0 %1442
    %v1460 = vcombine.low %v1413, %v1429
    %v1461 = vcombine.high %v1413, %v1429
    %v1463 = vunpack.c.l.s4 1983009808
    %v1464 = vunpack.c.0.s8 %v1463
    %v1465 = vlaneseq
    %v1466 = vshrl.u32 %v1465, 7
    %v1467 = vsub.s32 %v1464, %v1466
    %v1468 = vrot.slane %v1460, %v1467
    %v1470 = vunpack.c.l.s4 1983009808
    %v1471 = vunpack.c.0.s8 %v1470
    %v1472 = vlaneseq
    %v1473 = vshrl.u32 %v1472, 7
    %v1474 = vsub.s32 %v1471, %v1473
    %v1475 = vrot.slane %v1461, %v1474
    %v1476 = vcombine.low %v1421, %v1437
    %v1477 = vcombine.high %v1421, %v1437
    %v1479 = vunpack.c.l.s4 1983009808
    %v1480 = vunpack.c.0.s8 %v1479
    %v1481 = vlaneseq
    %v1482 = vshrl.u32 %v1481, 7
    %v1483 = vsub.s32 %v1480, %v1482
    %v1484 = vrot.slane %v1476, %v1483
    %v1486 = vunpack.c.l.s4 1983009808
    %v1487 = vunpack.c.0.s8 %v1486
    %v1488 = vlaneseq
    %v1489 = vshrl.u32 %v1488, 7
    %v1490 = vsub.s32 %v1487, %v1489
    %v1491 = vrot.slane %v1477, %v1490
    %v1492 = vcombine.low %v1468, %v1484
    %v1493 = vcombine.high %v1468, %v1484
    %v1495 = vunpack.c.l.s4 1934713408
    %v1496 = vunpack.c.0.s8 %v1495
    %v1497 = vlaneseq
    %v1498 = vshrl.u32 %v1497, 7
    %v1499 = vsub.s32 %v1496, %v1498
    %v1500 = vrot.slane %v1492, %v1499
    %v1502 = vunpack.c.l.s4 1934713408
    %v1503 = vunpack.c.0.s8 %v1502
    %v1504 = vlaneseq
    %v1505 = vshrl.u32 %v1504, 7
    %v1506 = vsub.s32 %v1503, %v1505
    %v1507 = vrot.slane %v1493, %v1506
    %v1508 = vcombine.low %v1475, %v1491
    %v1509 = vcombine.high %v1475, %v1491
    %v1511 = vunpack.c.l.s4 1934713408
    %v1512 = vunpack.c.0.s8 %v1511
    %v1513 = vlaneseq
    %v1514 = vshrl.u32 %v1513, 7
    %v1515 = vsub.s32 %v1512, %v1514
    %v1516 = vrot.slane %v1508, %v1515
    %v1518 = vunpack.c.l.s4 1934713408
    %v1519 = vunpack.c.0.s8 %v1518
    %v1520 = vlaneseq
    %v1521 = vshrl.u32 %v1520, 7
    %v1522 = vsub.s32 %v1519, %v1521
    %v1523 = vrot.slane %v1509, %v1522
    %v1524 = vcombine.high %v1500, 0.0
    %v1525 = vcombine.high %v1507, 0.0
    %v1526 = vcombine.high %v1516, 0.0
    %v1527 = vcombine.high %v1523, 0.0
    %v1528 = vcombine.low %v1415, %v1431
    %v1529 = vcombine.high %v1415, %v1431
    %v1531 = vunpack.c.l.s4 1983009808
    %v1532 = vunpack.c.0.s8 %v1531
    %v1533 = vlaneseq
    %v1534 = vshrl.u32 %v1533, 7
    %v1535 = vsub.s32 %v1532, %v1534
    %v1536 = vrot.slane %v1528, %v1535
    %v1538 = vunpack.c.l.s4 1983009808
    %v1539 = vunpack.c.0.s8 %v1538
    %v1540 = vlaneseq
    %v1541 = vshrl.u32 %v1540, 7
    %v1542 = vsub.s32 %v1539, %v1541
    %v1543 = vrot.slane %v1529, %v1542
    %v1544 = vcombine.low %v1423, %v1439
    %v1545 = vcombine.high %v1423, %v1439
    %v1547 = vunpack.c.l.s4 1983009808
    %v1548 = vunpack.c.0.s8 %v1547
    %v1549 = vlaneseq
    %v1550 = vshrl.u32 %v1549, 7
    %v1551 = vsub.s32 %v1548, %v1550
    %v1552 = vrot.slane %v1544, %v1551
    %v1554 = vunpack.c.l.s4 1983009808
    %v1555 = vunpack.c.0.s8 %v1554
    %v1556 = vlaneseq
    %v1557 = vshrl.u32 %v1556, 7
    %v1558 = vsub.s32 %v1555, %v1557
    %v1559 = vrot.slane %v1545, %v1558
    %v1560 = vcombine.low %v1536, %v1552
    %v1561 = vcombine.high %v1536, %v1552
    %v1563 = vunpack.c.l.s4 1934713408
    %v1564 = vunpack.c.0.s8 %v1563
    %v1565 = vlaneseq
    %v1566 = vshrl.u32 %v1565, 7
    %v1567 = vsub.s32 %v1564, %v1566
    %v1568 = vrot.slane %v1560, %v1567
    %v1570 = vunpack.c.l.s4 1934713408
    %v1571 = vunpack.c.0.s8 %v1570
    %v1572 = vlaneseq
    %v1573 = vshrl.u32 %v1572, 7
    %v1574 = vsub.s32 %v1571, %v1573
    %v1575 = vrot.slane %v1561, %v1574
    %v1576 = vcombine.low %v1543, %v1559
    %v1577 = vcombine.high %v1543, %v1559
    %v1579 = vunpack.c.l.s4 1934713408
    %v1580 = vunpack.c.0.s8 %v1579
    %v1581 = vlaneseq
    %v1582 = vshrl.u32 %v1581, 7
    %v1583 = vsub.s32 %v1580, %v1582
    %v1584 = vrot.slane %v1576, %v1583
    %v1586 = vunpack.c.l.s4 1934713408
    %v1587 = vunpack.c.0.s8 %v1586
    %v1588 = vlaneseq
    %v1589 = vshrl.u32 %v1588, 7
    %v1590 = vsub.s32 %v1587, %v1589
    %v1591 = vrot.slane %v1577, %v1590
    %v1592 = vcombine.high %v1568, 0.0
    %v1593 = vcombine.high %v1575, 0.0
    %v1594 = vcombine.high %v1584, 0.0
    %v1595 = vcombine.high %v1591, 0.0
    %v1596 = vcombine.low %v1417, %v1433
    %v1597 = vcombine.high %v1417, %v1433
    %v1599 = vunpack.c.l.s4 1983009808
    %v1600 = vunpack.c.0.s8 %v1599
    %v1601 = vlaneseq
    %v1602 = vshrl.u32 %v1601, 7
    %v1603 = vsub.s32 %v1600, %v1602
    %v1604 = vrot.slane %v1596, %v1603
    %v1606 = vunpack.c.l.s4 1983009808
    %v1607 = vunpack.c.0.s8 %v1606
    %v1608 = vlaneseq
    %v1609 = vshrl.u32 %v1608, 7
    %v1610 = vsub.s32 %v1607, %v1609
    %v1611 = vrot.slane %v1597, %v1610
    %v1612 = vcombine.low %v1425, %v1441
    %v1613 = vcombine.high %v1425, %v1441
    %v1615 = vunpack.c.l.s4 1983009808
    %v1616 = vunpack.c.0.s8 %v1615
    %v1617 = vlaneseq
    %v1618 = vshrl.u32 %v1617, 7
    %v1619 = vsub.s32 %v1616, %v1618
    %v1620 = vrot.slane %v1612, %v1619
    %v1622 = vunpack.c.l.s4 1983009808
    %v1623 = vunpack.c.0.s8 %v1622
    %v1624 = vlaneseq
    %v1625 = vshrl.u32 %v1624, 7
    %v1626 = vsub.s32 %v1623, %v1625
    %v1627 = vrot.slane %v1613, %v1626
    %v1628 = vcombine.low %v1604, %v1620
    %v1629 = vcombine.high %v1604, %v1620
    %v1631 = vunpack.c.l.s4 1934713408
    %v1632 = vunpack.c.0.s8 %v1631
    %v1633 = vlaneseq
    %v1634 = vshrl.u32 %v1633, 7
    %v1635 = vsub.s32 %v1632, %v1634
    %v1636 = vrot.slane %v1628, %v1635
    %v1638 = vunpack.c.l.s4 1934713408
    %v1639 = vunpack.c.0.s8 %v1638
    %v1640 = vlaneseq
    %v1641 = vshrl.u32 %v1640, 7
    %v1642 = vsub.s32 %v1639, %v1641
    %v1643 = vrot.slane %v1629, %v1642
    %v1644 = vcombine.low %v1611, %v1627
    %v1645 = vcombine.high %v1611, %v1627
    %v1647 = vunpack.c.l.s4 1934713408
    %v1648 = vunpack.c.0.s8 %v1647
    %v1649 = vlaneseq
    %v1650 = vshrl.u32 %v1649, 7
    %v1651 = vsub.s32 %v1648, %v1650
    %v1652 = vrot.slane %v1644, %v1651
    %v1654 = vunpack.c.l.s4 1934713408
    %v1655 = vunpack.c.0.s8 %v1654
    %v1656 = vlaneseq
    %v1657 = vshrl.u32 %v1656, 7
    %v1658 = vsub.s32 %v1655, %v1657
    %v1659 = vrot.slane %v1645, %v1658
    %v1660 = vcombine.high %v1636, 0.0
    %v1661 = vcombine.high %v1643, 0.0
    %v1662 = vcombine.high %v1652, 0.0
    %v1663 = vcombine.high %v1659, 0.0
    %v1664 = vcombine.low %v1419, %v1435
    %v1665 = vcombine.high %v1419, %v1435
    %v1667 = vunpack.c.l.s4 1983009808
    %v1668 = vunpack.c.0.s8 %v1667
    %v1669 = vlaneseq
    %v1670 = vshrl.u32 %v1669, 7
    %v1671 = vsub.s32 %v1668, %v1670
    %v1672 = vrot.slane %v1664, %v1671
    %v1674 = vunpack.c.l.s4 1983009808
    %v1675 = vunpack.c.0.s8 %v1674
    %v1676 = vlaneseq
    %v1677 = vshrl.u32 %v1676, 7
    %v1678 = vsub.s32 %v1675, %v1677
    %v1679 = vrot.slane %v1665, %v1678
    %v1680 = vcombine.low %v1427, %v1443
    %v1681 = vcombine.high %v1427, %v1443
    %v1683 = vunpack.c.l.s4 1983009808
    %v1684 = vunpack.c.0.s8 %v1683
    %v1685 = vlaneseq
    %v1686 = vshrl.u32 %v1685, 7
    %v1687 = vsub.s32 %v1684, %v1686
    %v1688 = vrot.slane %v1680, %v1687
    %v1690 = vunpack.c.l.s4 1983009808
    %v1691 = vunpack.c.0.s8 %v1690
    %v1692 = vlaneseq
    %v1693 = vshrl.u32 %v1692, 7
    %v1694 = vsub.s32 %v1691, %v1693
    %v1695 = vrot.slane %v1681, %v1694
    %v1696 = vcombine.low %v1672, %v1688
    %v1697 = vcombine.high %v1672, %v1688
    %v1699 = vunpack.c.l.s4 1934713408
    %v1700 = vunpack.c.0.s8 %v1699
    %v1701 = vlaneseq
    %v1702 = vshrl.u32 %v1701, 7
    %v1703 = vsub.s32 %v1700, %v1702
    %v1704 = vrot.slane %v1696, %v1703
    %v1706 = vunpack.c.l.s4 1934713408
    %v1707 = vunpack.c.0.s8 %v1706
    %v1708 = vlaneseq
    %v1709 = vshrl.u32 %v1708, 7
    %v1710 = vsub.s32 %v1707, %v1709
    %v1711 = vrot.slane %v1697, %v1710
    %v1712 = vcombine.low %v1679, %v1695
    %v1713 = vcombine.high %v1679, %v1695
    %v1715 = vunpack.c.l.s4 1934713408
    %v1716 = vunpack.c.0.s8 %v1715
    %v1717 = vlaneseq
    %v1718 = vshrl.u32 %v1717, 7
    %v1719 = vsub.s32 %v1716, %v1718
    %v1720 = vrot.slane %v1712, %v1719
    %v1722 = vunpack.c.l.s4 1934713408
    %v1723 = vunpack.c.0.s8 %v1722
    %v1724 = vlaneseq
    %v1725 = vshrl.u32 %v1724, 7
    %v1726 = vsub.s32 %v1723, %v1725
    %v1727 = vrot.slane %v1713, %v1726
    %v1728 = vcombine.high %v1704, 0.0
    %v1729 = vcombine.high %v1711, 0.0
    %v1730 = vcombine.high %v1720, 0.0
    %v1731 = vcombine.high %v1727, 0.0
    %v1732 = vcombine.low %v1500, %v1507
    %v1734 = vunpack.c.l.s4 1983009808
    %v1735 = vunpack.c.0.s8 %v1734
    %v1736 = vlaneseq
    %v1737 = vshrl.u32 %v1736, 7
    %v1738 = vsub.s32 %v1735, %v1737
    %v1739 = vrot.slane %v1732, %v1738
    %v1740 = vcombine.low %v1524, %v1525
    %v1742 = vunpack.c.l.s4 1983009808
    %v1743 = vunpack.c.0.s8 %v1742
    %v1744 = vlaneseq
    %v1745 = vshrl.u32 %v1744, 7
    %v1746 = vsub.s32 %v1743, %v1745
    %v1747 = vrot.slane %v1740, %v1746
    %v1748 = vcombine.low %v1516, %v1523
    %v1750 = vunpack.c.l.s4 1983009808
    %v1751 = vunpack.c.0.s8 %v1750
    %v1752 = vlaneseq
    %v1753 = vshrl.u32 %v1752, 7
    %v1754 = vsub.s32 %v1751, %v1753
    %v1755 = vrot.slane %v1748, %v1754
    %v1756 = vcombine.low %v1526, %v1527
    %v1758 = vunpack.c.l.s4 1983009808
    %v1759 = vunpack.c.0.s8 %v1758
    %v1760 = vlaneseq
    %v1761 = vshrl.u32 %v1760, 7
    %v1762 = vsub.s32 %v1759, %v1761
    %v1763 = vrot.slane %v1756, %v1762
    %v1764 = vcombine.low %v1739, %v1747
    %v1765 = vcombine.high %v1739, %v1747
    %v1767 = vunpack.c.l.s4 1934713408
    %v1768 = vunpack.c.0.s8 %v1767
    %v1769 = vlaneseq
    %v1770 = vshrl.u32 %v1769, 7
    %v1771 = vsub.s32 %v1768, %v1770
    %v1772 = vrot.slane %v1764, %v1771
    %v1774 = vunpack.c.l.s4 1934713408
    %v1775 = vunpack.c.0.s8 %v1774
    %v1776 = vlaneseq
    %v1777 = vshrl.u32 %v1776, 7
    %v1778 = vsub.s32 %v1775, %v1777
    %v1779 = vrot.slane %v1765, %v1778
    %v1780 = vcombine.low %v1755, %v1763
    %v1781 = vcombine.high %v1755, %v1763
    %v1783 = vunpack.c.l.s4 1934713408
    %v1784 = vunpack.c.0.s8 %v1783
    %v1785 = vlaneseq
    %v1786 = vshrl.u32 %v1785, 7
    %v1787 = vsub.s32 %v1784, %v1786
    %v1788 = vrot.slane %v1780, %v1787
    %v1790 = vunpack.c.l.s4 1934713408
    %v1791 = vunpack.c.0.s8 %v1790
    %v1792 = vlaneseq
    %v1793 = vshrl.u32 %v1792, 7
    %v1794 = vsub.s32 %v1791, %v1793
    %v1795 = vrot.slane %v1781, %v1794
    %v1796 = vcombine.low %v1772, %v1788
    %v1797 = vcombine.high %v1772, %v1788
    %v1798 = vcombine.low %v1779, %v1795
    %v1799 = vcombine.high %v1779, %v1795
    %v1800 = vcombine.low %v1568, %v1575
    %v1802 = vunpack.c.l.s4 1983009808
    %v1803 = vunpack.c.0.s8 %v1802
    %v1804 = vlaneseq
    %v1805 = vshrl.u32 %v1804, 7
    %v1806 = vsub.s32 %v1803, %v1805
    %v1807 = vrot.slane %v1800, %v1806
    %v1808 = vcombine.low %v1592, %v1593
    %v1810 = vunpack.c.l.s4 1983009808
    %v1811 = vunpack.c.0.s8 %v1810
    %v1812 = vlaneseq
    %v1813 = vshrl.u32 %v1812, 7
    %v1814 = vsub.s32 %v1811, %v1813
    %v1815 = vrot.slane %v1808, %v1814
    %v1816 = vcombine.low %v1584, %v1591
    %v1818 = vunpack.c.l.s4 1983009808
    %v1819 = vunpack.c.0.s8 %v1818
    %v1820 = vlaneseq
    %v1821 = vshrl.u32 %v1820, 7
    %v1822 = vsub.s32 %v1819, %v1821
    %v1823 = vrot.slane %v1816, %v1822
    %v1824 = vcombine.low %v1594, %v1595
    %v1826 = vunpack.c.l.s4 1983009808
    %v1827 = vunpack.c.0.s8 %v1826
    %v1828 = vlaneseq
    %v1829 = vshrl.u32 %v1828, 7
    %v1830 = vsub.s32 %v1827, %v1829
    %v1831 = vrot.slane %v1824, %v1830
    %v1832 = vcombine.low %v1807, %v1815
    %v1833 = vcombine.high %v1807, %v1815
    %v1835 = vunpack.c.l.s4 1934713408
    %v1836 = vunpack.c.0.s8 %v1835
    %v1837 = vlaneseq
    %v1838 = vshrl.u32 %v1837, 7
    %v1839 = vsub.s32 %v1836, %v1838
    %v1840 = vrot.slane %v1832, %v1839
    %v1842 = vunpack.c.l.s4 1934713408
    %v1843 = vunpack.c.0.s8 %v1842
    %v1844 = vlaneseq
    %v1845 = vshrl.u32 %v1844, 7
    %v1846 = vsub.s32 %v1843, %v1845
    %v1847 = vrot.slane %v1833, %v1846
    %v1848 = vcombine.low %v1823, %v1831
    %v1849 = vcombine.high %v1823, %v1831
    %v1851 = vunpack.c.l.s4 1934713408
    %v1852 = vunpack.c.0.s8 %v1851
    %v1853 = vlaneseq
    %v1854 = vshrl.u32 %v1853, 7
    %v1855 = vsub.s32 %v1852, %v1854
    %v1856 = vrot.slane %v1848, %v1855
    %v1858 = vunpack.c.l.s4 1934713408
    %v1859 = vunpack.c.0.s8 %v1858
    %v1860 = vlaneseq
    %v1861 = vshrl.u32 %v1860, 7
    %v1862 = vsub.s32 %v1859, %v1861
    %v1863 = vrot.slane %v1849, %v1862
    %v1864 = vcombine.low %v1840, %v1856
    %v1865 = vcombine.high %v1840, %v1856
    %v1866 = vcombine.low %v1847, %v1863
    %v1867 = vcombine.high %v1847, %v1863
    %v1868 = vcombine.low %v1636, %v1643
    %v1870 = vunpack.c.l.s4 1983009808
    %v1871 = vunpack.c.0.s8 %v1870
    %v1872 = vlaneseq
    %v1873 = vshrl.u32 %v1872, 7
    %v1874 = vsub.s32 %v1871, %v1873
    %v1875 = vrot.slane %v1868, %v1874
    %v1876 = vcombine.low %v1660, %v1661
    %v1878 = vunpack.c.l.s4 1983009808
    %v1879 = vunpack.c.0.s8 %v1878
    %v1880 = vlaneseq
    %v1881 = vshrl.u32 %v1880, 7
    %v1882 = vsub.s32 %v1879, %v1881
    %v1883 = vrot.slane %v1876, %v1882
    %v1884 = vcombine.low %v1652, %v1659
    %v1886 = vunpack.c.l.s4 1983009808
    %v1887 = vunpack.c.0.s8 %v1886
    %v1888 = vlaneseq
    %v1889 = vshrl.u32 %v1888, 7
    %v1890 = vsub.s32 %v1887, %v1889
    %v1891 = vrot.slane %v1884, %v1890
    %v1892 = vcombine.low %v1662, %v1663
    %v1894 = vunpack.c.l.s4 1983009808
    %v1895 = vunpack.c.0.s8 %v1894
    %v1896 = vlaneseq
    %v1897 = vshrl.u32 %v1896, 7
    %v1898 = vsub.s32 %v1895, %v1897
    %v1899 = vrot.slane %v1892, %v1898
    %v1900 = vcombine.low %v1875, %v1883
    %v1901 = vcombine.high %v1875, %v1883
    %v1903 = vunpack.c.l.s4 1934713408
    %v1904 = vunpack.c.0.s8 %v1903
    %v1905 = vlaneseq
    %v1906 = vshrl.u32 %v1905, 7
    %v1907 = vsub.s32 %v1904, %v1906
    %v1908 = vrot.slane %v1900, %v1907
    %v1910 = vunpack.c.l.s4 1934713408
    %v1911 = vunpack.c.0.s8 %v1910
    %v1912 = vlaneseq
    %v1913 = vshrl.u32 %v1912, 7
    %v1914 = vsub.s32 %v1911, %v1913
    %v1915 = vrot.slane %v1901, %v1914
    %v1916 = vcombine.low %v1891, %v1899
    %v1917 = vcombine.high %v1891, %v1899
    %v1919 = vunpack.c.l.s4 1934713408
    %v1920 = vunpack.c.0.s8 %v1919
    %v1921 = vlaneseq
    %v1922 = vshrl.u32 %v1921, 7
    %v1923 = vsub.s32 %v1920, %v1922
    %v1924 = vrot.slane %v1916, %v1923
    %v1926 = vunpack.c.l.s4 1934713408
    %v1927 = vunpack.c.0.s8 %v1926
    %v1928 = vlaneseq
    %v1929 = vshrl.u32 %v1928, 7
    %v1930 = vsub.s32 %v1927, %v1929
    %v1931 = vrot.slane %v1917, %v1930
    %v1932 = vcombine.low %v1908, %v1924
    %v1933 = vcombine.high %v1908, %v1924
    %v1934 = vcombine.low %v1915, %v1931
    %v1935 = vcombine.high %v1915, %v1931
    %v1936 = vcombine.low %v1704, %v1711
    %v1938 = vunpack.c.l.s4 1983009808
    %v1939 = vunpack.c.0.s8 %v1938
    %v1940 = vlaneseq
    %v1941 = vshrl.u32 %v1940, 7
    %v1942 = vsub.s32 %v1939, %v1941
    %v1943 = vrot.slane %v1936, %v1942
    %v1944 = vcombine.low %v1728, %v1729
    %v1946 = vunpack.c.l.s4 1983009808
    %v1947 = vunpack.c.0.s8 %v1946
    %v1948 = vlaneseq
    %v1949 = vshrl.u32 %v1948, 7
    %v1950 = vsub.s32 %v1947, %v1949
    %v1951 = vrot.slane %v1944, %v1950
    %v1952 = vcombine.low %v1720, %v1727
    %v1954 = vunpack.c.l.s4 1983009808
    %v1955 = vunpack.c.0.s8 %v1954
    %v1956 = vlaneseq
    %v1957 = vshrl.u32 %v1956, 7
    %v1958 = vsub.s32 %v1955, %v1957
    %v1959 = vrot.slane %v1952, %v1958
    %v1960 = vcombine.low %v1730, %v1731
    %v1962 = vunpack.c.l.s4 1983009808
    %v1963 = vunpack.c.0.s8 %v1962
    %v1964 = vlaneseq
    %v1965 = vshrl.u32 %v1964, 7
    %v1966 = vsub.s32 %v1963, %v1965
    %v1967 = vrot.slane %v1960, %v1966
    %v1968 = vcombine.low %v1943, %v1951
    %v1969 = vcombine.high %v1943, %v1951
    %v1971 = vunpack.c.l.s4 1934713408
    %v1972 = vunpack.c.0.s8 %v1971
    %v1973 = vlaneseq
    %v1974 = vshrl.u32 %v1973, 7
    %v1975 = vsub.s32 %v1972, %v1974
    %v1976 = vrot.slane %v1968, %v1975
    %v1978 = vunpack.c.l.s4 1934713408
    %v1979 = vunpack.c.0.s8 %v1978
    %v1980 = vlaneseq
    %v1981 = vshrl.u32 %v1980, 7
    %v1982 = vsub.s32 %v1979, %v1981
    %v1983 = vrot.slane %v1969, %v1982
    %v1984 = vcombine.low %v1959, %v1967
    %v1985 = vcombine.high %v1959, %v1967
    %v1987 = vunpack.c.l.s4 1934713408
    %v1988 = vunpack.c.0.s8 %v1987
    %v1989 = vlaneseq
    %v1990 = vshrl.u32 %v1989, 7
    %v1991 = vsub.s32 %v1988, %v1990
    %v1992 = vrot.slane %v1984, %v1991
    %v1994 = vunpack.c.l.s4 1934713408
    %v1995 = vunpack.c.0.s8 %v1994
    %v1996 = vlaneseq
    %v1997 = vshrl.u32 %v1996, 7
    %v1998 = vsub.s32 %v1995, %v1997
    %v1999 = vrot.slane %v1985, %v1998
    %v2000 = vcombine.low %v1976, %v1992
    %v2001 = vcombine.high %v1976, %v1992
    %v2002 = vcombine.low %v1983, %v1999
    %v2003 = vcombine.high %v1983, %v1999
    %vm2004 = vcmask 64512
    %v2006 = vsel %vm2004, %v612, 0
    %v2009 = vsel %vm2004, %v1204, 0
    %2011 = vmatprep.subr.mxu0 0.0
    %2012 = vmatpush1.xpose.msra.mxu0 %v2009
    %2013 = vmatprep.subr.mxu0 0.0
    %2014 = vmatpush1.xpose.msra.mxu0 0.0
    %2015 = vmatprep.subr.mxu0 0.0
    %2016 = vmatpush1.xpose.msra.mxu0 0.0
    %2017 = vmatprep.subr.mxu0 0.0
    %2018 = vmatpush1.xpose.msra.mxu0 0.0
    %2019 = vmatprep.subr.mxu0 0.0
    %2020 = vmatpush1.xpose.msra.mxu0 0.0
    %2021 = vmatprep.subr.mxu0 0.0
    %2022 = vmatpush1.xpose.msra.mxu0 0.0
    %2023 = vmatprep.subr.mxu0 0.0
    %2024 = vmatpush1.xpose.msra.mxu0 0.0
    %2025 = vmatprep.subr.mxu0 0.0
    %2026 = vmatpush1.xpose.msra.mxu0 0.0
    %2027 = vmatprep.subr.mxu0 0.0
    %2028 = vmatpush1.xpose.msra.mxu0 0.0
    %2029 = vmatprep.subr.mxu0 0.0
    %2030 = vmatpush1.xpose.msra.mxu0 0.0
    %2031 = vmatprep.subr.mxu0 0.0
    %2032 = vmatpush1.xpose.msra.mxu0 0.0
    %2033 = vmatprep.subr.mxu0 0.0
    %2034 = vmatpush1.xpose.msra.mxu0 0.0
    %2035 = vmatprep.subr.mxu0 0.0
    %2036 = vmatpush1.xpose.msra.mxu0 0.0
    %2037 = vmatprep.subr.mxu0 0.0
    %2038 = vmatpush1.xpose.msra.mxu0 0.0
    %2039 = vmatprep.subr.mxu0 0.0
    %2040 = vmatpush1.xpose.msra.mxu0 0.0
    %2041 = vmatprep.subr.mxu0 0.0
    %2042 = vmatpush1.xpose.msra.mxu0 0.0
    %2043 = vmatprep.subr.mxu0 0.0
    %2044 = vmatpush1.xpose.msra.mxu0 0.0
    %2045 = vmatprep.subr.mxu0 0.0
    %2046 = vmatpush1.xpose.msra.mxu0 0.0
    %2047 = vmatprep.subr.mxu0 0.0
    %2048 = vmatpush1.xpose.msra.mxu0 0.0
    %2049 = vmatprep.subr.mxu0 0.0
    %2050 = vmatpush1.xpose.msra.mxu0 0.0
    %2051 = vmatprep.subr.mxu0 0.0
    %2052 = vmatpush1.xpose.msra.mxu0 0.0
    %2053 = vmatprep.subr.mxu0 0.0
    %2054 = vmatpush1.xpose.msra.mxu0 0.0
    %2055 = vmatprep.subr.mxu0 0.0
    %2056 = vmatpush1.xpose.msra.mxu0 0.0
    %2057 = vmatprep.subr.mxu0 0.0
    %2058 = vmatpush1.xpose.msra.mxu0 0.0
    %2059 = vmatprep.subr.mxu0 0.0
    %2060 = vmatpush1.xpose.msra.mxu0 0.0
    %2061 = vmatprep.subr.mxu0 0.0
    %2062 = vmatpush1.xpose.msra.mxu0 0.0
    %2063 = vmatprep.subr.mxu0 0.0
    %2064 = vmatpush1.xpose.msra.mxu0 0.0
    %2065 = vmatprep.subr.mxu0 0.0
    %2066 = vmatpush1.xpose.msra.mxu0 0.0
    %2067 = vmatprep.subr.mxu0 0.0
    %2068 = vmatpush1.xpose.msra.mxu0 0.0
    %2069 = vmatprep.subr.mxu0 0.0
    %2070 = vmatpush1.xpose.msra.mxu0 0.0
    %2071 = vmatprep.subr.mxu0 0.0
    %2072 = vmatpush1.xpose.msra.mxu0 0.0
    %2073 = vmatprep.subr.mxu0 0.0
    %2074 = vmatpush1.xpose.msra.mxu0 0.0
    %2075 = vmatprep.mubr.f32.mxu0 0.0
    %2076 = vmatmul.mubr.f32.gmra.mrb[0].mxu0 %v2006
    %v2077 = vpop.f32.mrb[0].mxu0
    %v2078 = vadd.f32 0.0, %v2077
    %v2079 = vpop.f32.mrb[0].mxu0
    %2080 = vdwg.mxu0
    %v2082 = vsel %vm2004, %v613, 0
    %v2085 = vsel %vm2004, %v1205, 0
    %2087 = vmatprep.subr.mxu0 0.0
    %2088 = vmatpush1.xpose.msra.mxu0 %v2085
    %2089 = vmatprep.subr.mxu0 0.0
    %2090 = vmatpush1.xpose.msra.mxu0 0.0
    %2091 = vmatprep.subr.mxu0 0.0
    %2092 = vmatpush1.xpose.msra.mxu0 0.0
    %2093 = vmatprep.subr.mxu0 0.0
    %2094 = vmatpush1.xpose.msra.mxu0 0.0
    %2095 = vmatprep.subr.mxu0 0.0
    %2096 = vmatpush1.xpose.msra.mxu0 0.0
    %2097 = vmatprep.subr.mxu0 0.0
    %2098 = vmatpush1.xpose.msra.mxu0 0.0
    %2099 = vmatprep.subr.mxu0 0.0
    %2100 = vmatpush1.xpose.msra.mxu0 0.0
    %2101 = vmatprep.subr.mxu0 0.0
    %2102 = vmatpush1.xpose.msra.mxu0 0.0
    %2103 = vmatprep.subr.mxu0 0.0
    %2104 = vmatpush1.xpose.msra.mxu0 0.0
    %2105 = vmatprep.subr.mxu0 0.0
    %2106 = vmatpush1.xpose.msra.mxu0 0.0
    %2107 = vmatprep.subr.mxu0 0.0
    %2108 = vmatpush1.xpose.msra.mxu0 0.0
    %2109 = vmatprep.subr.mxu0 0.0
    %2110 = vmatpush1.xpose.msra.mxu0 0.0
    %2111 = vmatprep.subr.mxu0 0.0
    %2112 = vmatpush1.xpose.msra.mxu0 0.0
    %2113 = vmatprep.subr.mxu0 0.0
    %2114 = vmatpush1.xpose.msra.mxu0 0.0
    %2115 = vmatprep.subr.mxu0 0.0
    %2116 = vmatpush1.xpose.msra.mxu0 0.0
    %2117 = vmatprep.subr.mxu0 0.0
    %2118 = vmatpush1.xpose.msra.mxu0 0.0
    %2119 = vmatprep.subr.mxu0 0.0
    %2120 = vmatpush1.xpose.msra.mxu0 0.0
    %2121 = vmatprep.subr.mxu0 0.0
    %2122 = vmatpush1.xpose.msra.mxu0 0.0
    %2123 = vmatprep.subr.mxu0 0.0
    %2124 = vmatpush1.xpose.msra.mxu0 0.0
    %2125 = vmatprep.subr.mxu0 0.0
    %2126 = vmatpush1.xpose.msra.mxu0 0.0
    %2127 = vmatprep.subr.mxu0 0.0
    %2128 = vmatpush1.xpose.msra.mxu0 0.0
    %2129 = vmatprep.subr.mxu0 0.0
    %2130 = vmatpush1.xpose.msra.mxu0 0.0
    %2131 = vmatprep.subr.mxu0 0.0
    %2132 = vmatpush1.xpose.msra.mxu0 0.0
    %2133 = vmatprep.subr.mxu0 0.0
    %2134 = vmatpush1.xpose.msra.mxu0 0.0
    %2135 = vmatprep.subr.mxu0 0.0
    %2136 = vmatpush1.xpose.msra.mxu0 0.0
    %2137 = vmatprep.subr.mxu0 0.0
    %2138 = vmatpush1.xpose.msra.mxu0 0.0
    %2139 = vmatprep.subr.mxu0 0.0
    %2140 = vmatpush1.xpose.msra.mxu0 0.0
    %2141 = vmatprep.subr.mxu0 0.0
    %2142 = vmatpush1.xpose.msra.mxu0 0.0
    %2143 = vmatprep.subr.mxu0 0.0
    %2144 = vmatpush1.xpose.msra.mxu0 0.0
    %2145 = vmatprep.subr.mxu0 0.0
    %2146 = vmatpush1.xpose.msra.mxu0 0.0
    %2147 = vmatprep.subr.mxu0 0.0
    %2148 = vmatpush1.xpose.msra.mxu0 0.0
    %2149 = vmatprep.subr.mxu0 0.0
    %2150 = vmatpush1.xpose.msra.mxu0 0.0
    %2151 = vmatprep.mubr.f32.mxu0 0.0
    %2152 = vmatmul.mubr.f32.gmra.mrb[0].mxu0 %v2082
    %v2153 = vpop.f32.mrb[0].mxu0
    %v2154 = vadd.f32 0.0, %v2153
    %v2155 = vpop.f32.mrb[0].mxu0
    %2156 = vdwg.mxu0
    %v2158 = vsel %vm2004, %v614, 0
    %v2161 = vsel %vm2004, %v1206, 0
    %2163 = vmatprep.subr.mxu0 0.0
    %2164 = vmatpush1.xpose.msra.mxu0 %v2161
    %2165 = vmatprep.subr.mxu0 0.0
    %2166 = vmatpush1.xpose.msra.mxu0 0.0
    %2167 = vmatprep.subr.mxu0 0.0
    %2168 = vmatpush1.xpose.msra.mxu0 0.0
    %2169 = vmatprep.subr.mxu0 0.0
    %2170 = vmatpush1.xpose.msra.mxu0 0.0
    %2171 = vmatprep.subr.mxu0 0.0
    %2172 = vmatpush1.xpose.msra.mxu0 0.0
    %2173 = vmatprep.subr.mxu0 0.0
    %2174 = vmatpush1.xpose.msra.mxu0 0.0
    %2175 = vmatprep.subr.mxu0 0.0
    %2176 = vmatpush1.xpose.msra.mxu0 0.0
    %2177 = vmatprep.subr.mxu0 0.0
    %2178 = vmatpush1.xpose.msra.mxu0 0.0
    %2179 = vmatprep.subr.mxu0 0.0
    %2180 = vmatpush1.xpose.msra.mxu0 0.0
    %2181 = vmatprep.subr.mxu0 0.0
    %2182 = vmatpush1.xpose.msra.mxu0 0.0
    %2183 = vmatprep.subr.mxu0 0.0
    %2184 = vmatpush1.xpose.msra.mxu0 0.0
    %2185 = vmatprep.subr.mxu0 0.0
    %2186 = vmatpush1.xpose.msra.mxu0 0.0
    %2187 = vmatprep.subr.mxu0 0.0
    %2188 = vmatpush1.xpose.msra.mxu0 0.0
    %2189 = vmatprep.subr.mxu0 0.0
    %2190 = vmatpush1.xpose.msra.mxu0 0.0
    %2191 = vmatprep.subr.mxu0 0.0
    %2192 = vmatpush1.xpose.msra.mxu0 0.0
    %2193 = vmatprep.subr.mxu0 0.0
    %2194 = vmatpush1.xpose.msra.mxu0 0.0
    %2195 = vmatprep.subr.mxu0 0.0
    %2196 = vmatpush1.xpose.msra.mxu0 0.0
    %2197 = vmatprep.subr.mxu0 0.0
    %2198 = vmatpush1.xpose.msra.mxu0 0.0
    %2199 = vmatprep.subr.mxu0 0.0
    %2200 = vmatpush1.xpose.msra.mxu0 0.0
    %2201 = vmatprep.subr.mxu0 0.0
    %2202 = vmatpush1.xpose.msra.mxu0 0.0
    %2203 = vmatprep.subr.mxu0 0.0
    %2204 = vmatpush1.xpose.msra.mxu0 0.0
    %2205 = vmatprep.subr.mxu0 0.0
    %2206 = vmatpush1.xpose.msra.mxu0 0.0
    %2207 = vmatprep.subr.mxu0 0.0
    %2208 = vmatpush1.xpose.msra.mxu0 0.0
    %2209 = vmatprep.subr.mxu0 0.0
    %2210 = vmatpush1.xpose.msra.mxu0 0.0
    %2211 = vmatprep.subr.mxu0 0.0
    %2212 = vmatpush1.xpose.msra.mxu0 0.0
    %2213 = vmatprep.subr.mxu0 0.0
    %2214 = vmatpush1.xpose.msra.mxu0 0.0
    %2215 = vmatprep.subr.mxu0 0.0
    %2216 = vmatpush1.xpose.msra.mxu0 0.0
    %2217 = vmatprep.subr.mxu0 0.0
    %2218 = vmatpush1.xpose.msra.mxu0 0.0
    %2219 = vmatprep.subr.mxu0 0.0
    %2220 = vmatpush1.xpose.msra.mxu0 0.0
    %2221 = vmatprep.subr.mxu0 0.0
    %2222 = vmatpush1.xpose.msra.mxu0 0.0
    %2223 = vmatprep.subr.mxu0 0.0
    %2224 = vmatpush1.xpose.msra.mxu0 0.0
    %2225 = vmatprep.subr.mxu0 0.0
    %2226 = vmatpush1.xpose.msra.mxu0 0.0
    %2227 = vmatprep.mubr.f32.mxu0 0.0
    %2228 = vmatmul.mubr.f32.gmra.mrb[0].mxu0 %v2158
    %v2229 = vpop.f32.mrb[0].mxu0
    %v2230 = vadd.f32 0.0, %v2229
    %v2231 = vpop.f32.mrb[0].mxu0
    %2232 = vdwg.mxu0
    %v2234 = vsel %vm2004, %v615, 0
    %v2237 = vsel %vm2004, %v1207, 0
    %2239 = vmatprep.subr.mxu0 0.0
    %2240 = vmatpush1.xpose.msra.mxu0 %v2237
    %2241 = vmatprep.subr.mxu0 0.0
    %2242 = vmatpush1.xpose.msra.mxu0 0.0
    %2243 = vmatprep.subr.mxu0 0.0
    %2244 = vmatpush1.xpose.msra.mxu0 0.0
    %2245 = vmatprep.subr.mxu0 0.0
    %2246 = vmatpush1.xpose.msra.mxu0 0.0
    %2247 = vmatprep.subr.mxu0 0.0
    %2248 = vmatpush1.xpose.msra.mxu0 0.0
    %2249 = vmatprep.subr.mxu0 0.0
    %2250 = vmatpush1.xpose.msra.mxu0 0.0
    %2251 = vmatprep.subr.mxu0 0.0
    %2252 = vmatpush1.xpose.msra.mxu0 0.0
    %2253 = vmatprep.subr.mxu0 0.0
    %2254 = vmatpush1.xpose.msra.mxu0 0.0
    %2255 = vmatprep.subr.mxu0 0.0
    %2256 = vmatpush1.xpose.msra.mxu0 0.0
    %2257 = vmatprep.subr.mxu0 0.0
    %2258 = vmatpush1.xpose.msra.mxu0 0.0
    %2259 = vmatprep.subr.mxu0 0.0
    %2260 = vmatpush1.xpose.msra.mxu0 0.0
    %2261 = vmatprep.subr.mxu0 0.0
    %2262 = vmatpush1.xpose.msra.mxu0 0.0
    %2263 = vmatprep.subr.mxu0 0.0
    %2264 = vmatpush1.xpose.msra.mxu0 0.0
    %2265 = vmatprep.subr.mxu0 0.0
    %2266 = vmatpush1.xpose.msra.mxu0 0.0
    %2267 = vmatprep.subr.mxu0 0.0
    %2268 = vmatpush1.xpose.msra.mxu0 0.0
    %2269 = vmatprep.subr.mxu0 0.0
    %2270 = vmatpush1.xpose.msra.mxu0 0.0
    %2271 = vmatprep.subr.mxu0 0.0
    %2272 = vmatpush1.xpose.msra.mxu0 0.0
    %2273 = vmatprep.subr.mxu0 0.0
    %2274 = vmatpush1.xpose.msra.mxu0 0.0
    %2275 = vmatprep.subr.mxu0 0.0
    %2276 = vmatpush1.xpose.msra.mxu0 0.0
    %2277 = vmatprep.subr.mxu0 0.0
    %2278 = vmatpush1.xpose.msra.mxu0 0.0
    %2279 = vmatprep.subr.mxu0 0.0
    %2280 = vmatpush1.xpose.msra.mxu0 0.0
    %2281 = vmatprep.subr.mxu0 0.0
    %2282 = vmatpush1.xpose.msra.mxu0 0.0
    %2283 = vmatprep.subr.mxu0 0.0
    %2284 = vmatpush1.xpose.msra.mxu0 0.0
    %2285 = vmatprep.subr.mxu0 0.0
    %2286 = vmatpush1.xpose.msra.mxu0 0.0
    %2287 = vmatprep.subr.mxu0 0.0
    %2288 = vmatpush1.xpose.msra.mxu0 0.0
    %2289 = vmatprep.subr.mxu0 0.0
    %2290 = vmatpush1.xpose.msra.mxu0 0.0
    %2291 = vmatprep.subr.mxu0 0.0
    %2292 = vmatpush1.xpose.msra.mxu0 0.0
    %2293 = vmatprep.subr.mxu0 0.0
    %2294 = vmatpush1.xpose.msra.mxu0 0.0
    %2295 = vmatprep.subr.mxu0 0.0
    %2296 = vmatpush1.xpose.msra.mxu0 0.0
    %2297 = vmatprep.subr.mxu0 0.0
    %2298 = vmatpush1.xpose.msra.mxu0 0.0
    %2299 = vmatprep.subr.mxu0 0.0
    %2300 = vmatpush1.xpose.msra.mxu0 0.0
    %2301 = vmatprep.subr.mxu0 0.0
    %2302 = vmatpush1.xpose.msra.mxu0 0.0
    %2303 = vmatprep.mubr.f32.mxu0 0.0
    %2304 = vmatmul.mubr.f32.gmra.mrb[0].mxu0 %v2234
    %v2305 = vpop.f32.mrb[0].mxu0
    %v2306 = vadd.f32 0.0, %v2305
    %v2307 = vpop.f32.mrb[0].mxu0
    %2308 = vdwg.mxu0
    %v2310 = vsel %vm2004, %v680, 0
    %v2313 = vsel %vm2004, %v1272, 0
    %2315 = vmatprep.subr.mxu0 0.0
    %2316 = vmatpush1.xpose.msra.mxu0 %v2313
    %2317 = vmatprep.subr.mxu0 0.0
    %2318 = vmatpush1.xpose.msra.mxu0 0.0
    %2319 = vmatprep.subr.mxu0 0.0
    %2320 = vmatpush1.xpose.msra.mxu0 0.0
    %2321 = vmatprep.subr.mxu0 0.0
    %2322 = vmatpush1.xpose.msra.mxu0 0.0
    %2323 = vmatprep.subr.mxu0 0.0
    %2324 = vmatpush1.xpose.msra.mxu0 0.0
    %2325 = vmatprep.subr.mxu0 0.0
    %2326 = vmatpush1.xpose.msra.mxu0 0.0
    %2327 = vmatprep.subr.mxu0 0.0
    %2328 = vmatpush1.xpose.msra.mxu0 0.0
    %2329 = vmatprep.subr.mxu0 0.0
    %2330 = vmatpush1.xpose.msra.mxu0 0.0
    %2331 = vmatprep.subr.mxu0 0.0
    %2332 = vmatpush1.xpose.msra.mxu0 0.0
    %2333 = vmatprep.subr.mxu0 0.0
    %2334 = vmatpush1.xpose.msra.mxu0 0.0
    %2335 = vmatprep.subr.mxu0 0.0
    %2336 = vmatpush1.xpose.msra.mxu0 0.0
    %2337 = vmatprep.subr.mxu0 0.0
    %2338 = vmatpush1.xpose.msra.mxu0 0.0
    %2339 = vmatprep.subr.mxu0 0.0
    %2340 = vmatpush1.xpose.msra.mxu0 0.0
    %2341 = vmatprep.subr.mxu0 0.0
    %2342 = vmatpush1.xpose.msra.mxu0 0.0
    %2343 = vmatprep.subr.mxu0 0.0
    %2344 = vmatpush1.xpose.msra.mxu0 0.0
    %2345 = vmatprep.subr.mxu0 0.0
    %2346 = vmatpush1.xpose.msra.mxu0 0.0
    %2347 = vmatprep.subr.mxu0 0.0
    %2348 = vmatpush1.xpose.msra.mxu0 0.0
    %2349 = vmatprep.subr.mxu0 0.0
    %2350 = vmatpush1.xpose.msra.mxu0 0.0
    %2351 = vmatprep.subr.mxu0 0.0
    %2352 = vmatpush1.xpose.msra.mxu0 0.0
    %2353 = vmatprep.subr.mxu0 0.0
    %2354 = vmatpush1.xpose.msra.mxu0 0.0
    %2355 = vmatprep.subr.mxu0 0.0
    %2356 = vmatpush1.xpose.msra.mxu0 0.0
    %2357 = vmatprep.subr.mxu0 0.0
    %2358 = vmatpush1.xpose.msra.mxu0 0.0
    %2359 = vmatprep.subr.mxu0 0.0
    %2360 = vmatpush1.xpose.msra.mxu0 0.0
    %2361 = vmatprep.subr.mxu0 0.0
    %2362 = vmatpush1.xpose.msra.mxu0 0.0
    %2363 = vmatprep.subr.mxu0 0.0
    %2364 = vmatpush1.xpose.msra.mxu0 0.0
    %2365 = vmatprep.subr.mxu0 0.0
    %2366 = vmatpush1.xpose.msra.mxu0 0.0
    %2367 = vmatprep.subr.mxu0 0.0
    %2368 = vmatpush1.xpose.msra.mxu0 0.0
    %2369 = vmatprep.subr.mxu0 0.0
    %2370 = vmatpush1.xpose.msra.mxu0 0.0
    %2371 = vmatprep.subr.mxu0 0.0
    %2372 = vmatpush1.xpose.msra.mxu0 0.0
    %2373 = vmatprep.subr.mxu0 0.0
    %2374 = vmatpush1.xpose.msra.mxu0 0.0
    %2375 = vmatprep.subr.mxu0 0.0
    %2376 = vmatpush1.xpose.msra.mxu0 0.0
    %2377 = vmatprep.subr.mxu0 0.0
    %2378 = vmatpush1.xpose.msra.mxu0 0.0
    %2379 = vmatprep.mubr.f32.mxu0 0.0
    %2380 = vmatmul.mubr.f32.gmra.mrb[0].mxu0 %v2310
    %v2381 = vpop.f32.mrb[0].mxu0
    %v2382 = vadd.f32 0.0, %v2381
    %v2383 = vpop.f32.mrb[0].mxu0
    %2384 = vdwg.mxu0
    %v2386 = vsel %vm2004, %v681, 0
    %v2389 = vsel %vm2004, %v1273, 0
    %2391 = vmatprep.subr.mxu0 0.0
    %2392 = vmatpush1.xpose.msra.mxu0 %v2389
    %2393 = vmatprep.subr.mxu0 0.0
    %2394 = vmatpush1.xpose.msra.mxu0 0.0
    %2395 = vmatprep.subr.mxu0 0.0
    %2396 = vmatpush1.xpose.msra.mxu0 0.0
    %2397 = vmatprep.subr.mxu0 0.0
    %2398 = vmatpush1.xpose.msra.mxu0 0.0
    %2399 = vmatprep.subr.mxu0 0.0
    %2400 = vmatpush1.xpose.msra.mxu0 0.0
    %2401 = vmatprep.subr.mxu0 0.0
    %2402 = vmatpush1.xpose.msra.mxu0 0.0
    %2403 = vmatprep.subr.mxu0 0.0
    %2404 = vmatpush1.xpose.msra.mxu0 0.0
    %2405 = vmatprep.subr.mxu0 0.0
    %2406 = vmatpush1.xpose.msra.mxu0 0.0
    %2407 = vmatprep.subr.mxu0 0.0
    %2408 = vmatpush1.xpose.msra.mxu0 0.0
    %2409 = vmatprep.subr.mxu0 0.0
    %2410 = vmatpush1.xpose.msra.mxu0 0.0
    %2411 = vmatprep.subr.mxu0 0.0
    %2412 = vmatpush1.xpose.msra.mxu0 0.0
    %2413 = vmatprep.subr.mxu0 0.0
    %2414 = vmatpush1.xpose.msra.mxu0 0.0
    %2415 = vmatprep.subr.mxu0 0.0
    %2416 = vmatpush1.xpose.msra.mxu0 0.0
    %2417 = vmatprep.subr.mxu0 0.0
    %2418 = vmatpush1.xpose.msra.mxu0 0.0
    %2419 = vmatprep.subr.mxu0 0.0
    %2420 = vmatpush1.xpose.msra.mxu0 0.0
    %2421 = vmatprep.subr.mxu0 0.0
    %2422 = vmatpush1.xpose.msra.mxu0 0.0
    %2423 = vmatprep.subr.mxu0 0.0
    %2424 = vmatpush1.xpose.msra.mxu0 0.0
    %2425 = vmatprep.subr.mxu0 0.0
    %2426 = vmatpush1.xpose.msra.mxu0 0.0
    %2427 = vmatprep.subr.mxu0 0.0
    %2428 = vmatpush1.xpose.msra.mxu0 0.0
    %2429 = vmatprep.subr.mxu0 0.0
    %2430 = vmatpush1.xpose.msra.mxu0 0.0
    %2431 = vmatprep.subr.mxu0 0.0
    %2432 = vmatpush1.xpose.msra.mxu0 0.0
    %2433 = vmatprep.subr.mxu0 0.0
    %2434 = vmatpush1.xpose.msra.mxu0 0.0
    %2435 = vmatprep.subr.mxu0 0.0
    %2436 = vmatpush1.xpose.msra.mxu0 0.0
    %2437 = vmatprep.subr.mxu0 0.0
    %2438 = vmatpush1.xpose.msra.mxu0 0.0
    %2439 = vmatprep.subr.mxu0 0.0
    %2440 = vmatpush1.xpose.msra.mxu0 0.0
    %2441 = vmatprep.subr.mxu0 0.0
    %2442 = vmatpush1.xpose.msra.mxu0 0.0
    %2443 = vmatprep.subr.mxu0 0.0
    %2444 = vmatpush1.xpose.msra.mxu0 0.0
    %2445 = vmatprep.subr.mxu0 0.0
    %2446 = vmatpush1.xpose.msra.mxu0 0.0
    %2447 = vmatprep.subr.mxu0 0.0
    %2448 = vmatpush1.xpose.msra.mxu0 0.0
    %2449 = vmatprep.subr.mxu0 0.0
    %2450 = vmatpush1.xpose.msra.mxu0 0.0
    %2451 = vmatprep.subr.mxu0 0.0
    %2452 = vmatpush1.xpose.msra.mxu0 0.0
    %2453 = vmatprep.subr.mxu0 0.0
    %2454 = vmatpush1.xpose.msra.mxu0 0.0
    %2455 = vmatprep.mubr.f32.mxu0 0.0
    %2456 = vmatmul.mubr.f32.gmra.mrb[0].mxu0 %v2386
    %v2457 = vpop.f32.mrb[0].mxu0
    %v2458 = vadd.f32 0.0, %v2457
    %v2459 = vpop.f32.mrb[0].mxu0
    %2460 = vdwg.mxu0
    %v2462 = vsel %vm2004, %v682, 0
    %v2465 = vsel %vm2004, %v1274, 0
    %2467 = vmatprep.subr.mxu0 0.0
    %2468 = vmatpush1.xpose.msra.mxu0 %v2465
    %2469 = vmatprep.subr.mxu0 0.0
    %2470 = vmatpush1.xpose.msra.mxu0 0.0
    %2471 = vmatprep.subr.mxu0 0.0
    %2472 = vmatpush1.xpose.msra.mxu0 0.0
    %2473 = vmatprep.subr.mxu0 0.0
    %2474 = vmatpush1.xpose.msra.mxu0 0.0
    %2475 = vmatprep.subr.mxu0 0.0
    %2476 = vmatpush1.xpose.msra.mxu0 0.0
    %2477 = vmatprep.subr.mxu0 0.0
    %2478 = vmatpush1.xpose.msra.mxu0 0.0
    %2479 = vmatprep.subr.mxu0 0.0
    %2480 = vmatpush1.xpose.msra.mxu0 0.0
    %2481 = vmatprep.subr.mxu0 0.0
    %2482 = vmatpush1.xpose.msra.mxu0 0.0
    %2483 = vmatprep.subr.mxu0 0.0
    %2484 = vmatpush1.xpose.msra.mxu0 0.0
    %2485 = vmatprep.subr.mxu0 0.0
    %2486 = vmatpush1.xpose.msra.mxu0 0.0
    %2487 = vmatprep.subr.mxu0 0.0
    %2488 = vmatpush1.xpose.msra.mxu0 0.0
    %2489 = vmatprep.subr.mxu0 0.0
    %2490 = vmatpush1.xpose.msra.mxu0 0.0
    %2491 = vmatprep.subr.mxu0 0.0
    %2492 = vmatpush1.xpose.msra.mxu0 0.0
    %2493 = vmatprep.subr.mxu0 0.0
    %2494 = vmatpush1.xpose.msra.mxu0 0.0
    %2495 = vmatprep.subr.mxu0 0.0
    %2496 = vmatpush1.xpose.msra.mxu0 0.0
    %2497 = vmatprep.subr.mxu0 0.0
    %2498 = vmatpush1.xpose.msra.mxu0 0.0
    %2499 = vmatprep.subr.mxu0 0.0
    %2500 = vmatpush1.xpose.msra.mxu0 0.0
    %2501 = vmatprep.subr.mxu0 0.0
    %2502 = vmatpush1.xpose.msra.mxu0 0.0
    %2503 = vmatprep.subr.mxu0 0.0
    %2504 = vmatpush1.xpose.msra.mxu0 0.0
    %2505 = vmatprep.subr.mxu0 0.0
    %2506 = vmatpush1.xpose.msra.mxu0 0.0
    %2507 = vmatprep.subr.mxu0 0.0
    %2508 = vmatpush1.xpose.msra.mxu0 0.0
    %2509 = vmatprep.subr.mxu0 0.0
    %2510 = vmatpush1.xpose.msra.mxu0 0.0
    %2511 = vmatprep.subr.mxu0 0.0
    %2512 = vmatpush1.xpose.msra.mxu0 0.0
    %2513 = vmatprep.subr.mxu0 0.0
    %2514 = vmatpush1.xpose.msra.mxu0 0.0
    %2515 = vmatprep.subr.mxu0 0.0
    %2516 = vmatpush1.xpose.msra.mxu0 0.0
    %2517 = vmatprep.subr.mxu0 0.0
    %2518 = vmatpush1.xpose.msra.mxu0 0.0
    %2519 = vmatprep.subr.mxu0 0.0
    %2520 = vmatpush1.xpose.msra.mxu0 0.0
    %2521 = vmatprep.subr.mxu0 0.0
    %2522 = vmatpush1.xpose.msra.mxu0 0.0
    %2523 = vmatprep.subr.mxu0 0.0
    %2524 = vmatpush1.xpose.msra.mxu0 0.0
    %2525 = vmatprep.subr.mxu0 0.0
    %2526 = vmatpush1.xpose.msra.mxu0 0.0
    %2527 = vmatprep.subr.mxu0 0.0
    %2528 = vmatpush1.xpose.msra.mxu0 0.0
    %2529 = vmatprep.subr.mxu0 0.0
    %2530 = vmatpush1.xpose.msra.mxu0 0.0
    %2531 = vmatprep.mubr.f32.mxu0 0.0
    %2532 = vmatmul.mubr.f32.gmra.mrb[0].mxu0 %v2462
    %v2533 = vpop.f32.mrb[0].mxu0
    %v2534 = vadd.f32 0.0, %v2533
    %v2535 = vpop.f32.mrb[0].mxu0
    %2536 = vdwg.mxu0
    %v2538 = vsel %vm2004, %v683, 0
    %v2541 = vsel %vm2004, %v1275, 0
    %2543 = vmatprep.subr.mxu0 0.0
    %2544 = vmatpush1.xpose.msra.mxu0 %v2541
    %2545 = vmatprep.subr.mxu0 0.0
    %2546 = vmatpush1.xpose.msra.mxu0 0.0
    %2547 = vmatprep.subr.mxu0 0.0
    %2548 = vmatpush1.xpose.msra.mxu0 0.0
    %2549 = vmatprep.subr.mxu0 0.0
    %2550 = vmatpush1.xpose.msra.mxu0 0.0
    %2551 = vmatprep.subr.mxu0 0.0
    %2552 = vmatpush1.xpose.msra.mxu0 0.0
    %2553 = vmatprep.subr.mxu0 0.0
    %2554 = vmatpush1.xpose.msra.mxu0 0.0
    %2555 = vmatprep.subr.mxu0 0.0
    %2556 = vmatpush1.xpose.msra.mxu0 0.0
    %2557 = vmatprep.subr.mxu0 0.0
    %2558 = vmatpush1.xpose.msra.mxu0 0.0
    %2559 = vmatprep.subr.mxu0 0.0
    %2560 = vmatpush1.xpose.msra.mxu0 0.0
    %2561 = vmatprep.subr.mxu0 0.0
    %2562 = vmatpush1.xpose.msra.mxu0 0.0
    %2563 = vmatprep.subr.mxu0 0.0
    %2564 = vmatpush1.xpose.msra.mxu0 0.0
    %2565 = vmatprep.subr.mxu0 0.0
    %2566 = vmatpush1.xpose.msra.mxu0 0.0
    %2567 = vmatprep.subr.mxu0 0.0
    %2568 = vmatpush1.xpose.msra.mxu0 0.0
    %2569 = vmatprep.subr.mxu0 0.0
    %2570 = vmatpush1.xpose.msra.mxu0 0.0
    %2571 = vmatprep.subr.mxu0 0.0
    %2572 = vmatpush1.xpose.msra.mxu0 0.0
    %2573 = vmatprep.subr.mxu0 0.0
    %2574 = vmatpush1.xpose.msra.mxu0 0.0
    %2575 = vmatprep.subr.mxu0 0.0
    %2576 = vmatpush1.xpose.msra.mxu0 0.0
    %2577 = vmatprep.subr.mxu0 0.0
    %2578 = vmatpush1.xpose.msra.mxu0 0.0
    %2579 = vmatprep.subr.mxu0 0.0
    %2580 = vmatpush1.xpose.msra.mxu0 0.0
    %2581 = vmatprep.subr.mxu0 0.0
    %2582 = vmatpush1.xpose.msra.mxu0 0.0
    %2583 = vmatprep.subr.mxu0 0.0
    %2584 = vmatpush1.xpose.msra.mxu0 0.0
    %2585 = vmatprep.subr.mxu0 0.0
    %2586 = vmatpush1.xpose.msra.mxu0 0.0
    %2587 = vmatprep.subr.mxu0 0.0
    %2588 = vmatpush1.xpose.msra.mxu0 0.0
    %2589 = vmatprep.subr.mxu0 0.0
    %2590 = vmatpush1.xpose.msra.mxu0 0.0
    %2591 = vmatprep.subr.mxu0 0.0
    %2592 = vmatpush1.xpose.msra.mxu0 0.0
    %2593 = vmatprep.subr.mxu0 0.0
    %2594 = vmatpush1.xpose.msra.mxu0 0.0
    %2595 = vmatprep.subr.mxu0 0.0
    %2596 = vmatpush1.xpose.msra.mxu0 0.0
    %2597 = vmatprep.subr.mxu0 0.0
    %2598 = vmatpush1.xpose.msra.mxu0 0.0
    %2599 = vmatprep.subr.mxu0 0.0
    %2600 = vmatpush1.xpose.msra.mxu0 0.0
    %2601 = vmatprep.subr.mxu0 0.0
    %2602 = vmatpush1.xpose.msra.mxu0 0.0
    %2603 = vmatprep.subr.mxu0 0.0
    %2604 = vmatpush1.xpose.msra.mxu0 0.0
    %2605 = vmatprep.subr.mxu0 0.0
    %2606 = vmatpush1.xpose.msra.mxu0 0.0
    %2607 = vmatprep.mubr.f32.mxu0 0.0
    %2608 = vmatmul.mubr.f32.gmra.mrb[0].mxu0 %v2538
    %v2609 = vpop.f32.mrb[0].mxu0
    %v2610 = vadd.f32 0.0, %v2609
    %v2611 = vpop.f32.mrb[0].mxu0
    %2612 = vdwg.mxu0
    %v2614 = vsel %vm2004, %v748, 0
    %v2617 = vsel %vm2004, %v1340, 0
    %2619 = vmatprep.subr.mxu0 0.0
    %2620 = vmatpush1.xpose.msra.mxu0 %v2617
    %2621 = vmatprep.subr.mxu0 0.0
    %2622 = vmatpush1.xpose.msra.mxu0 0.0
    %2623 = vmatprep.subr.mxu0 0.0
    %2624 = vmatpush1.xpose.msra.mxu0 0.0
    %2625 = vmatprep.subr.mxu0 0.0
    %2626 = vmatpush1.xpose.msra.mxu0 0.0
    %2627 = vmatprep.subr.mxu0 0.0
    %2628 = vmatpush1.xpose.msra.mxu0 0.0
    %2629 = vmatprep.subr.mxu0 0.0
    %2630 = vmatpush1.xpose.msra.mxu0 0.0
    %2631 = vmatprep.subr.mxu0 0.0
    %2632 = vmatpush1.xpose.msra.mxu0 0.0
    %2633 = vmatprep.subr.mxu0 0.0
    %2634 = vmatpush1.xpose.msra.mxu0 0.0
    %2635 = vmatprep.subr.mxu0 0.0
    %2636 = vmatpush1.xpose.msra.mxu0 0.0
    %2637 = vmatprep.subr.mxu0 0.0
    %2638 = vmatpush1.xpose.msra.mxu0 0.0
    %2639 = vmatprep.subr.mxu0 0.0
    %2640 = vmatpush1.xpose.msra.mxu0 0.0
    %2641 = vmatprep.subr.mxu0 0.0
    %2642 = vmatpush1.xpose.msra.mxu0 0.0
    %2643 = vmatprep.subr.mxu0 0.0
    %2644 = vmatpush1.xpose.msra.mxu0 0.0
    %2645 = vmatprep.subr.mxu0 0.0
    %2646 = vmatpush1.xpose.msra.mxu0 0.0
    %2647 = vmatprep.subr.mxu0 0.0
    %2648 = vmatpush1.xpose.msra.mxu0 0.0
    %2649 = vmatprep.subr.mxu0 0.0
    %2650 = vmatpush1.xpose.msra.mxu0 0.0
    %2651 = vmatprep.subr.mxu0 0.0
    %2652 = vmatpush1.xpose.msra.mxu0 0.0
    %2653 = vmatprep.subr.mxu0 0.0
    %2654 = vmatpush1.xpose.msra.mxu0 0.0
    %2655 = vmatprep.subr.mxu0 0.0
    %2656 = vmatpush1.xpose.msra.mxu0 0.0
    %2657 = vmatprep.subr.mxu0 0.0
    %2658 = vmatpush1.xpose.msra.mxu0 0.0
    %2659 = vmatprep.subr.mxu0 0.0
    %2660 = vmatpush1.xpose.msra.mxu0 0.0
    %2661 = vmatprep.subr.mxu0 0.0
    %2662 = vmatpush1.xpose.msra.mxu0 0.0
    %2663 = vmatprep.subr.mxu0 0.0
    %2664 = vmatpush1.xpose.msra.mxu0 0.0
    %2665 = vmatprep.subr.mxu0 0.0
    %2666 = vmatpush1.xpose.msra.mxu0 0.0
    %2667 = vmatprep.subr.mxu0 0.0
    %2668 = vmatpush1.xpose.msra.mxu0 0.0
    %2669 = vmatprep.subr.mxu0 0.0
    %2670 = vmatpush1.xpose.msra.mxu0 0.0
    %2671 = vmatprep.subr.mxu0 0.0
    %2672 = vmatpush1.xpose.msra.mxu0 0.0
    %2673 = vmatprep.subr.mxu0 0.0
    %2674 = vmatpush1.xpose.msra.mxu0 0.0
    %2675 = vmatprep.subr.mxu0 0.0
    %2676 = vmatpush1.xpose.msra.mxu0 0.0
    %2677 = vmatprep.subr.mxu0 0.0
    %2678 = vmatpush1.xpose.msra.mxu0 0.0
    %2679 = vmatprep.subr.mxu0 0.0
    %2680 = vmatpush1.xpose.msra.mxu0 0.0
    %2681 = vmatprep.subr.mxu0 0.0
    %2682 = vmatpush1.xpose.msra.mxu0 0.0
    %2683 = vmatprep.mubr.f32.mxu0 0.0
    %2684 = vmatmul.mubr.f32.gmra.mrb[0].mxu0 %v2614
    %v2685 = vpop.f32.mrb[0].mxu0
    %v2686 = vadd.f32 0.0, %v2685
    %v2687 = vpop.f32.mrb[0].mxu0
    %2688 = vdwg.mxu0
    %v2690 = vsel %vm2004, %v749, 0
    %v2693 = vsel %vm2004, %v1341, 0
    %2695 = vmatprep.subr.mxu0 0.0
    %2696 = vmatpush1.xpose.msra.mxu0 %v2693
    %2697 = vmatprep.subr.mxu0 0.0
    %2698 = vmatpush1.xpose.msra.mxu0 0.0
    %2699 = vmatprep.subr.mxu0 0.0
    %2700 = vmatpush1.xpose.msra.mxu0 0.0
    %2701 = vmatprep.subr.mxu0 0.0
    %2702 = vmatpush1.xpose.msra.mxu0 0.0
    %2703 = vmatprep.subr.mxu0 0.0
    %2704 = vmatpush1.xpose.msra.mxu0 0.0
    %2705 = vmatprep.subr.mxu0 0.0
    %2706 = vmatpush1.xpose.msra.mxu0 0.0
    %2707 = vmatprep.subr.mxu0 0.0
    %2708 = vmatpush1.xpose.msra.mxu0 0.0
    %2709 = vmatprep.subr.mxu0 0.0
    %2710 = vmatpush1.xpose.msra.mxu0 0.0
    %2711 = vmatprep.subr.mxu0 0.0
    %2712 = vmatpush1.xpose.msra.mxu0 0.0
    %2713 = vmatprep.subr.mxu0 0.0
    %2714 = vmatpush1.xpose.msra.mxu0 0.0
    %2715 = vmatprep.subr.mxu0 0.0
    %2716 = vmatpush1.xpose.msra.mxu0 0.0
    %2717 = vmatprep.subr.mxu0 0.0
    %2718 = vmatpush1.xpose.msra.mxu0 0.0
    %2719 = vmatprep.subr.mxu0 0.0
    %2720 = vmatpush1.xpose.msra.mxu0 0.0
    %2721 = vmatprep.subr.mxu0 0.0
    %2722 = vmatpush1.xpose.msra.mxu0 0.0
    %2723 = vmatprep.subr.mxu0 0.0
    %2724 = vmatpush1.xpose.msra.mxu0 0.0
    %2725 = vmatprep.subr.mxu0 0.0
    %2726 = vmatpush1.xpose.msra.mxu0 0.0
    %2727 = vmatprep.subr.mxu0 0.0
    %2728 = vmatpush1.xpose.msra.mxu0 0.0
    %2729 = vmatprep.subr.mxu0 0.0
    %2730 = vmatpush1.xpose.msra.mxu0 0.0
    %2731 = vmatprep.subr.mxu0 0.0
    %2732 = vmatpush1.xpose.msra.mxu0 0.0
    %2733 = vmatprep.subr.mxu0 0.0
    %2734 = vmatpush1.xpose.msra.mxu0 0.0
    %2735 = vmatprep.subr.mxu0 0.0
    %2736 = vmatpush1.xpose.msra.mxu0 0.0
    %2737 = vmatprep.subr.mxu0 0.0
    %2738 = vmatpush1.xpose.msra.mxu0 0.0
    %2739 = vmatprep.subr.mxu0 0.0
    %2740 = vmatpush1.xpose.msra.mxu0 0.0
    %2741 = vmatprep.subr.mxu0 0.0
    %2742 = vmatpush1.xpose.msra.mxu0 0.0
    %2743 = vmatprep.subr.mxu0 0.0
    %2744 = vmatpush1.xpose.msra.mxu0 0.0
    %2745 = vmatprep.subr.mxu0 0.0
    %2746 = vmatpush1.xpose.msra.mxu0 0.0
    %2747 = vmatprep.subr.mxu0 0.0
    %2748 = vmatpush1.xpose.msra.mxu0 0.0
    %2749 = vmatprep.subr.mxu0 0.0
    %2750 = vmatpush1.xpose.msra.mxu0 0.0
    %2751 = vmatprep.subr.mxu0 0.0
    %2752 = vmatpush1.xpose.msra.mxu0 0.0
    %2753 = vmatprep.subr.mxu0 0.0
    %2754 = vmatpush1.xpose.msra.mxu0 0.0
    %2755 = vmatprep.subr.mxu0 0.0
    %2756 = vmatpush1.xpose.msra.mxu0 0.0
    %2757 = vmatprep.subr.mxu0 0.0
    %2758 = vmatpush1.xpose.msra.mxu0 0.0
    %2759 = vmatprep.mubr.f32.mxu0 0.0
    %2760 = vmatmul.mubr.f32.gmra.mrb[0].mxu0 %v2690
    %v2761 = vpop.f32.mrb[0].mxu0
    %v2762 = vadd.f32 0.0, %v2761
    %v2763 = vpop.f32.mrb[0].mxu0
    %2764 = vdwg.mxu0
    %v2766 = vsel %vm2004, %v750, 0
    %v2769 = vsel %vm2004, %v1342, 0
    %2771 = vmatprep.subr.mxu0 0.0
    %2772 = vmatpush1.xpose.msra.mxu0 %v2769
    %2773 = vmatprep.subr.mxu0 0.0
    %2774 = vmatpush1.xpose.msra.mxu0 0.0
    %2775 = vmatprep.subr.mxu0 0.0
    %2776 = vmatpush1.xpose.msra.mxu0 0.0
    %2777 = vmatprep.subr.mxu0 0.0
    %2778 = vmatpush1.xpose.msra.mxu0 0.0
    %2779 = vmatprep.subr.mxu0 0.0
    %2780 = vmatpush1.xpose.msra.mxu0 0.0
    %2781 = vmatprep.subr.mxu0 0.0
    %2782 = vmatpush1.xpose.msra.mxu0 0.0
    %2783 = vmatprep.subr.mxu0 0.0
    %2784 = vmatpush1.xpose.msra.mxu0 0.0
    %2785 = vmatprep.subr.mxu0 0.0
    %2786 = vmatpush1.xpose.msra.mxu0 0.0
    %2787 = vmatprep.subr.mxu0 0.0
    %2788 = vmatpush1.xpose.msra.mxu0 0.0
    %2789 = vmatprep.subr.mxu0 0.0
    %2790 = vmatpush1.xpose.msra.mxu0 0.0
    %2791 = vmatprep.subr.mxu0 0.0
    %2792 = vmatpush1.xpose.msra.mxu0 0.0
    %2793 = vmatprep.subr.mxu0 0.0
    %2794 = vmatpush1.xpose.msra.mxu0 0.0
    %2795 = vmatprep.subr.mxu0 0.0
    %2796 = vmatpush1.xpose.msra.mxu0 0.0
    %2797 = vmatprep.subr.mxu0 0.0
    %2798 = vmatpush1.xpose.msra.mxu0 0.0
    %2799 = vmatprep.subr.mxu0 0.0
    %2800 = vmatpush1.xpose.msra.mxu0 0.0
    %2801 = vmatprep.subr.mxu0 0.0
    %2802 = vmatpush1.xpose.msra.mxu0 0.0
    %2803 = vmatprep.subr.mxu0 0.0
    %2804 = vmatpush1.xpose.msra.mxu0 0.0
    %2805 = vmatprep.subr.mxu0 0.0
    %2806 = vmatpush1.xpose.msra.mxu0 0.0
    %2807 = vmatprep.subr.mxu0 0.0
    %2808 = vmatpush1.xpose.msra.mxu0 0.0
    %2809 = vmatprep.subr.mxu0 0.0
    %2810 = vmatpush1.xpose.msra.mxu0 0.0
    %2811 = vmatprep.subr.mxu0 0.0
    %2812 = vmatpush1.xpose.msra.mxu0 0.0
    %2813 = vmatprep.subr.mxu0 0.0
    %2814 = vmatpush1.xpose.msra.mxu0 0.0
    %2815 = vmatprep.subr.mxu0 0.0
    %2816 = vmatpush1.xpose.msra.mxu0 0.0
    %2817 = vmatprep.subr.mxu0 0.0
    %2818 = vmatpush1.xpose.msra.mxu0 0.0
    %2819 = vmatprep.subr.mxu0 0.0
    %2820 = vmatpush1.xpose.msra.mxu0 0.0
    %2821 = vmatprep.subr.mxu0 0.0
    %2822 = vmatpush1.xpose.msra.mxu0 0.0
    %2823 = vmatprep.subr.mxu0 0.0
    %2824 = vmatpush1.xpose.msra.mxu0 0.0
    %2825 = vmatprep.subr.mxu0 0.0
    %2826 = vmatpush1.xpose.msra.mxu0 0.0
    %2827 = vmatprep.subr.mxu0 0.0
    %2828 = vmatpush1.xpose.msra.mxu0 0.0
    %2829 = vmatprep.subr.mxu0 0.0
    %2830 = vmatpush1.xpose.msra.mxu0 0.0
    %2831 = vmatprep.subr.mxu0 0.0
    %2832 = vmatpush1.xpose.msra.mxu0 0.0
    %2833 = vmatprep.subr.mxu0 0.0
    %2834 = vmatpush1.xpose.msra.mxu0 0.0
    %2835 = vmatprep.mubr.f32.mxu0 0.0
    %2836 = vmatmul.mubr.f32.gmra.mrb[0].mxu0 %v2766
    %v2837 = vpop.f32.mrb[0].mxu0
    %v2838 = vadd.f32 0.0, %v2837
    %v2839 = vpop.f32.mrb[0].mxu0
    %2840 = vdwg.mxu0
    %v2842 = vsel %vm2004, %v751, 0
    %v2845 = vsel %vm2004, %v1343, 0
    %2847 = vmatprep.subr.mxu0 0.0
    %2848 = vmatpush1.xpose.msra.mxu0 %v2845
    %2849 = vmatprep.subr.mxu0 0.0
    %2850 = vmatpush1.xpose.msra.mxu0 0.0
    %2851 = vmatprep.subr.mxu0 0.0
    %2852 = vmatpush1.xpose.msra.mxu0 0.0
    %2853 = vmatprep.subr.mxu0 0.0
    %2854 = vmatpush1.xpose.msra.mxu0 0.0
    %2855 = vmatprep.subr.mxu0 0.0
    %2856 = vmatpush1.xpose.msra.mxu0 0.0
    %2857 = vmatprep.subr.mxu0 0.0
    %2858 = vmatpush1.xpose.msra.mxu0 0.0
    %2859 = vmatprep.subr.mxu0 0.0
    %2860 = vmatpush1.xpose.msra.mxu0 0.0
    %2861 = vmatprep.subr.mxu0 0.0
    %2862 = vmatpush1.xpose.msra.mxu0 0.0
    %2863 = vmatprep.subr.mxu0 0.0
    %2864 = vmatpush1.xpose.msra.mxu0 0.0
    %2865 = vmatprep.subr.mxu0 0.0
    %2866 = vmatpush1.xpose.msra.mxu0 0.0
    %2867 = vmatprep.subr.mxu0 0.0
    %2868 = vmatpush1.xpose.msra.mxu0 0.0
    %2869 = vmatprep.subr.mxu0 0.0
    %2870 = vmatpush1.xpose.msra.mxu0 0.0
    %2871 = vmatprep.subr.mxu0 0.0
    %2872 = vmatpush1.xpose.msra.mxu0 0.0
    %2873 = vmatprep.subr.mxu0 0.0
    %2874 = vmatpush1.xpose.msra.mxu0 0.0
    %2875 = vmatprep.subr.mxu0 0.0
    %2876 = vmatpush1.xpose.msra.mxu0 0.0
    %2877 = vmatprep.subr.mxu0 0.0
    %2878 = vmatpush1.xpose.msra.mxu0 0.0
    %2879 = vmatprep.subr.mxu0 0.0
    %2880 = vmatpush1.xpose.msra.mxu0 0.0
    %2881 = vmatprep.subr.mxu0 0.0
    %2882 = vmatpush1.xpose.msra.mxu0 0.0
    %2883 = vmatprep.subr.mxu0 0.0
    %2884 = vmatpush1.xpose.msra.mxu0 0.0
    %2885 = vmatprep.subr.mxu0 0.0
    %2886 = vmatpush1.xpose.msra.mxu0 0.0
    %2887 = vmatprep.subr.mxu0 0.0
    %2888 = vmatpush1.xpose.msra.mxu0 0.0
    %2889 = vmatprep.subr.mxu0 0.0
    %2890 = vmatpush1.xpose.msra.mxu0 0.0
    %2891 = vmatprep.subr.mxu0 0.0
    %2892 = vmatpush1.xpose.msra.mxu0 0.0
    %2893 = vmatprep.subr.mxu0 0.0
    %2894 = vmatpush1.xpose.msra.mxu0 0.0
    %2895 = vmatprep.subr.mxu0 0.0
    %2896 = vmatpush1.xpose.msra.mxu0 0.0
    %2897 = vmatprep.subr.mxu0 0.0
    %2898 = vmatpush1.xpose.msra.mxu0 0.0
    %2899 = vmatprep.subr.mxu0 0.0
    %2900 = vmatpush1.xpose.msra.mxu0 0.0
    %2901 = vmatprep.subr.mxu0 0.0
    %2902 = vmatpush1.xpose.msra.mxu0 0.0
    %2903 = vmatprep.subr.mxu0 0.0
    %2904 = vmatpush1.xpose.msra.mxu0 0.0
    %2905 = vmatprep.subr.mxu0 0.0
    %2906 = vmatpush1.xpose.msra.mxu0 0.0
    %2907 = vmatprep.subr.mxu0 0.0
    %2908 = vmatpush1.xpose.msra.mxu0 0.0
    %2909 = vmatprep.subr.mxu0 0.0
    %2910 = vmatpush1.xpose.msra.mxu0 0.0
    %2911 = vmatprep.mubr.f32.mxu0 0.0
    %2912 = vmatmul.mubr.f32.gmra.mrb[0].mxu0 %v2842
    %v2913 = vpop.f32.mrb[0].mxu0
    %v2914 = vadd.f32 0.0, %v2913
    %v2915 = vpop.f32.mrb[0].mxu0
    %2916 = vdwg.mxu0
    %v2918 = vsel %vm2004, %v816, 0
    %v2921 = vsel %vm2004, %v1408, 0
    %2923 = vmatprep.subr.mxu0 0.0
    %2924 = vmatpush1.xpose.msra.mxu0 %v2921
    %2925 = vmatprep.subr.mxu0 0.0
    %2926 = vmatpush1.xpose.msra.mxu0 0.0
    %2927 = vmatprep.subr.mxu0 0.0
    %2928 = vmatpush1.xpose.msra.mxu0 0.0
    %2929 = vmatprep.subr.mxu0 0.0
    %2930 = vmatpush1.xpose.msra.mxu0 0.0
    %2931 = vmatprep.subr.mxu0 0.0
    %2932 = vmatpush1.xpose.msra.mxu0 0.0
    %2933 = vmatprep.subr.mxu0 0.0
    %2934 = vmatpush1.xpose.msra.mxu0 0.0
    %2935 = vmatprep.subr.mxu0 0.0
    %2936 = vmatpush1.xpose.msra.mxu0 0.0
    %2937 = vmatprep.subr.mxu0 0.0
    %2938 = vmatpush1.xpose.msra.mxu0 0.0
    %2939 = vmatprep.subr.mxu0 0.0
    %2940 = vmatpush1.xpose.msra.mxu0 0.0
    %2941 = vmatprep.subr.mxu0 0.0
    %2942 = vmatpush1.xpose.msra.mxu0 0.0
    %2943 = vmatprep.subr.mxu0 0.0
    %2944 = vmatpush1.xpose.msra.mxu0 0.0
    %2945 = vmatprep.subr.mxu0 0.0
    %2946 = vmatpush1.xpose.msra.mxu0 0.0
    %2947 = vmatprep.subr.mxu0 0.0
    %2948 = vmatpush1.xpose.msra.mxu0 0.0
    %2949 = vmatprep.subr.mxu0 0.0
    %2950 = vmatpush1.xpose.msra.mxu0 0.0
    %2951 = vmatprep.subr.mxu0 0.0
    %2952 = vmatpush1.xpose.msra.mxu0 0.0
    %2953 = vmatprep.subr.mxu0 0.0
    %2954 = vmatpush1.xpose.msra.mxu0 0.0
    %2955 = vmatprep.subr.mxu0 0.0
    %2956 = vmatpush1.xpose.msra.mxu0 0.0
    %2957 = vmatprep.subr.mxu0 0.0
    %2958 = vmatpush1.xpose.msra.mxu0 0.0
    %2959 = vmatprep.subr.mxu0 0.0
    %2960 = vmatpush1.xpose.msra.mxu0 0.0
    %2961 = vmatprep.subr.mxu0 0.0
    %2962 = vmatpush1.xpose.msra.mxu0 0.0
    %2963 = vmatprep.subr.mxu0 0.0
    %2964 = vmatpush1.xpose.msra.mxu0 0.0
    %2965 = vmatprep.subr.mxu0 0.0
    %2966 = vmatpush1.xpose.msra.mxu0 0.0
    %2967 = vmatprep.subr.mxu0 0.0
    %2968 = vmatpush1.xpose.msra.mxu0 0.0
    %2969 = vmatprep.subr.mxu0 0.0
    %2970 = vmatpush1.xpose.msra.mxu0 0.0
    %2971 = vmatprep.subr.mxu0 0.0
    %2972 = vmatpush1.xpose.msra.mxu0 0.0
    %2973 = vmatprep.subr.mxu0 0.0
    %2974 = vmatpush1.xpose.msra.mxu0 0.0
    %2975 = vmatprep.subr.mxu0 0.0
    %2976 = vmatpush1.xpose.msra.mxu0 0.0
    %2977 = vmatprep.subr.mxu0 0.0
    %2978 = vmatpush1.xpose.msra.mxu0 0.0
    %2979 = vmatprep.subr.mxu0 0.0
    %2980 = vmatpush1.xpose.msra.mxu0 0.0
    %2981 = vmatprep.subr.mxu0 0.0
    %2982 = vmatpush1.xpose.msra.mxu0 0.0
    %2983 = vmatprep.subr.mxu0 0.0
    %2984 = vmatpush1.xpose.msra.mxu0 0.0
    %2985 = vmatprep.subr.mxu0 0.0
    %2986 = vmatpush1.xpose.msra.mxu0 0.0
    %2987 = vmatprep.mubr.f32.mxu0 0.0
    %2988 = vmatmul.mubr.f32.gmra.mrb[0].mxu0 %v2918
    %v2989 = vpop.f32.mrb[0].mxu0
    %v2990 = vadd.f32 0.0, %v2989
    %v2991 = vpop.f32.mrb[0].mxu0
    %2992 = vdwg.mxu0
    %v2994 = vsel %vm2004, %v817, 0
    %v2997 = vsel %vm2004, %v1409, 0
    %2999 = vmatprep.subr.mxu0 0.0
    %3000 = vmatpush1.xpose.msra.mxu0 %v2997
    %3001 = vmatprep.subr.mxu0 0.0
    %3002 = vmatpush1.xpose.msra.mxu0 0.0
    %3003 = vmatprep.subr.mxu0 0.0
    %3004 = vmatpush1.xpose.msra.mxu0 0.0
    %3005 = vmatprep.subr.mxu0 0.0
    %3006 = vmatpush1.xpose.msra.mxu0 0.0
    %3007 = vmatprep.subr.mxu0 0.0
    %3008 = vmatpush1.xpose.msra.mxu0 0.0
    %3009 = vmatprep.subr.mxu0 0.0
    %3010 = vmatpush1.xpose.msra.mxu0 0.0
    %3011 = vmatprep.subr.mxu0 0.0
    %3012 = vmatpush1.xpose.msra.mxu0 0.0
    %3013 = vmatprep.subr.mxu0 0.0
    %3014 = vmatpush1.xpose.msra.mxu0 0.0
    %3015 = vmatprep.subr.mxu0 0.0
    %3016 = vmatpush1.xpose.msra.mxu0 0.0
    %3017 = vmatprep.subr.mxu0 0.0
    %3018 = vmatpush1.xpose.msra.mxu0 0.0
    %3019 = vmatprep.subr.mxu0 0.0
    %3020 = vmatpush1.xpose.msra.mxu0 0.0
    %3021 = vmatprep.subr.mxu0 0.0
    %3022 = vmatpush1.xpose.msra.mxu0 0.0
    %3023 = vmatprep.subr.mxu0 0.0
    %3024 = vmatpush1.xpose.msra.mxu0 0.0
    %3025 = vmatprep.subr.mxu0 0.0
    %3026 = vmatpush1.xpose.msra.mxu0 0.0
    %3027 = vmatprep.subr.mxu0 0.0
    %3028 = vmatpush1.xpose.msra.mxu0 0.0
    %3029 = vmatprep.subr.mxu0 0.0
    %3030 = vmatpush1.xpose.msra.mxu0 0.0
    %3031 = vmatprep.subr.mxu0 0.0
    %3032 = vmatpush1.xpose.msra.mxu0 0.0
    %3033 = vmatprep.subr.mxu0 0.0
    %3034 = vmatpush1.xpose.msra.mxu0 0.0
    %3035 = vmatprep.subr.mxu0 0.0
    %3036 = vmatpush1.xpose.msra.mxu0 0.0
    %3037 = vmatprep.subr.mxu0 0.0
    %3038 = vmatpush1.xpose.msra.mxu0 0.0
    %3039 = vmatprep.subr.mxu0 0.0
    %3040 = vmatpush1.xpose.msra.mxu0 0.0
    %3041 = vmatprep.subr.mxu0 0.0
    %3042 = vmatpush1.xpose.msra.mxu0 0.0
    %3043 = vmatprep.subr.mxu0 0.0
    %3044 = vmatpush1.xpose.msra.mxu0 0.0
    %3045 = vmatprep.subr.mxu0 0.0
    %3046 = vmatpush1.xpose.msra.mxu0 0.0
    %3047 = vmatprep.subr.mxu0 0.0
    %3048 = vmatpush1.xpose.msra.mxu0 0.0
    %3049 = vmatprep.subr.mxu0 0.0
    %3050 = vmatpush1.xpose.msra.mxu0 0.0
    %3051 = vmatprep.subr.mxu0 0.0
    %3052 = vmatpush1.xpose.msra.mxu0 0.0
    %3053 = vmatprep.subr.mxu0 0.0
    %3054 = vmatpush1.xpose.msra.mxu0 0.0
    %3055 = vmatprep.subr.mxu0 0.0
    %3056 = vmatpush1.xpose.msra.mxu0 0.0
    %3057 = vmatprep.subr.mxu0 0.0
    %3058 = vmatpush1.xpose.msra.mxu0 0.0
    %3059 = vmatprep.subr.mxu0 0.0
    %3060 = vmatpush1.xpose.msra.mxu0 0.0
    %3061 = vmatprep.subr.mxu0 0.0
    %3062 = vmatpush1.xpose.msra.mxu0 0.0
    %3063 = vmatprep.mubr.f32.mxu0 0.0
    %3064 = vmatmul.mubr.f32.gmra.mrb[0].mxu0 %v2994
    %v3065 = vpop.f32.mrb[0].mxu0
    %v3066 = vadd.f32 0.0, %v3065
    %v3067 = vpop.f32.mrb[0].mxu0
    %3068 = vdwg.mxu0
    %v3070 = vsel %vm2004, %v818, 0
    %v3073 = vsel %vm2004, %v1410, 0
    %3075 = vmatprep.subr.mxu0 0.0
    %3076 = vmatpush1.xpose.msra.mxu0 %v3073
    %3077 = vmatprep.subr.mxu0 0.0
    %3078 = vmatpush1.xpose.msra.mxu0 0.0
    %3079 = vmatprep.subr.mxu0 0.0
    %3080 = vmatpush1.xpose.msra.mxu0 0.0
    %3081 = vmatprep.subr.mxu0 0.0
    %3082 = vmatpush1.xpose.msra.mxu0 0.0
    %3083 = vmatprep.subr.mxu0 0.0
    %3084 = vmatpush1.xpose.msra.mxu0 0.0
    %3085 = vmatprep.subr.mxu0 0.0
    %3086 = vmatpush1.xpose.msra.mxu0 0.0
    %3087 = vmatprep.subr.mxu0 0.0
    %3088 = vmatpush1.xpose.msra.mxu0 0.0
    %3089 = vmatprep.subr.mxu0 0.0
    %3090 = vmatpush1.xpose.msra.mxu0 0.0
    %3091 = vmatprep.subr.mxu0 0.0
    %3092 = vmatpush1.xpose.msra.mxu0 0.0
    %3093 = vmatprep.subr.mxu0 0.0
    %3094 = vmatpush1.xpose.msra.mxu0 0.0
    %3095 = vmatprep.subr.mxu0 0.0
    %3096 = vmatpush1.xpose.msra.mxu0 0.0
    %3097 = vmatprep.subr.mxu0 0.0
    %3098 = vmatpush1.xpose.msra.mxu0 0.0
    %3099 = vmatprep.subr.mxu0 0.0
    %3100 = vmatpush1.xpose.msra.mxu0 0.0
    %3101 = vmatprep.subr.mxu0 0.0
    %3102 = vmatpush1.xpose.msra.mxu0 0.0
    %3103 = vmatprep.subr.mxu0 0.0
    %3104 = vmatpush1.xpose.msra.mxu0 0.0
    %3105 = vmatprep.subr.mxu0 0.0
    %3106 = vmatpush1.xpose.msra.mxu0 0.0
    %3107 = vmatprep.subr.mxu0 0.0
    %3108 = vmatpush1.xpose.msra.mxu0 0.0
    %3109 = vmatprep.subr.mxu0 0.0
    %3110 = vmatpush1.xpose.msra.mxu0 0.0
    %3111 = vmatprep.subr.mxu0 0.0
    %3112 = vmatpush1.xpose.msra.mxu0 0.0
    %3113 = vmatprep.subr.mxu0 0.0
    %3114 = vmatpush1.xpose.msra.mxu0 0.0
    %3115 = vmatprep.subr.mxu0 0.0
    %3116 = vmatpush1.xpose.msra.mxu0 0.0
    %3117 = vmatprep.subr.mxu0 0.0
    %3118 = vmatpush1.xpose.msra.mxu0 0.0
    %3119 = vmatprep.subr.mxu0 0.0
    %3120 = vmatpush1.xpose.msra.mxu0 0.0
    %3121 = vmatprep.subr.mxu0 0.0
    %3122 = vmatpush1.xpose.msra.mxu0 0.0
    %3123 = vmatprep.subr.mxu0 0.0
    %3124 = vmatpush1.xpose.msra.mxu0 0.0
    %3125 = vmatprep.subr.mxu0 0.0
    %3126 = vmatpush1.xpose.msra.mxu0 0.0
    %3127 = vmatprep.subr.mxu0 0.0
    %3128 = vmatpush1.xpose.msra.mxu0 0.0
    %3129 = vmatprep.subr.mxu0 0.0
    %3130 = vmatpush1.xpose.msra.mxu0 0.0
    %3131 = vmatprep.subr.mxu0 0.0
    %3132 = vmatpush1.xpose.msra.mxu0 0.0
    %3133 = vmatprep.subr.mxu0 0.0
    %3134 = vmatpush1.xpose.msra.mxu0 0.0
    %3135 = vmatprep.subr.mxu0 0.0
    %3136 = vmatpush1.xpose.msra.mxu0 0.0
    %3137 = vmatprep.subr.mxu0 0.0
    %3138 = vmatpush1.xpose.msra.mxu0 0.0
    %3139 = vmatprep.mubr.f32.mxu0 0.0
    %3140 = vmatmul.mubr.f32.gmra.mrb[0].mxu0 %v3070
    %v3141 = vpop.f32.mrb[0].mxu0
    %v3142 = vadd.f32 0.0, %v3141
    %v3143 = vpop.f32.mrb[0].mxu0
    %3144 = vdwg.mxu0
    %v3146 = vsel %vm2004, %v819, 0
    %v3149 = vsel %vm2004, %v1411, 0
    %3151 = vmatprep.subr.mxu0 0.0
    %3152 = vmatpush1.xpose.msra.mxu0 %v3149
    %3153 = vmatprep.subr.mxu0 0.0
    %3154 = vmatpush1.xpose.msra.mxu0 0.0
    %3155 = vmatprep.subr.mxu0 0.0
    %3156 = vmatpush1.xpose.msra.mxu0 0.0
    %3157 = vmatprep.subr.mxu0 0.0
    %3158 = vmatpush1.xpose.msra.mxu0 0.0
    %3159 = vmatprep.subr.mxu0 0.0
    %3160 = vmatpush1.xpose.msra.mxu0 0.0
    %3161 = vmatprep.subr.mxu0 0.0
    %3162 = vmatpush1.xpose.msra.mxu0 0.0
    %3163 = vmatprep.subr.mxu0 0.0
    %3164 = vmatpush1.xpose.msra.mxu0 0.0
    %3165 = vmatprep.subr.mxu0 0.0
    %3166 = vmatpush1.xpose.msra.mxu0 0.0
    %3167 = vmatprep.subr.mxu0 0.0
    %3168 = vmatpush1.xpose.msra.mxu0 0.0
    %3169 = vmatprep.subr.mxu0 0.0
    %3170 = vmatpush1.xpose.msra.mxu0 0.0
    %3171 = vmatprep.subr.mxu0 0.0
    %3172 = vmatpush1.xpose.msra.mxu0 0.0
    %3173 = vmatprep.subr.mxu0 0.0
    %3174 = vmatpush1.xpose.msra.mxu0 0.0
    %3175 = vmatprep.subr.mxu0 0.0
    %3176 = vmatpush1.xpose.msra.mxu0 0.0
    %3177 = vmatprep.subr.mxu0 0.0
    %3178 = vmatpush1.xpose.msra.mxu0 0.0
    %3179 = vmatprep.subr.mxu0 0.0
    %3180 = vmatpush1.xpose.msra.mxu0 0.0
    %3181 = vmatprep.subr.mxu0 0.0
    %3182 = vmatpush1.xpose.msra.mxu0 0.0
    %3183 = vmatprep.subr.mxu0 0.0
    %3184 = vmatpush1.xpose.msra.mxu0 0.0
    %3185 = vmatprep.subr.mxu0 0.0
    %3186 = vmatpush1.xpose.msra.mxu0 0.0
    %3187 = vmatprep.subr.mxu0 0.0
    %3188 = vmatpush1.xpose.msra.mxu0 0.0
    %3189 = vmatprep.subr.mxu0 0.0
    %3190 = vmatpush1.xpose.msra.mxu0 0.0
    %3191 = vmatprep.subr.mxu0 0.0
    %3192 = vmatpush1.xpose.msra.mxu0 0.0
    %3193 = vmatprep.subr.mxu0 0.0
    %3194 = vmatpush1.xpose.msra.mxu0 0.0
    %3195 = vmatprep.subr.mxu0 0.0
    %3196 = vmatpush1.xpose.msra.mxu0 0.0
    %3197 = vmatprep.subr.mxu0 0.0
    %3198 = vmatpush1.xpose.msra.mxu0 0.0
    %3199 = vmatprep.subr.mxu0 0.0
    %3200 = vmatpush1.xpose.msra.mxu0 0.0
    %3201 = vmatprep.subr.mxu0 0.0
    %3202 = vmatpush1.xpose.msra.mxu0 0.0
    %3203 = vmatprep.subr.mxu0 0.0
    %3204 = vmatpush1.xpose.msra.mxu0 0.0
    %3205 = vmatprep.subr.mxu0 0.0
    %3206 = vmatpush1.xpose.msra.mxu0 0.0
    %3207 = vmatprep.subr.mxu0 0.0
    %3208 = vmatpush1.xpose.msra.mxu0 0.0
    %3209 = vmatprep.subr.mxu0 0.0
    %3210 = vmatpush1.xpose.msra.mxu0 0.0
    %3211 = vmatprep.subr.mxu0 0.0
    %3212 = vmatpush1.xpose.msra.mxu0 0.0
    %3213 = vmatprep.subr.mxu0 0.0
    %3214 = vmatpush1.xpose.msra.mxu0 0.0
    %3215 = vmatprep.mubr.f32.mxu0 0.0
    %3216 = vmatmul.mubr.f32.gmra.mrb[0].mxu0 %v3146
    %v3217 = vpop.f32.mrb[0].mxu0
    %v3218 = vadd.f32 0.0, %v3217
    %v3219 = vpop.f32.mrb[0].mxu0
    %3220 = vdwg.mxu0
    %v3221 = vsel %vm2004, %v2078, -inf
    %3222 = vmax.xlane.f32.xlu0 %v3221
    %v3223 = vpop.xlane.xlu0 %3222
    %v3224 = vsel %vm2004, %v2154, -inf
    %3225 = vmax.xlane.f32.xlu0 %v3224
    %v3226 = vpop.xlane.xlu0 %3225
    %v3227 = vsel %vm2004, %v2230, -inf
    %3228 = vmax.xlane.f32.xlu0 %v3227
    %v3229 = vpop.xlane.xlu0 %3228
    %v3230 = vsel %vm2004, %v2306, -inf
    %3231 = vmax.xlane.f32.xlu0 %v3230
    %v3232 = vpop.xlane.xlu0 %3231
    %v3233 = vsel %vm2004, %v2382, -inf
    %3234 = vmax.xlane.f32.xlu0 %v3233
    %v3235 = vpop.xlane.xlu0 %3234
    %v3236 = vsel %vm2004, %v2458, -inf
    %3237 = vmax.xlane.f32.xlu0 %v3236
    %v3238 = vpop.xlane.xlu0 %3237
    %v3239 = vsel %vm2004, %v2534, -inf
    %3240 = vmax.xlane.f32.xlu0 %v3239
    %v3241 = vpop.xlane.xlu0 %3240
    %v3242 = vsel %vm2004, %v2610, -inf
    %3243 = vmax.xlane.f32.xlu0 %v3242
    %v3244 = vpop.xlane.xlu0 %3243
    %v3245 = vsel %vm2004, %v2686, -inf
    %3246 = vmax.xlane.f32.xlu0 %v3245
    %v3247 = vpop.xlane.xlu0 %3246
    %v3248 = vsel %vm2004, %v2762, -inf
    %3249 = vmax.xlane.f32.xlu0 %v3248
    %v3250 = vpop.xlane.xlu0 %3249
    %v3251 = vsel %vm2004, %v2838, -inf
    %3252 = vmax.xlane.f32.xlu0 %v3251
    %v3253 = vpop.xlane.xlu0 %3252
    %v3254 = vsel %vm2004, %v2914, -inf
    %3255 = vmax.xlane.f32.xlu0 %v3254
    %v3256 = vpop.xlane.xlu0 %3255
    %v3257 = vsel %vm2004, %v2990, -inf
    %3258 = vmax.xlane.f32.xlu0 %v3257
    %v3259 = vpop.xlane.xlu0 %3258
    %v3260 = vsel %vm2004, %v3066, -inf
    %3261 = vmax.xlane.f32.xlu0 %v3260
    %v3262 = vpop.xlane.xlu0 %3261
    %v3263 = vsel %vm2004, %v3142, -inf
    %3264 = vmax.xlane.f32.xlu0 %v3263
    %v3265 = vpop.xlane.xlu0 %3264
    %v3266 = vsel %vm2004, %v3218, -inf
    %3267 = vmax.xlane.f32.xlu0 %v3266
    %v3268 = vpop.xlane.xlu0 %3267
    %v3269 = vsub.f32 %v2078, %v3223
    %v3270 = vsub.f32 %v2154, %v3226
    %v3271 = vsub.f32 %v2230, %v3229
    %v3272 = vsub.f32 %v2306, %v3232
    %v3273 = vsub.f32 %v2382, %v3235
    %v3274 = vsub.f32 %v2458, %v3238
    %v3275 = vsub.f32 %v2534, %v3241
    %v3276 = vsub.f32 %v2610, %v3244
    %v3277 = vsub.f32 %v2686, %v3247
    %v3278 = vsub.f32 %v2762, %v3250
    %v3279 = vsub.f32 %v2838, %v3253
    %v3280 = vsub.f32 %v2914, %v3256
    %v3281 = vsub.f32 %v2990, %v3259
    %v3282 = vsub.f32 %v3066, %v3262
    %v3283 = vsub.f32 %v3142, %v3265
    %v3284 = vsub.f32 %v3218, %v3268
    %v3285 = vmul.f32 %v3269, 1.442695
    %v3286 = vpow.pop %v3285
    %v3287 = vmul.f32 %v3270, 1.442695
    %v3288 = vpow.pop %v3287
    %v3289 = vmul.f32 %v3271, 1.442695
    %v3290 = vpow.pop %v3289
    %v3291 = vmul.f32 %v3272, 1.442695
    %v3292 = vpow.pop %v3291
    %v3293 = vmul.f32 %v3273, 1.442695
    %v3294 = vpow.pop %v3293
    %v3295 = vmul.f32 %v3274, 1.442695
    %v3296 = vpow.pop %v3295
    %v3297 = vmul.f32 %v3275, 1.442695
    %v3298 = vpow.pop %v3297
    %v3299 = vmul.f32 %v3276, 1.442695
    %v3300 = vpow.pop %v3299
    %v3301 = vmul.f32 %v3277, 1.442695
    %v3302 = vpow.pop %v3301
    %v3303 = vmul.f32 %v3278, 1.442695
    %v3304 = vpow.pop %v3303
    %v3305 = vmul.f32 %v3279, 1.442695
    %v3306 = vpow.pop %v3305
    %v3307 = vmul.f32 %v3280, 1.442695
    %v3308 = vpow.pop %v3307
    %v3309 = vmul.f32 %v3281, 1.442695
    %v3310 = vpow.pop %v3309
    %v3311 = vmul.f32 %v3282, 1.442695
    %v3312 = vpow.pop %v3311
    %v3313 = vmul.f32 %v3283, 1.442695
    %v3314 = vpow.pop %v3313
    %v3315 = vmul.f32 %v3284, 1.442695
    %v3316 = vpow.pop %v3315
    %v3317 = vsel %vm2004, %v3286, 0.0
    %3318 = vadd.xlane.f32.xlu0 %v3317
    %v3319 = vpop.xlane.xlu0 %3318
    %v3320 = vsel %vm2004, %v3288, 0.0
    %3321 = vadd.xlane.f32.xlu0 %v3320
    %v3322 = vpop.xlane.xlu0 %3321
    %v3323 = vsel %vm2004, %v3290, 0.0
    %3324 = vadd.xlane.f32.xlu0 %v3323
    %v3325 = vpop.xlane.xlu0 %3324
    %v3326 = vsel %vm2004, %v3292, 0.0
    %3327 = vadd.xlane.f32.xlu0 %v3326
    %v3328 = vpop.xlane.xlu0 %3327
    %v3329 = vsel %vm2004, %v3294, 0.0
    %3330 = vadd.xlane.f32.xlu0 %v3329
    %v3331 = vpop.xlane.xlu0 %3330
    %v3332 = vsel %vm2004, %v3296, 0.0
    %3333 = vadd.xlane.f32.xlu0 %v3332
    %v3334 = vpop.xlane.xlu0 %3333
    %v3335 = vsel %vm2004, %v3298, 0.0
    %3336 = vadd.xlane.f32.xlu0 %v3335
    %v3337 = vpop.xlane.xlu0 %3336
    %v3338 = vsel %vm2004, %v3300, 0.0
    %3339 = vadd.xlane.f32.xlu0 %v3338
    %v3340 = vpop.xlane.xlu0 %3339
    %v3341 = vsel %vm2004, %v3302, 0.0
    %3342 = vadd.xlane.f32.xlu0 %v3341
    %v3343 = vpop.xlane.xlu0 %3342
    %v3344 = vsel %vm2004, %v3304, 0.0
    %3345 = vadd.xlane.f32.xlu0 %v3344
    %v3346 = vpop.xlane.xlu0 %3345
    %v3347 = vsel %vm2004, %v3306, 0.0
    %3348 = vadd.xlane.f32.xlu0 %v3347
    %v3349 = vpop.xlane.xlu0 %3348
    %v3350 = vsel %vm2004, %v3308, 0.0
    %3351 = vadd.xlane.f32.xlu0 %v3350
    %v3352 = vpop.xlane.xlu0 %3351
    %v3353 = vsel %vm2004, %v3310, 0.0
    %3354 = vadd.xlane.f32.xlu0 %v3353
    %v3355 = vpop.xlane.xlu0 %3354
    %v3356 = vsel %vm2004, %v3312, 0.0
    %3357 = vadd.xlane.f32.xlu0 %v3356
    %v3358 = vpop.xlane.xlu0 %3357
    %v3359 = vsel %vm2004, %v3314, 0.0
    %3360 = vadd.xlane.f32.xlu0 %v3359
    %v3361 = vpop.xlane.xlu0 %3360
    %v3362 = vsel %vm2004, %v3316, 0.0
    %3363 = vadd.xlane.f32.xlu0 %v3362
    %v3364 = vpop.xlane.xlu0 %3363
    %v3365 = vrcp.pop %v3319
    %v3366 = vrcp.pop %v3322
    %v3367 = vrcp.pop %v3325
    %v3368 = vrcp.pop %v3328
    %v3369 = vrcp.pop %v3331
    %v3370 = vrcp.pop %v3334
    %v3371 = vrcp.pop %v3337
    %v3372 = vrcp.pop %v3340
    %v3373 = vrcp.pop %v3343
    %v3374 = vrcp.pop %v3346
    %v3375 = vrcp.pop %v3349
    %v3376 = vrcp.pop %v3352
    %v3377 = vrcp.pop %v3355
    %v3378 = vrcp.pop %v3358
    %v3379 = vrcp.pop %v3361
    %v3380 = vrcp.pop %v3364
    %v3381 = vmul.f32 %v3286, %v3365
    %v3382 = vmul.f32 %v3288, %v3366
    %v3383 = vmul.f32 %v3290, %v3367
    %v3384 = vmul.f32 %v3292, %v3368
    %v3385 = vmul.f32 %v3294, %v3369
    %v3386 = vmul.f32 %v3296, %v3370
    %v3387 = vmul.f32 %v3298, %v3371
    %v3388 = vmul.f32 %v3300, %v3372
    %v3389 = vmul.f32 %v3302, %v3373
    %v3390 = vmul.f32 %v3304, %v3374
    %v3391 = vmul.f32 %v3306, %v3375
    %v3392 = vmul.f32 %v3308, %v3376
    %v3393 = vmul.f32 %v3310, %v3377
    %v3394 = vmul.f32 %v3312, %v3378
    %v3395 = vmul.f32 %v3314, %v3379
    %v3396 = vmul.f32 %v3316, %v3380
    %v3398 = vsel %vm2004, %v3381, 0
    %3400 = vmatprep.subr.mxu0 0.0
    %3401 = vmatpush1.msra.mxu0 %v1796
    %3402 = vmatprep.subr.mxu0 0.0
    %3403 = vmatpush1.msra.mxu0 0.0
    %3404 = vmatprep.subr.mxu0 0.0
    %3405 = vmatpush1.msra.mxu0 0.0
    %3406 = vmatprep.subr.mxu0 0.0
    %3407 = vmatpush1.msra.mxu0 0.0
    %3408 = vmatprep.subr.mxu0 0.0
    %3409 = vmatpush1.msra.mxu0 0.0
    %3410 = vmatprep.subr.mxu0 0.0
    %3411 = vmatpush1.msra.mxu0 0.0
    %3412 = vmatprep.subr.mxu0 0.0
    %3413 = vmatpush1.msra.mxu0 0.0
    %3414 = vmatprep.subr.mxu0 0.0
    %3415 = vmatpush1.msra.mxu0 0.0
    %3416 = vmatprep.subr.mxu0 0.0
    %3417 = vmatpush1.msra.mxu0 0.0
    %3418 = vmatprep.subr.mxu0 0.0
    %3419 = vmatpush1.msra.mxu0 0.0
    %3420 = vmatprep.subr.mxu0 0.0
    %3421 = vmatpush1.msra.mxu0 0.0
    %3422 = vmatprep.subr.mxu0 0.0
    %3423 = vmatpush1.msra.mxu0 0.0
    %3424 = vmatprep.subr.mxu0 0.0
    %3425 = vmatpush1.msra.mxu0 0.0
    %3426 = vmatprep.subr.mxu0 0.0
    %3427 = vmatpush1.msra.mxu0 0.0
    %3428 = vmatprep.subr.mxu0 0.0
    %3429 = vmatpush1.msra.mxu0 0.0
    %3430 = vmatprep.subr.mxu0 0.0
    %3431 = vmatpush1.msra.mxu0 0.0
    %3432 = vmatprep.subr.mxu0 0.0
    %3433 = vmatpush1.msra.mxu0 0.0
    %3434 = vmatprep.subr.mxu0 0.0
    %3435 = vmatpush1.msra.mxu0 0.0
    %3436 = vmatprep.subr.mxu0 0.0
    %3437 = vmatpush1.msra.mxu0 0.0
    %3438 = vmatprep.subr.mxu0 0.0
    %3439 = vmatpush1.msra.mxu0 0.0
    %3440 = vmatprep.subr.mxu0 0.0
    %3441 = vmatpush1.msra.mxu0 0.0
    %3442 = vmatprep.subr.mxu0 0.0
    %3443 = vmatpush1.msra.mxu0 0.0
    %3444 = vmatprep.subr.mxu0 0.0
    %3445 = vmatpush1.msra.mxu0 0.0
    %3446 = vmatprep.subr.mxu0 0.0
    %3447 = vmatpush1.msra.mxu0 0.0
    %3448 = vmatprep.subr.mxu0 0.0
    %3449 = vmatpush1.msra.mxu0 0.0
    %3450 = vmatprep.subr.mxu0 0.0
    %3451 = vmatpush1.msra.mxu0 0.0
    %3452 = vmatprep.subr.mxu0 0.0
    %3453 = vmatpush1.msra.mxu0 0.0
    %3454 = vmatprep.subr.mxu0 0.0
    %3455 = vmatpush1.msra.mxu0 0.0
    %3456 = vmatprep.subr.mxu0 0.0
    %3457 = vmatpush1.msra.mxu0 0.0
    %3458 = vmatprep.subr.mxu0 0.0
    %3459 = vmatpush1.msra.mxu0 0.0
    %3460 = vmatprep.subr.mxu0 0.0
    %3461 = vmatpush1.msra.mxu0 0.0
    %3462 = vmatprep.subr.mxu0 0.0
    %3463 = vmatpush1.msra.mxu0 0.0
    %3464 = vmatprep.mubr.f32.mxu0 0.0
    %3465 = vmatmul.mubr.f32.gmra.mrb[0].mxu0 %v3398
    %v3466 = vpop.f32.mrb[0].mxu0
    %v3467 = vadd.f32 0.0, %v3466
    %v3468 = vpop.f32.mrb[0].mxu0
    %3469 = vdwg.mxu0
    %v3471 = vsel %vm2004, %v3382, 0
    %3473 = vmatprep.subr.mxu0 0.0
    %3474 = vmatpush1.msra.mxu0 %v1797
    %3475 = vmatprep.subr.mxu0 0.0
    %3476 = vmatpush1.msra.mxu0 0.0
    %3477 = vmatprep.subr.mxu0 0.0
    %3478 = vmatpush1.msra.mxu0 0.0
    %3479 = vmatprep.subr.mxu0 0.0
    %3480 = vmatpush1.msra.mxu0 0.0
    %3481 = vmatprep.subr.mxu0 0.0
    %3482 = vmatpush1.msra.mxu0 0.0
    %3483 = vmatprep.subr.mxu0 0.0
    %3484 = vmatpush1.msra.mxu0 0.0
    %3485 = vmatprep.subr.mxu0 0.0
    %3486 = vmatpush1.msra.mxu0 0.0
    %3487 = vmatprep.subr.mxu0 0.0
    %3488 = vmatpush1.msra.mxu0 0.0
    %3489 = vmatprep.subr.mxu0 0.0
    %3490 = vmatpush1.msra.mxu0 0.0
    %3491 = vmatprep.subr.mxu0 0.0
    %3492 = vmatpush1.msra.mxu0 0.0
    %3493 = vmatprep.subr.mxu0 0.0
    %3494 = vmatpush1.msra.mxu0 0.0
    %3495 = vmatprep.subr.mxu0 0.0
    %3496 = vmatpush1.msra.mxu0 0.0
    %3497 = vmatprep.subr.mxu0 0.0
    %3498 = vmatpush1.msra.mxu0 0.0
    %3499 = vmatprep.subr.mxu0 0.0
    %3500 = vmatpush1.msra.mxu0 0.0
    %3501 = vmatprep.subr.mxu0 0.0
    %3502 = vmatpush1.msra.mxu0 0.0
    %3503 = vmatprep.subr.mxu0 0.0
    %3504 = vmatpush1.msra.mxu0 0.0
    %3505 = vmatprep.subr.mxu0 0.0
    %3506 = vmatpush1.msra.mxu0 0.0
    %3507 = vmatprep.subr.mxu0 0.0
    %3508 = vmatpush1.msra.mxu0 0.0
    %3509 = vmatprep.subr.mxu0 0.0
    %3510 = vmatpush1.msra.mxu0 0.0
    %3511 = vmatprep.subr.mxu0 0.0
    %3512 = vmatpush1.msra.mxu0 0.0
    %3513 = vmatprep.subr.mxu0 0.0
    %3514 = vmatpush1.msra.mxu0 0.0
    %3515 = vmatprep.subr.mxu0 0.0
    %3516 = vmatpush1.msra.mxu0 0.0
    %3517 = vmatprep.subr.mxu0 0.0
    %3518 = vmatpush1.msra.mxu0 0.0
    %3519 = vmatprep.subr.mxu0 0.0
    %3520 = vmatpush1.msra.mxu0 0.0
    %3521 = vmatprep.subr.mxu0 0.0
    %3522 = vmatpush1.msra.mxu0 0.0
    %3523 = vmatprep.subr.mxu0 0.0
    %3524 = vmatpush1.msra.mxu0 0.0
    %3525 = vmatprep.subr.mxu0 0.0
    %3526 = vmatpush1.msra.mxu0 0.0
    %3527 = vmatprep.subr.mxu0 0.0
    %3528 = vmatpush1.msra.mxu0 0.0
    %3529 = vmatprep.subr.mxu0 0.0
    %3530 = vmatpush1.msra.mxu0 0.0
    %3531 = vmatprep.subr.mxu0 0.0
    %3532 = vmatpush1.msra.mxu0 0.0
    %3533 = vmatprep.subr.mxu0 0.0
    %3534 = vmatpush1.msra.mxu0 0.0
    %3535 = vmatprep.subr.mxu0 0.0
    %3536 = vmatpush1.msra.mxu0 0.0
    %3537 = vmatprep.mubr.f32.mxu0 0.0
    %3538 = vmatmul.mubr.f32.gmra.mrb[0].mxu0 %v3471
    %v3539 = vpop.f32.mrb[0].mxu0
    %v3540 = vadd.f32 0.0, %v3539
    %v3541 = vpop.f32.mrb[0].mxu0
    %3542 = vdwg.mxu0
    %v3544 = vsel %vm2004, %v3383, 0
    %3546 = vmatprep.subr.mxu0 0.0
    %3547 = vmatpush1.msra.mxu0 %v1798
    %3548 = vmatprep.subr.mxu0 0.0
    %3549 = vmatpush1.msra.mxu0 0.0
    %3550 = vmatprep.subr.mxu0 0.0
    %3551 = vmatpush1.msra.mxu0 0.0
    %3552 = vmatprep.subr.mxu0 0.0
    %3553 = vmatpush1.msra.mxu0 0.0
    %3554 = vmatprep.subr.mxu0 0.0
    %3555 = vmatpush1.msra.mxu0 0.0
    %3556 = vmatprep.subr.mxu0 0.0
    %3557 = vmatpush1.msra.mxu0 0.0
    %3558 = vmatprep.subr.mxu0 0.0
    %3559 = vmatpush1.msra.mxu0 0.0
    %3560 = vmatprep.subr.mxu0 0.0
    %3561 = vmatpush1.msra.mxu0 0.0
    %3562 = vmatprep.subr.mxu0 0.0
    %3563 = vmatpush1.msra.mxu0 0.0
    %3564 = vmatprep.subr.mxu0 0.0
    %3565 = vmatpush1.msra.mxu0 0.0
    %3566 = vmatprep.subr.mxu0 0.0
    %3567 = vmatpush1.msra.mxu0 0.0
    %3568 = vmatprep.subr.mxu0 0.0
    %3569 = vmatpush1.msra.mxu0 0.0
    %3570 = vmatprep.subr.mxu0 0.0
    %3571 = vmatpush1.msra.mxu0 0.0
    %3572 = vmatprep.subr.mxu0 0.0
    %3573 = vmatpush1.msra.mxu0 0.0
    %3574 = vmatprep.subr.mxu0 0.0
    %3575 = vmatpush1.msra.mxu0 0.0
    %3576 = vmatprep.subr.mxu0 0.0
    %3577 = vmatpush1.msra.mxu0 0.0
    %3578 = vmatprep.subr.mxu0 0.0
    %3579 = vmatpush1.msra.mxu0 0.0
    %3580 = vmatprep.subr.mxu0 0.0
    %3581 = vmatpush1.msra.mxu0 0.0
    %3582 = vmatprep.subr.mxu0 0.0
    %3583 = vmatpush1.msra.mxu0 0.0
    %3584 = vmatprep.subr.mxu0 0.0
    %3585 = vmatpush1.msra.mxu0 0.0
    %3586 = vmatprep.subr.mxu0 0.0
    %3587 = vmatpush1.msra.mxu0 0.0
    %3588 = vmatprep.subr.mxu0 0.0
    %3589 = vmatpush1.msra.mxu0 0.0
    %3590 = vmatprep.subr.mxu0 0.0
    %3591 = vmatpush1.msra.mxu0 0.0
    %3592 = vmatprep.subr.mxu0 0.0
    %3593 = vmatpush1.msra.mxu0 0.0
    %3594 = vmatprep.subr.mxu0 0.0
    %3595 = vmatpush1.msra.mxu0 0.0
    %3596 = vmatprep.subr.mxu0 0.0
    %3597 = vmatpush1.msra.mxu0 0.0
    %3598 = vmatprep.subr.mxu0 0.0
    %3599 = vmatpush1.msra.mxu0 0.0
    %3600 = vmatprep.subr.mxu0 0.0
    %3601 = vmatpush1.msra.mxu0 0.0
    %3602 = vmatprep.subr.mxu0 0.0
    %3603 = vmatpush1.msra.mxu0 0.0
    %3604 = vmatprep.subr.mxu0 0.0
    %3605 = vmatpush1.msra.mxu0 0.0
    %3606 = vmatprep.subr.mxu0 0.0
    %3607 = vmatpush1.msra.mxu0 0.0
    %3608 = vmatprep.subr.mxu0 0.0
    %3609 = vmatpush1.msra.mxu0 0.0
    %3610 = vmatprep.mubr.f32.mxu0 0.0
    %3611 = vmatmul.mubr.f32.gmra.mrb[0].mxu0 %v3544
    %v3612 = vpop.f32.mrb[0].mxu0
    %v3613 = vadd.f32 0.0, %v3612
    %v3614 = vpop.f32.mrb[0].mxu0
    %3615 = vdwg.mxu0
    %v3617 = vsel %vm2004, %v3384, 0
    %3619 = vmatprep.subr.mxu0 0.0
    %3620 = vmatpush1.msra.mxu0 %v1799
    %3621 = vmatprep.subr.mxu0 0.0
    %3622 = vmatpush1.msra.mxu0 0.0
    %3623 = vmatprep.subr.mxu0 0.0
    %3624 = vmatpush1.msra.mxu0 0.0
    %3625 = vmatprep.subr.mxu0 0.0
    %3626 = vmatpush1.msra.mxu0 0.0
    %3627 = vmatprep.subr.mxu0 0.0
    %3628 = vmatpush1.msra.mxu0 0.0
    %3629 = vmatprep.subr.mxu0 0.0
    %3630 = vmatpush1.msra.mxu0 0.0
    %3631 = vmatprep.subr.mxu0 0.0
    %3632 = vmatpush1.msra.mxu0 0.0
    %3633 = vmatprep.subr.mxu0 0.0
    %3634 = vmatpush1.msra.mxu0 0.0
    %3635 = vmatprep.subr.mxu0 0.0
    %3636 = vmatpush1.msra.mxu0 0.0
    %3637 = vmatprep.subr.mxu0 0.0
    %3638 = vmatpush1.msra.mxu0 0.0
    %3639 = vmatprep.subr.mxu0 0.0
    %3640 = vmatpush1.msra.mxu0 0.0
    %3641 = vmatprep.subr.mxu0 0.0
    %3642 = vmatpush1.msra.mxu0 0.0
    %3643 = vmatprep.subr.mxu0 0.0
    %3644 = vmatpush1.msra.mxu0 0.0
    %3645 = vmatprep.subr.mxu0 0.0
    %3646 = vmatpush1.msra.mxu0 0.0
    %3647 = vmatprep.subr.mxu0 0.0
    %3648 = vmatpush1.msra.mxu0 0.0
    %3649 = vmatprep.subr.mxu0 0.0
    %3650 = vmatpush1.msra.mxu0 0.0
    %3651 = vmatprep.subr.mxu0 0.0
    %3652 = vmatpush1.msra.mxu0 0.0
    %3653 = vmatprep.subr.mxu0 0.0
    %3654 = vmatpush1.msra.mxu0 0.0
    %3655 = vmatprep.subr.mxu0 0.0
    %3656 = vmatpush1.msra.mxu0 0.0
    %3657 = vmatprep.subr.mxu0 0.0
    %3658 = vmatpush1.msra.mxu0 0.0
    %3659 = vmatprep.subr.mxu0 0.0
    %3660 = vmatpush1.msra.mxu0 0.0
    %3661 = vmatprep.subr.mxu0 0.0
    %3662 = vmatpush1.msra.mxu0 0.0
    %3663 = vmatprep.subr.mxu0 0.0
    %3664 = vmatpush1.msra.mxu0 0.0
    %3665 = vmatprep.subr.mxu0 0.0
    %3666 = vmatpush1.msra.mxu0 0.0
    %3667 = vmatprep.subr.mxu0 0.0
    %3668 = vmatpush1.msra.mxu0 0.0
    %3669 = vmatprep.subr.mxu0 0.0
    %3670 = vmatpush1.msra.mxu0 0.0
    %3671 = vmatprep.subr.mxu0 0.0
    %3672 = vmatpush1.msra.mxu0 0.0
    %3673 = vmatprep.subr.mxu0 0.0
    %3674 = vmatpush1.msra.mxu0 0.0
    %3675 = vmatprep.subr.mxu0 0.0
    %3676 = vmatpush1.msra.mxu0 0.0
    %3677 = vmatprep.subr.mxu0 0.0
    %3678 = vmatpush1.msra.mxu0 0.0
    %3679 = vmatprep.subr.mxu0 0.0
    %3680 = vmatpush1.msra.mxu0 0.0
    %3681 = vmatprep.subr.mxu0 0.0
    %3682 = vmatpush1.msra.mxu0 0.0
    %3683 = vmatprep.mubr.f32.mxu0 0.0
    %3684 = vmatmul.mubr.f32.gmra.mrb[0].mxu0 %v3617
    %v3685 = vpop.f32.mrb[0].mxu0
    %v3686 = vadd.f32 0.0, %v3685
    %v3687 = vpop.f32.mrb[0].mxu0
    %3688 = vdwg.mxu0
    %v3690 = vsel %vm2004, %v3385, 0
    %3692 = vmatprep.subr.mxu0 0.0
    %3693 = vmatpush1.msra.mxu0 %v1864
    %3694 = vmatprep.subr.mxu0 0.0
    %3695 = vmatpush1.msra.mxu0 0.0
    %3696 = vmatprep.subr.mxu0 0.0
    %3697 = vmatpush1.msra.mxu0 0.0
    %3698 = vmatprep.subr.mxu0 0.0
    %3699 = vmatpush1.msra.mxu0 0.0
    %3700 = vmatprep.subr.mxu0 0.0
    %3701 = vmatpush1.msra.mxu0 0.0
    %3702 = vmatprep.subr.mxu0 0.0
    %3703 = vmatpush1.msra.mxu0 0.0
    %3704 = vmatprep.subr.mxu0 0.0
    %3705 = vmatpush1.msra.mxu0 0.0
    %3706 = vmatprep.subr.mxu0 0.0
    %3707 = vmatpush1.msra.mxu0 0.0
    %3708 = vmatprep.subr.mxu0 0.0
    %3709 = vmatpush1.msra.mxu0 0.0
    %3710 = vmatprep.subr.mxu0 0.0
    %3711 = vmatpush1.msra.mxu0 0.0
    %3712 = vmatprep.subr.mxu0 0.0
    %3713 = vmatpush1.msra.mxu0 0.0
    %3714 = vmatprep.subr.mxu0 0.0
    %3715 = vmatpush1.msra.mxu0 0.0
    %3716 = vmatprep.subr.mxu0 0.0
    %3717 = vmatpush1.msra.mxu0 0.0
    %3718 = vmatprep.subr.mxu0 0.0
    %3719 = vmatpush1.msra.mxu0 0.0
    %3720 = vmatprep.subr.mxu0 0.0
    %3721 = vmatpush1.msra.mxu0 0.0
    %3722 = vmatprep.subr.mxu0 0.0
    %3723 = vmatpush1.msra.mxu0 0.0
    %3724 = vmatprep.subr.mxu0 0.0
    %3725 = vmatpush1.msra.mxu0 0.0
    %3726 = vmatprep.subr.mxu0 0.0
    %3727 = vmatpush1.msra.mxu0 0.0
    %3728 = vmatprep.subr.mxu0 0.0
    %3729 = vmatpush1.msra.mxu0 0.0
    %3730 = vmatprep.subr.mxu0 0.0
    %3731 = vmatpush1.msra.mxu0 0.0
    %3732 = vmatprep.subr.mxu0 0.0
    %3733 = vmatpush1.msra.mxu0 0.0
    %3734 = vmatprep.subr.mxu0 0.0
    %3735 = vmatpush1.msra.mxu0 0.0
    %3736 = vmatprep.subr.mxu0 0.0
    %3737 = vmatpush1.msra.mxu0 0.0
    %3738 = vmatprep.subr.mxu0 0.0
    %3739 = vmatpush1.msra.mxu0 0.0
    %3740 = vmatprep.subr.mxu0 0.0
    %3741 = vmatpush1.msra.mxu0 0.0
    %3742 = vmatprep.subr.mxu0 0.0
    %3743 = vmatpush1.msra.mxu0 0.0
    %3744 = vmatprep.subr.mxu0 0.0
    %3745 = vmatpush1.msra.mxu0 0.0
    %3746 = vmatprep.subr.mxu0 0.0
    %3747 = vmatpush1.msra.mxu0 0.0
    %3748 = vmatprep.subr.mxu0 0.0
    %3749 = vmatpush1.msra.mxu0 0.0
    %3750 = vmatprep.subr.mxu0 0.0
    %3751 = vmatpush1.msra.mxu0 0.0
    %3752 = vmatprep.subr.mxu0 0.0
    %3753 = vmatpush1.msra.mxu0 0.0
    %3754 = vmatprep.subr.mxu0 0.0
    %3755 = vmatpush1.msra.mxu0 0.0
    %3756 = vmatprep.mubr.f32.mxu0 0.0
    %3757 = vmatmul.mubr.f32.gmra.mrb[0].mxu0 %v3690
    %v3758 = vpop.f32.mrb[0].mxu0
    %v3759 = vadd.f32 0.0, %v3758
    %v3760 = vpop.f32.mrb[0].mxu0
    %3761 = vdwg.mxu0
    %v3763 = vsel %vm2004, %v3386, 0
    %3765 = vmatprep.subr.mxu0 0.0
    %3766 = vmatpush1.msra.mxu0 %v1865
    %3767 = vmatprep.subr.mxu0 0.0
    %3768 = vmatpush1.msra.mxu0 0.0
    %3769 = vmatprep.subr.mxu0 0.0
    %3770 = vmatpush1.msra.mxu0 0.0
    %3771 = vmatprep.subr.mxu0 0.0
    %3772 = vmatpush1.msra.mxu0 0.0
    %3773 = vmatprep.subr.mxu0 0.0
    %3774 = vmatpush1.msra.mxu0 0.0
    %3775 = vmatprep.subr.mxu0 0.0
    %3776 = vmatpush1.msra.mxu0 0.0
    %3777 = vmatprep.subr.mxu0 0.0
    %3778 = vmatpush1.msra.mxu0 0.0
    %3779 = vmatprep.subr.mxu0 0.0
    %3780 = vmatpush1.msra.mxu0 0.0
    %3781 = vmatprep.subr.mxu0 0.0
    %3782 = vmatpush1.msra.mxu0 0.0
    %3783 = vmatprep.subr.mxu0 0.0
    %3784 = vmatpush1.msra.mxu0 0.0
    %3785 = vmatprep.subr.mxu0 0.0
    %3786 = vmatpush1.msra.mxu0 0.0
    %3787 = vmatprep.subr.mxu0 0.0
    %3788 = vmatpush1.msra.mxu0 0.0
    %3789 = vmatprep.subr.mxu0 0.0
    %3790 = vmatpush1.msra.mxu0 0.0
    %3791 = vmatprep.subr.mxu0 0.0
    %3792 = vmatpush1.msra.mxu0 0.0
    %3793 = vmatprep.subr.mxu0 0.0
    %3794 = vmatpush1.msra.mxu0 0.0
    %3795 = vmatprep.subr.mxu0 0.0
    %3796 = vmatpush1.msra.mxu0 0.0
    %3797 = vmatprep.subr.mxu0 0.0
    %3798 = vmatpush1.msra.mxu0 0.0
    %3799 = vmatprep.subr.mxu0 0.0
    %3800 = vmatpush1.msra.mxu0 0.0
    %3801 = vmatprep.subr.mxu0 0.0
    %3802 = vmatpush1.msra.mxu0 0.0
    %3803 = vmatprep.subr.mxu0 0.0
    %3804 = vmatpush1.msra.mxu0 0.0
    %3805 = vmatprep.subr.mxu0 0.0
    %3806 = vmatpush1.msra.mxu0 0.0
    %3807 = vmatprep.subr.mxu0 0.0
    %3808 = vmatpush1.msra.mxu0 0.0
    %3809 = vmatprep.subr.mxu0 0.0
    %3810 = vmatpush1.msra.mxu0 0.0
    %3811 = vmatprep.subr.mxu0 0.0
    %3812 = vmatpush1.msra.mxu0 0.0
    %3813 = vmatprep.subr.mxu0 0.0
    %3814 = vmatpush1.msra.mxu0 0.0
    %3815 = vmatprep.subr.mxu0 0.0
    %3816 = vmatpush1.msra.mxu0 0.0
    %3817 = vmatprep.subr.mxu0 0.0
    %3818 = vmatpush1.msra.mxu0 0.0
    %3819 = vmatprep.subr.mxu0 0.0
    %3820 = vmatpush1.msra.mxu0 0.0
    %3821 = vmatprep.subr.mxu0 0.0
    %3822 = vmatpush1.msra.mxu0 0.0
    %3823 = vmatprep.subr.mxu0 0.0
    %3824 = vmatpush1.msra.mxu0 0.0
    %3825 = vmatprep.subr.mxu0 0.0
    %3826 = vmatpush1.msra.mxu0 0.0
    %3827 = vmatprep.subr.mxu0 0.0
    %3828 = vmatpush1.msra.mxu0 0.0
    %3829 = vmatprep.mubr.f32.mxu0 0.0
    %3830 = vmatmul.mubr.f32.gmra.mrb[0].mxu0 %v3763
    %v3831 = vpop.f32.mrb[0].mxu0
    %v3832 = vadd.f32 0.0, %v3831
    %v3833 = vpop.f32.mrb[0].mxu0
    %3834 = vdwg.mxu0
    %v3836 = vsel %vm2004, %v3387, 0
    %3838 = vmatprep.subr.mxu0 0.0
    %3839 = vmatpush1.msra.mxu0 %v1866
    %3840 = vmatprep.subr.mxu0 0.0
    %3841 = vmatpush1.msra.mxu0 0.0
    %3842 = vmatprep.subr.mxu0 0.0
    %3843 = vmatpush1.msra.mxu0 0.0
    %3844 = vmatprep.subr.mxu0 0.0
    %3845 = vmatpush1.msra.mxu0 0.0
    %3846 = vmatprep.subr.mxu0 0.0
    %3847 = vmatpush1.msra.mxu0 0.0
    %3848 = vmatprep.subr.mxu0 0.0
    %3849 = vmatpush1.msra.mxu0 0.0
    %3850 = vmatprep.subr.mxu0 0.0
    %3851 = vmatpush1.msra.mxu0 0.0
    %3852 = vmatprep.subr.mxu0 0.0
    %3853 = vmatpush1.msra.mxu0 0.0
    %3854 = vmatprep.subr.mxu0 0.0
    %3855 = vmatpush1.msra.mxu0 0.0
    %3856 = vmatprep.subr.mxu0 0.0
    %3857 = vmatpush1.msra.mxu0 0.0
    %3858 = vmatprep.subr.mxu0 0.0
    %3859 = vmatpush1.msra.mxu0 0.0
    %3860 = vmatprep.subr.mxu0 0.0
    %3861 = vmatpush1.msra.mxu0 0.0
    %3862 = vmatprep.subr.mxu0 0.0
    %3863 = vmatpush1.msra.mxu0 0.0
    %3864 = vmatprep.subr.mxu0 0.0
    %3865 = vmatpush1.msra.mxu0 0.0
    %3866 = vmatprep.subr.mxu0 0.0
    %3867 = vmatpush1.msra.mxu0 0.0
    %3868 = vmatprep.subr.mxu0 0.0
    %3869 = vmatpush1.msra.mxu0 0.0
    %3870 = vmatprep.subr.mxu0 0.0
    %3871 = vmatpush1.msra.mxu0 0.0
    %3872 = vmatprep.subr.mxu0 0.0
    %3873 = vmatpush1.msra.mxu0 0.0
    %3874 = vmatprep.subr.mxu0 0.0
    %3875 = vmatpush1.msra.mxu0 0.0
    %3876 = vmatprep.subr.mxu0 0.0
    %3877 = vmatpush1.msra.mxu0 0.0
    %3878 = vmatprep.subr.mxu0 0.0
    %3879 = vmatpush1.msra.mxu0 0.0
    %3880 = vmatprep.subr.mxu0 0.0
    %3881 = vmatpush1.msra.mxu0 0.0
    %3882 = vmatprep.subr.mxu0 0.0
    %3883 = vmatpush1.msra.mxu0 0.0
    %3884 = vmatprep.subr.mxu0 0.0
    %3885 = vmatpush1.msra.mxu0 0.0
    %3886 = vmatprep.subr.mxu0 0.0
    %3887 = vmatpush1.msra.mxu0 0.0
    %3888 = vmatprep.subr.mxu0 0.0
    %3889 = vmatpush1.msra.mxu0 0.0
    %3890 = vmatprep.subr.mxu0 0.0
    %3891 = vmatpush1.msra.mxu0 0.0
    %3892 = vmatprep.subr.mxu0 0.0
    %3893 = vmatpush1.msra.mxu0 0.0
    %3894 = vmatprep.subr.mxu0 0.0
    %3895 = vmatpush1.msra.mxu0 0.0
    %3896 = vmatprep.subr.mxu0 0.0
    %3897 = vmatpush1.msra.mxu0 0.0
    %3898 = vmatprep.subr.mxu0 0.0
    %3899 = vmatpush1.msra.mxu0 0.0
    %3900 = vmatprep.subr.mxu0 0.0
    %3901 = vmatpush1.msra.mxu0 0.0
    %3902 = vmatprep.mubr.f32.mxu0 0.0
    %3903 = vmatmul.mubr.f32.gmra.mrb[0].mxu0 %v3836
    %v3904 = vpop.f32.mrb[0].mxu0
    %v3905 = vadd.f32 0.0, %v3904
    %v3906 = vpop.f32.mrb[0].mxu0
    %3907 = vdwg.mxu0
    %v3909 = vsel %vm2004, %v3388, 0
    %3911 = vmatprep.subr.mxu0 0.0
    %3912 = vmatpush1.msra.mxu0 %v1867
    %3913 = vmatprep.subr.mxu0 0.0
    %3914 = vmatpush1.msra.mxu0 0.0
    %3915 = vmatprep.subr.mxu0 0.0
    %3916 = vmatpush1.msra.mxu0 0.0
    %3917 = vmatprep.subr.mxu0 0.0
    %3918 = vmatpush1.msra.mxu0 0.0
    %3919 = vmatprep.subr.mxu0 0.0
    %3920 = vmatpush1.msra.mxu0 0.0
    %3921 = vmatprep.subr.mxu0 0.0
    %3922 = vmatpush1.msra.mxu0 0.0
    %3923 = vmatprep.subr.mxu0 0.0
    %3924 = vmatpush1.msra.mxu0 0.0
    %3925 = vmatprep.subr.mxu0 0.0
    %3926 = vmatpush1.msra.mxu0 0.0
    %3927 = vmatprep.subr.mxu0 0.0
    %3928 = vmatpush1.msra.mxu0 0.0
    %3929 = vmatprep.subr.mxu0 0.0
    %3930 = vmatpush1.msra.mxu0 0.0
    %3931 = vmatprep.subr.mxu0 0.0
    %3932 = vmatpush1.msra.mxu0 0.0
    %3933 = vmatprep.subr.mxu0 0.0
    %3934 = vmatpush1.msra.mxu0 0.0
    %3935 = vmatprep.subr.mxu0 0.0
    %3936 = vmatpush1.msra.mxu0 0.0
    %3937 = vmatprep.subr.mxu0 0.0
    %3938 = vmatpush1.msra.mxu0 0.0
    %3939 = vmatprep.subr.mxu0 0.0
    %3940 = vmatpush1.msra.mxu0 0.0
    %3941 = vmatprep.subr.mxu0 0.0
    %3942 = vmatpush1.msra.mxu0 0.0
    %3943 = vmatprep.subr.mxu0 0.0
    %3944 = vmatpush1.msra.mxu0 0.0
    %3945 = vmatprep.subr.mxu0 0.0
    %3946 = vmatpush1.msra.mxu0 0.0
    %3947 = vmatprep.subr.mxu0 0.0
    %3948 = vmatpush1.msra.mxu0 0.0
    %3949 = vmatprep.subr.mxu0 0.0
    %3950 = vmatpush1.msra.mxu0 0.0
    %3951 = vmatprep.subr.mxu0 0.0
    %3952 = vmatpush1.msra.mxu0 0.0
    %3953 = vmatprep.subr.mxu0 0.0
    %3954 = vmatpush1.msra.mxu0 0.0
    %3955 = vmatprep.subr.mxu0 0.0
    %3956 = vmatpush1.msra.mxu0 0.0
    %3957 = vmatprep.subr.mxu0 0.0
    %3958 = vmatpush1.msra.mxu0 0.0
    %3959 = vmatprep.subr.mxu0 0.0
    %3960 = vmatpush1.msra.mxu0 0.0
    %3961 = vmatprep.subr.mxu0 0.0
    %3962 = vmatpush1.msra.mxu0 0.0
    %3963 = vmatprep.subr.mxu0 0.0
    %3964 = vmatpush1.msra.mxu0 0.0
    %3965 = vmatprep.subr.mxu0 0.0
    %3966 = vmatpush1.msra.mxu0 0.0
    %3967 = vmatprep.subr.mxu0 0.0
    %3968 = vmatpush1.msra.mxu0 0.0
    %3969 = vmatprep.subr.mxu0 0.0
    %3970 = vmatpush1.msra.mxu0 0.0
    %3971 = vmatprep.subr.mxu0 0.0
    %3972 = vmatpush1.msra.mxu0 0.0
    %3973 = vmatprep.subr.mxu0 0.0
    %3974 = vmatpush1.msra.mxu0 0.0
    %3975 = vmatprep.mubr.f32.mxu0 0.0
    %3976 = vmatmul.mubr.f32.gmra.mrb[0].mxu0 %v3909
    %v3977 = vpop.f32.mrb[0].mxu0
    %v3978 = vadd.f32 0.0, %v3977
    %v3979 = vpop.f32.mrb[0].mxu0
    %3980 = vdwg.mxu0
    %v3982 = vsel %vm2004, %v3389, 0
    %3984 = vmatprep.subr.mxu0 0.0
    %3985 = vmatpush1.msra.mxu0 %v1932
    %3986 = vmatprep.subr.mxu0 0.0
    %3987 = vmatpush1.msra.mxu0 0.0
    %3988 = vmatprep.subr.mxu0 0.0
    %3989 = vmatpush1.msra.mxu0 0.0
    %3990 = vmatprep.subr.mxu0 0.0
    %3991 = vmatpush1.msra.mxu0 0.0
    %3992 = vmatprep.subr.mxu0 0.0
    %3993 = vmatpush1.msra.mxu0 0.0
    %3994 = vmatprep.subr.mxu0 0.0
    %3995 = vmatpush1.msra.mxu0 0.0
    %3996 = vmatprep.subr.mxu0 0.0
    %3997 = vmatpush1.msra.mxu0 0.0
    %3998 = vmatprep.subr.mxu0 0.0
    %3999 = vmatpush1.msra.mxu0 0.0
    %4000 = vmatprep.subr.mxu0 0.0
    %4001 = vmatpush1.msra.mxu0 0.0
    %4002 = vmatprep.subr.mxu0 0.0
    %4003 = vmatpush1.msra.mxu0 0.0
    %4004 = vmatprep.subr.mxu0 0.0
    %4005 = vmatpush1.msra.mxu0 0.0
    %4006 = vmatprep.subr.mxu0 0.0
    %4007 = vmatpush1.msra.mxu0 0.0
    %4008 = vmatprep.subr.mxu0 0.0
    %4009 = vmatpush1.msra.mxu0 0.0
    %4010 = vmatprep.subr.mxu0 0.0
    %4011 = vmatpush1.msra.mxu0 0.0
    %4012 = vmatprep.subr.mxu0 0.0
    %4013 = vmatpush1.msra.mxu0 0.0
    %4014 = vmatprep.subr.mxu0 0.0
    %4015 = vmatpush1.msra.mxu0 0.0
    %4016 = vmatprep.subr.mxu0 0.0
    %4017 = vmatpush1.msra.mxu0 0.0
    %4018 = vmatprep.subr.mxu0 0.0
    %4019 = vmatpush1.msra.mxu0 0.0
    %4020 = vmatprep.subr.mxu0 0.0
    %4021 = vmatpush1.msra.mxu0 0.0
    %4022 = vmatprep.subr.mxu0 0.0
    %4023 = vmatpush1.msra.mxu0 0.0
    %4024 = vmatprep.subr.mxu0 0.0
    %4025 = vmatpush1.msra.mxu0 0.0
    %4026 = vmatprep.subr.mxu0 0.0
    %4027 = vmatpush1.msra.mxu0 0.0
    %4028 = vmatprep.subr.mxu0 0.0
    %4029 = vmatpush1.msra.mxu0 0.0
    %4030 = vmatprep.subr.mxu0 0.0
    %4031 = vmatpush1.msra.mxu0 0.0
    %4032 = vmatprep.subr.mxu0 0.0
    %4033 = vmatpush1.msra.mxu0 0.0
    %4034 = vmatprep.subr.mxu0 0.0
    %4035 = vmatpush1.msra.mxu0 0.0
    %4036 = vmatprep.subr.mxu0 0.0
    %4037 = vmatpush1.msra.mxu0 0.0
    %4038 = vmatprep.subr.mxu0 0.0
    %4039 = vmatpush1.msra.mxu0 0.0
    %4040 = vmatprep.subr.mxu0 0.0
    %4041 = vmatpush1.msra.mxu0 0.0
    %4042 = vmatprep.subr.mxu0 0.0
    %4043 = vmatpush1.msra.mxu0 0.0
    %4044 = vmatprep.subr.mxu0 0.0
    %4045 = vmatpush1.msra.mxu0 0.0
    %4046 = vmatprep.subr.mxu0 0.0
    %4047 = vmatpush1.msra.mxu0 0.0
    %4048 = vmatprep.mubr.f32.mxu0 0.0
    %4049 = vmatmul.mubr.f32.gmra.mrb[0].mxu0 %v3982
    %v4050 = vpop.f32.mrb[0].mxu0
    %v4051 = vadd.f32 0.0, %v4050
    %v4052 = vpop.f32.mrb[0].mxu0
    %4053 = vdwg.mxu0
    %v4055 = vsel %vm2004, %v3390, 0
    %4057 = vmatprep.subr.mxu0 0.0
    %4058 = vmatpush1.msra.mxu0 %v1933
    %4059 = vmatprep.subr.mxu0 0.0
    %4060 = vmatpush1.msra.mxu0 0.0
    %4061 = vmatprep.subr.mxu0 0.0
    %4062 = vmatpush1.msra.mxu0 0.0
    %4063 = vmatprep.subr.mxu0 0.0
    %4064 = vmatpush1.msra.mxu0 0.0
    %4065 = vmatprep.subr.mxu0 0.0
    %4066 = vmatpush1.msra.mxu0 0.0
    %4067 = vmatprep.subr.mxu0 0.0
    %4068 = vmatpush1.msra.mxu0 0.0
    %4069 = vmatprep.subr.mxu0 0.0
    %4070 = vmatpush1.msra.mxu0 0.0
    %4071 = vmatprep.subr.mxu0 0.0
    %4072 = vmatpush1.msra.mxu0 0.0
    %4073 = vmatprep.subr.mxu0 0.0
    %4074 = vmatpush1.msra.mxu0 0.0
    %4075 = vmatprep.subr.mxu0 0.0
    %4076 = vmatpush1.msra.mxu0 0.0
    %4077 = vmatprep.subr.mxu0 0.0
    %4078 = vmatpush1.msra.mxu0 0.0
    %4079 = vmatprep.subr.mxu0 0.0
    %4080 = vmatpush1.msra.mxu0 0.0
    %4081 = vmatprep.subr.mxu0 0.0
    %4082 = vmatpush1.msra.mxu0 0.0
    %4083 = vmatprep.subr.mxu0 0.0
    %4084 = vmatpush1.msra.mxu0 0.0
    %4085 = vmatprep.subr.mxu0 0.0
    %4086 = vmatpush1.msra.mxu0 0.0
    %4087 = vmatprep.subr.mxu0 0.0
    %4088 = vmatpush1.msra.mxu0 0.0
    %4089 = vmatprep.subr.mxu0 0.0
    %4090 = vmatpush1.msra.mxu0 0.0
    %4091 = vmatprep.subr.mxu0 0.0
    %4092 = vmatpush1.msra.mxu0 0.0
    %4093 = vmatprep.subr.mxu0 0.0
    %4094 = vmatpush1.msra.mxu0 0.0
    %4095 = vmatprep.subr.mxu0 0.0
    %4096 = vmatpush1.msra.mxu0 0.0
    %4097 = vmatprep.subr.mxu0 0.0
    %4098 = vmatpush1.msra.mxu0 0.0
    %4099 = vmatprep.subr.mxu0 0.0
    %4100 = vmatpush1.msra.mxu0 0.0
    %4101 = vmatprep.subr.mxu0 0.0
    %4102 = vmatpush1.msra.mxu0 0.0
    %4103 = vmatprep.subr.mxu0 0.0
    %4104 = vmatpush1.msra.mxu0 0.0
    %4105 = vmatprep.subr.mxu0 0.0
    %4106 = vmatpush1.msra.mxu0 0.0
    %4107 = vmatprep.subr.mxu0 0.0
    %4108 = vmatpush1.msra.mxu0 0.0
    %4109 = vmatprep.subr.mxu0 0.0
    %4110 = vmatpush1.msra.mxu0 0.0
    %4111 = vmatprep.subr.mxu0 0.0
    %4112 = vmatpush1.msra.mxu0 0.0
    %4113 = vmatprep.subr.mxu0 0.0
    %4114 = vmatpush1.msra.mxu0 0.0
    %4115 = vmatprep.subr.mxu0 0.0
    %4116 = vmatpush1.msra.mxu0 0.0
    %4117 = vmatprep.subr.mxu0 0.0
    %4118 = vmatpush1.msra.mxu0 0.0
    %4119 = vmatprep.subr.mxu0 0.0
    %4120 = vmatpush1.msra.mxu0 0.0
    %4121 = vmatprep.mubr.f32.mxu0 0.0
    %4122 = vmatmul.mubr.f32.gmra.mrb[0].mxu0 %v4055
    %v4123 = vpop.f32.mrb[0].mxu0
    %v4124 = vadd.f32 0.0, %v4123
    %v4125 = vpop.f32.mrb[0].mxu0
    %4126 = vdwg.mxu0
    %v4128 = vsel %vm2004, %v3391, 0
    %4130 = vmatprep.subr.mxu0 0.0
    %4131 = vmatpush1.msra.mxu0 %v1934
    %4132 = vmatprep.subr.mxu0 0.0
    %4133 = vmatpush1.msra.mxu0 0.0
    %4134 = vmatprep.subr.mxu0 0.0
    %4135 = vmatpush1.msra.mxu0 0.0
    %4136 = vmatprep.subr.mxu0 0.0
    %4137 = vmatpush1.msra.mxu0 0.0
    %4138 = vmatprep.subr.mxu0 0.0
    %4139 = vmatpush1.msra.mxu0 0.0
    %4140 = vmatprep.subr.mxu0 0.0
    %4141 = vmatpush1.msra.mxu0 0.0
    %4142 = vmatprep.subr.mxu0 0.0
    %4143 = vmatpush1.msra.mxu0 0.0
    %4144 = vmatprep.subr.mxu0 0.0
    %4145 = vmatpush1.msra.mxu0 0.0
    %4146 = vmatprep.subr.mxu0 0.0
    %4147 = vmatpush1.msra.mxu0 0.0
    %4148 = vmatprep.subr.mxu0 0.0
    %4149 = vmatpush1.msra.mxu0 0.0
    %4150 = vmatprep.subr.mxu0 0.0
    %4151 = vmatpush1.msra.mxu0 0.0
    %4152 = vmatprep.subr.mxu0 0.0
    %4153 = vmatpush1.msra.mxu0 0.0
    %4154 = vmatprep.subr.mxu0 0.0
    %4155 = vmatpush1.msra.mxu0 0.0
    %4156 = vmatprep.subr.mxu0 0.0
    %4157 = vmatpush1.msra.mxu0 0.0
    %4158 = vmatprep.subr.mxu0 0.0
    %4159 = vmatpush1.msra.mxu0 0.0
    %4160 = vmatprep.subr.mxu0 0.0
    %4161 = vmatpush1.msra.mxu0 0.0
    %4162 = vmatprep.subr.mxu0 0.0
    %4163 = vmatpush1.msra.mxu0 0.0
    %4164 = vmatprep.subr.mxu0 0.0
    %4165 = vmatpush1.msra.mxu0 0.0
    %4166 = vmatprep.subr.mxu0 0.0
    %4167 = vmatpush1.msra.mxu0 0.0
    %4168 = vmatprep.subr.mxu0 0.0
    %4169 = vmatpush1.msra.mxu0 0.0
    %4170 = vmatprep.subr.mxu0 0.0
    %4171 = vmatpush1.msra.mxu0 0.0
    %4172 = vmatprep.subr.mxu0 0.0
    %4173 = vmatpush1.msra.mxu0 0.0
    %4174 = vmatprep.subr.mxu0 0.0
    %4175 = vmatpush1.msra.mxu0 0.0
    %4176 = vmatprep.subr.mxu0 0.0
    %4177 = vmatpush1.msra.mxu0 0.0
    %4178 = vmatprep.subr.mxu0 0.0
    %4179 = vmatpush1.msra.mxu0 0.0
    %4180 = vmatprep.subr.mxu0 0.0
    %4181 = vmatpush1.msra.mxu0 0.0
    %4182 = vmatprep.subr.mxu0 0.0
    %4183 = vmatpush1.msra.mxu0 0.0
    %4184 = vmatprep.subr.mxu0 0.0
    %4185 = vmatpush1.msra.mxu0 0.0
    %4186 = vmatprep.subr.mxu0 0.0
    %4187 = vmatpush1.msra.mxu0 0.0
    %4188 = vmatprep.subr.mxu0 0.0
    %4189 = vmatpush1.msra.mxu0 0.0
    %4190 = vmatprep.subr.mxu0 0.0
    %4191 = vmatpush1.msra.mxu0 0.0
    %4192 = vmatprep.subr.mxu0 0.0
    %4193 = vmatpush1.msra.mxu0 0.0
    %4194 = vmatprep.mubr.f32.mxu0 0.0
    %4195 = vmatmul.mubr.f32.gmra.mrb[0].mxu0 %v4128
    %v4196 = vpop.f32.mrb[0].mxu0
    %v4197 = vadd.f32 0.0, %v4196
    %v4198 = vpop.f32.mrb[0].mxu0
    %4199 = vdwg.mxu0
    %v4201 = vsel %vm2004, %v3392, 0
    %4203 = vmatprep.subr.mxu0 0.0
    %4204 = vmatpush1.msra.mxu0 %v1935
    %4205 = vmatprep.subr.mxu0 0.0
    %4206 = vmatpush1.msra.mxu0 0.0
    %4207 = vmatprep.subr.mxu0 0.0
    %4208 = vmatpush1.msra.mxu0 0.0
    %4209 = vmatprep.subr.mxu0 0.0
    %4210 = vmatpush1.msra.mxu0 0.0
    %4211 = vmatprep.subr.mxu0 0.0
    %4212 = vmatpush1.msra.mxu0 0.0
    %4213 = vmatprep.subr.mxu0 0.0
    %4214 = vmatpush1.msra.mxu0 0.0
    %4215 = vmatprep.subr.mxu0 0.0
    %4216 = vmatpush1.msra.mxu0 0.0
    %4217 = vmatprep.subr.mxu0 0.0
    %4218 = vmatpush1.msra.mxu0 0.0
    %4219 = vmatprep.subr.mxu0 0.0
    %4220 = vmatpush1.msra.mxu0 0.0
    %4221 = vmatprep.subr.mxu0 0.0
    %4222 = vmatpush1.msra.mxu0 0.0
    %4223 = vmatprep.subr.mxu0 0.0
    %4224 = vmatpush1.msra.mxu0 0.0
    %4225 = vmatprep.subr.mxu0 0.0
    %4226 = vmatpush1.msra.mxu0 0.0
    %4227 = vmatprep.subr.mxu0 0.0
    %4228 = vmatpush1.msra.mxu0 0.0
    %4229 = vmatprep.subr.mxu0 0.0
    %4230 = vmatpush1.msra.mxu0 0.0
    %4231 = vmatprep.subr.mxu0 0.0
    %4232 = vmatpush1.msra.mxu0 0.0
    %4233 = vmatprep.subr.mxu0 0.0
    %4234 = vmatpush1.msra.mxu0 0.0
    %4235 = vmatprep.subr.mxu0 0.0
    %4236 = vmatpush1.msra.mxu0 0.0
    %4237 = vmatprep.subr.mxu0 0.0
    %4238 = vmatpush1.msra.mxu0 0.0
    %4239 = vmatprep.subr.mxu0 0.0
    %4240 = vmatpush1.msra.mxu0 0.0
    %4241 = vmatprep.subr.mxu0 0.0
    %4242 = vmatpush1.msra.mxu0 0.0
    %4243 = vmatprep.subr.mxu0 0.0
    %4244 = vmatpush1.msra.mxu0 0.0
    %4245 = vmatprep.subr.mxu0 0.0
    %4246 = vmatpush1.msra.mxu0 0.0
    %4247 = vmatprep.subr.mxu0 0.0
    %4248 = vmatpush1.msra.mxu0 0.0
    %4249 = vmatprep.subr.mxu0 0.0
    %4250 = vmatpush1.msra.mxu0 0.0
    %4251 = vmatprep.subr.mxu0 0.0
    %4252 = vmatpush1.msra.mxu0 0.0
    %4253 = vmatprep.subr.mxu0 0.0
    %4254 = vmatpush1.msra.mxu0 0.0
    %4255 = vmatprep.subr.mxu0 0.0
    %4256 = vmatpush1.msra.mxu0 0.0
    %4257 = vmatprep.subr.mxu0 0.0
    %4258 = vmatpush1.msra.mxu0 0.0
    %4259 = vmatprep.subr.mxu0 0.0
    %4260 = vmatpush1.msra.mxu0 0.0
    %4261 = vmatprep.subr.mxu0 0.0
    %4262 = vmatpush1.msra.mxu0 0.0
    %4263 = vmatprep.subr.mxu0 0.0
    %4264 = vmatpush1.msra.mxu0 0.0
    %4265 = vmatprep.subr.mxu0 0.0
    %4266 = vmatpush1.msra.mxu0 0.0
    %4267 = vmatprep.mubr.f32.mxu0 0.0
    %4268 = vmatmul.mubr.f32.gmra.mrb[0].mxu0 %v4201
    %v4269 = vpop.f32.mrb[0].mxu0
    %v4270 = vadd.f32 0.0, %v4269
    %v4271 = vpop.f32.mrb[0].mxu0
    %4272 = vdwg.mxu0
    %v4274 = vsel %vm2004, %v3393, 0
    %4276 = vmatprep.subr.mxu0 0.0
    %4277 = vmatpush1.msra.mxu0 %v2000
    %4278 = vmatprep.subr.mxu0 0.0
    %4279 = vmatpush1.msra.mxu0 0.0
    %4280 = vmatprep.subr.mxu0 0.0
    %4281 = vmatpush1.msra.mxu0 0.0
    %4282 = vmatprep.subr.mxu0 0.0
    %4283 = vmatpush1.msra.mxu0 0.0
    %4284 = vmatprep.subr.mxu0 0.0
    %4285 = vmatpush1.msra.mxu0 0.0
    %4286 = vmatprep.subr.mxu0 0.0
    %4287 = vmatpush1.msra.mxu0 0.0
    %4288 = vmatprep.subr.mxu0 0.0
    %4289 = vmatpush1.msra.mxu0 0.0
    %4290 = vmatprep.subr.mxu0 0.0
    %4291 = vmatpush1.msra.mxu0 0.0
    %4292 = vmatprep.subr.mxu0 0.0
    %4293 = vmatpush1.msra.mxu0 0.0
    %4294 = vmatprep.subr.mxu0 0.0
    %4295 = vmatpush1.msra.mxu0 0.0
    %4296 = vmatprep.subr.mxu0 0.0
    %4297 = vmatpush1.msra.mxu0 0.0
    %4298 = vmatprep.subr.mxu0 0.0
    %4299 = vmatpush1.msra.mxu0 0.0
    %4300 = vmatprep.subr.mxu0 0.0
    %4301 = vmatpush1.msra.mxu0 0.0
    %4302 = vmatprep.subr.mxu0 0.0
    %4303 = vmatpush1.msra.mxu0 0.0
    %4304 = vmatprep.subr.mxu0 0.0
    %4305 = vmatpush1.msra.mxu0 0.0
    %4306 = vmatprep.subr.mxu0 0.0
    %4307 = vmatpush1.msra.mxu0 0.0
    %4308 = vmatprep.subr.mxu0 0.0
    %4309 = vmatpush1.msra.mxu0 0.0
    %4310 = vmatprep.subr.mxu0 0.0
    %4311 = vmatpush1.msra.mxu0 0.0
    %4312 = vmatprep.subr.mxu0 0.0
    %4313 = vmatpush1.msra.mxu0 0.0
    %4314 = vmatprep.subr.mxu0 0.0
    %4315 = vmatpush1.msra.mxu0 0.0
    %4316 = vmatprep.subr.mxu0 0.0
    %4317 = vmatpush1.msra.mxu0 0.0
    %4318 = vmatprep.subr.mxu0 0.0
    %4319 = vmatpush1.msra.mxu0 0.0
    %4320 = vmatprep.subr.mxu0 0.0
    %4321 = vmatpush1.msra.mxu0 0.0
    %4322 = vmatprep.subr.mxu0 0.0
    %4323 = vmatpush1.msra.mxu0 0.0
    %4324 = vmatprep.subr.mxu0 0.0
    %4325 = vmatpush1.msra.mxu0 0.0
    %4326 = vmatprep.subr.mxu0 0.0
    %4327 = vmatpush1.msra.mxu0 0.0
    %4328 = vmatprep.subr.mxu0 0.0
    %4329 = vmatpush1.msra.mxu0 0.0
    %4330 = vmatprep.subr.mxu0 0.0
    %4331 = vmatpush1.msra.mxu0 0.0
    %4332 = vmatprep.subr.mxu0 0.0
    %4333 = vmatpush1.msra.mxu0 0.0
    %4334 = vmatprep.subr.mxu0 0.0
    %4335 = vmatpush1.msra.mxu0 0.0
    %4336 = vmatprep.subr.mxu0 0.0
    %4337 = vmatpush1.msra.mxu0 0.0
    %4338 = vmatprep.subr.mxu0 0.0
    %4339 = vmatpush1.msra.mxu0 0.0
    %4340 = vmatprep.mubr.f32.mxu0 0.0
    %4341 = vmatmul.mubr.f32.gmra.mrb[0].mxu0 %v4274
    %v4342 = vpop.f32.mrb[0].mxu0
    %v4343 = vadd.f32 0.0, %v4342
    %v4344 = vpop.f32.mrb[0].mxu0
    %4345 = vdwg.mxu0
    %v4347 = vsel %vm2004, %v3394, 0
    %4349 = vmatprep.subr.mxu0 0.0
    %4350 = vmatpush1.msra.mxu0 %v2001
    %4351 = vmatprep.subr.mxu0 0.0
    %4352 = vmatpush1.msra.mxu0 0.0
    %4353 = vmatprep.subr.mxu0 0.0
    %4354 = vmatpush1.msra.mxu0 0.0
    %4355 = vmatprep.subr.mxu0 0.0
    %4356 = vmatpush1.msra.mxu0 0.0
    %4357 = vmatprep.subr.mxu0 0.0
    %4358 = vmatpush1.msra.mxu0 0.0
    %4359 = vmatprep.subr.mxu0 0.0
    %4360 = vmatpush1.msra.mxu0 0.0
    %4361 = vmatprep.subr.mxu0 0.0
    %4362 = vmatpush1.msra.mxu0 0.0
    %4363 = vmatprep.subr.mxu0 0.0
    %4364 = vmatpush1.msra.mxu0 0.0
    %4365 = vmatprep.subr.mxu0 0.0
    %4366 = vmatpush1.msra.mxu0 0.0
    %4367 = vmatprep.subr.mxu0 0.0
    %4368 = vmatpush1.msra.mxu0 0.0
    %4369 = vmatprep.subr.mxu0 0.0
    %4370 = vmatpush1.msra.mxu0 0.0
    %4371 = vmatprep.subr.mxu0 0.0
    %4372 = vmatpush1.msra.mxu0 0.0
    %4373 = vmatprep.subr.mxu0 0.0
    %4374 = vmatpush1.msra.mxu0 0.0
    %4375 = vmatprep.subr.mxu0 0.0
    %4376 = vmatpush1.msra.mxu0 0.0
    %4377 = vmatprep.subr.mxu0 0.0
    %4378 = vmatpush1.msra.mxu0 0.0
    %4379 = vmatprep.subr.mxu0 0.0
    %4380 = vmatpush1.msra.mxu0 0.0
    %4381 = vmatprep.subr.mxu0 0.0
    %4382 = vmatpush1.msra.mxu0 0.0
    %4383 = vmatprep.subr.mxu0 0.0
    %4384 = vmatpush1.msra.mxu0 0.0
    %4385 = vmatprep.subr.mxu0 0.0
    %4386 = vmatpush1.msra.mxu0 0.0
    %4387 = vmatprep.subr.mxu0 0.0
    %4388 = vmatpush1.msra.mxu0 0.0
    %4389 = vmatprep.subr.mxu0 0.0
    %4390 = vmatpush1.msra.mxu0 0.0
    %4391 = vmatprep.subr.mxu0 0.0
    %4392 = vmatpush1.msra.mxu0 0.0
    %4393 = vmatprep.subr.mxu0 0.0
    %4394 = vmatpush1.msra.mxu0 0.0
    %4395 = vmatprep.subr.mxu0 0.0
    %4396 = vmatpush1.msra.mxu0 0.0
    %4397 = vmatprep.subr.mxu0 0.0
    %4398 = vmatpush1.msra.mxu0 0.0
    %4399 = vmatprep.subr.mxu0 0.0
    %4400 = vmatpush1.msra.mxu0 0.0
    %4401 = vmatprep.subr.mxu0 0.0
    %4402 = vmatpush1.msra.mxu0 0.0
    %4403 = vmatprep.subr.mxu0 0.0
    %4404 = vmatpush1.msra.mxu0 0.0
    %4405 = vmatprep.subr.mxu0 0.0
    %4406 = vmatpush1.msra.mxu0 0.0
    %4407 = vmatprep.subr.mxu0 0.0
    %4408 = vmatpush1.msra.mxu0 0.0
    %4409 = vmatprep.subr.mxu0 0.0
    %4410 = vmatpush1.msra.mxu0 0.0
    %4411 = vmatprep.subr.mxu0 0.0
    %4412 = vmatpush1.msra.mxu0 0.0
    %4413 = vmatprep.mubr.f32.mxu0 0.0
    %4414 = vmatmul.mubr.f32.gmra.mrb[0].mxu0 %v4347
    %v4415 = vpop.f32.mrb[0].mxu0
    %v4416 = vadd.f32 0.0, %v4415
    %v4417 = vpop.f32.mrb[0].mxu0
    %4418 = vdwg.mxu0
    %v4420 = vsel %vm2004, %v3395, 0
    %4422 = vmatprep.subr.mxu0 0.0
    %4423 = vmatpush1.msra.mxu0 %v2002
    %4424 = vmatprep.subr.mxu0 0.0
    %4425 = vmatpush1.msra.mxu0 0.0
    %4426 = vmatprep.subr.mxu0 0.0
    %4427 = vmatpush1.msra.mxu0 0.0
    %4428 = vmatprep.subr.mxu0 0.0
    %4429 = vmatpush1.msra.mxu0 0.0
    %4430 = vmatprep.subr.mxu0 0.0
    %4431 = vmatpush1.msra.mxu0 0.0
    %4432 = vmatprep.subr.mxu0 0.0
    %4433 = vmatpush1.msra.mxu0 0.0
    %4434 = vmatprep.subr.mxu0 0.0
    %4435 = vmatpush1.msra.mxu0 0.0
    %4436 = vmatprep.subr.mxu0 0.0
    %4437 = vmatpush1.msra.mxu0 0.0
    %4438 = vmatprep.subr.mxu0 0.0
    %4439 = vmatpush1.msra.mxu0 0.0
    %4440 = vmatprep.subr.mxu0 0.0
    %4441 = vmatpush1.msra.mxu0 0.0
    %4442 = vmatprep.subr.mxu0 0.0
    %4443 = vmatpush1.msra.mxu0 0.0
    %4444 = vmatprep.subr.mxu0 0.0
    %4445 = vmatpush1.msra.mxu0 0.0
    %4446 = vmatprep.subr.mxu0 0.0
    %4447 = vmatpush1.msra.mxu0 0.0
    %4448 = vmatprep.subr.mxu0 0.0
    %4449 = vmatpush1.msra.mxu0 0.0
    %4450 = vmatprep.subr.mxu0 0.0
    %4451 = vmatpush1.msra.mxu0 0.0
    %4452 = vmatprep.subr.mxu0 0.0
    %4453 = vmatpush1.msra.mxu0 0.0
    %4454 = vmatprep.subr.mxu0 0.0
    %4455 = vmatpush1.msra.mxu0 0.0
    %4456 = vmatprep.subr.mxu0 0.0
    %4457 = vmatpush1.msra.mxu0 0.0
    %4458 = vmatprep.subr.mxu0 0.0
    %4459 = vmatpush1.msra.mxu0 0.0
    %4460 = vmatprep.subr.mxu0 0.0
    %4461 = vmatpush1.msra.mxu0 0.0
    %4462 = vmatprep.subr.mxu0 0.0
    %4463 = vmatpush1.msra.mxu0 0.0
    %4464 = vmatprep.subr.mxu0 0.0
    %4465 = vmatpush1.msra.mxu0 0.0
    %4466 = vmatprep.subr.mxu0 0.0
    %4467 = vmatpush1.msra.mxu0 0.0
    %4468 = vmatprep.subr.mxu0 0.0
    %4469 = vmatpush1.msra.mxu0 0.0
    %4470 = vmatprep.subr.mxu0 0.0
    %4471 = vmatpush1.msra.mxu0 0.0
    %4472 = vmatprep.subr.mxu0 0.0
    %4473 = vmatpush1.msra.mxu0 0.0
    %4474 = vmatprep.subr.mxu0 0.0
    %4475 = vmatpush1.msra.mxu0 0.0
    %4476 = vmatprep.subr.mxu0 0.0
    %4477 = vmatpush1.msra.mxu0 0.0
    %4478 = vmatprep.subr.mxu0 0.0
    %4479 = vmatpush1.msra.mxu0 0.0
    %4480 = vmatprep.subr.mxu0 0.0
    %4481 = vmatpush1.msra.mxu0 0.0
    %4482 = vmatprep.subr.mxu0 0.0
    %4483 = vmatpush1.msra.mxu0 0.0
    %4484 = vmatprep.subr.mxu0 0.0
    %4485 = vmatpush1.msra.mxu0 0.0
    %4486 = vmatprep.mubr.f32.mxu0 0.0
    %4487 = vmatmul.mubr.f32.gmra.mrb[0].mxu0 %v4420
    %v4488 = vpop.f32.mrb[0].mxu0
    %v4489 = vadd.f32 0.0, %v4488
    %v4490 = vpop.f32.mrb[0].mxu0
    %4491 = vdwg.mxu0
    %v4493 = vsel %vm2004, %v3396, 0
    %4495 = vmatprep.subr.mxu0 0.0
    %4496 = vmatpush1.msra.mxu0 %v2003
    %4497 = vmatprep.subr.mxu0 0.0
    %4498 = vmatpush1.msra.mxu0 0.0
    %4499 = vmatprep.subr.mxu0 0.0
    %4500 = vmatpush1.msra.mxu0 0.0
    %4501 = vmatprep.subr.mxu0 0.0
    %4502 = vmatpush1.msra.mxu0 0.0
    %4503 = vmatprep.subr.mxu0 0.0
    %4504 = vmatpush1.msra.mxu0 0.0
    %4505 = vmatprep.subr.mxu0 0.0
    %4506 = vmatpush1.msra.mxu0 0.0
    %4507 = vmatprep.subr.mxu0 0.0
    %4508 = vmatpush1.msra.mxu0 0.0
    %4509 = vmatprep.subr.mxu0 0.0
    %4510 = vmatpush1.msra.mxu0 0.0
    %4511 = vmatprep.subr.mxu0 0.0
    %4512 = vmatpush1.msra.mxu0 0.0
    %4513 = vmatprep.subr.mxu0 0.0
    %4514 = vmatpush1.msra.mxu0 0.0
    %4515 = vmatprep.subr.mxu0 0.0
    %4516 = vmatpush1.msra.mxu0 0.0
    %4517 = vmatprep.subr.mxu0 0.0
    %4518 = vmatpush1.msra.mxu0 0.0
    %4519 = vmatprep.subr.mxu0 0.0
    %4520 = vmatpush1.msra.mxu0 0.0
    %4521 = vmatprep.subr.mxu0 0.0
    %4522 = vmatpush1.msra.mxu0 0.0
    %4523 = vmatprep.subr.mxu0 0.0
    %4524 = vmatpush1.msra.mxu0 0.0
    %4525 = vmatprep.subr.mxu0 0.0
    %4526 = vmatpush1.msra.mxu0 0.0
    %4527 = vmatprep.subr.mxu0 0.0
    %4528 = vmatpush1.msra.mxu0 0.0
    %4529 = vmatprep.subr.mxu0 0.0
    %4530 = vmatpush1.msra.mxu0 0.0
    %4531 = vmatprep.subr.mxu0 0.0
    %4532 = vmatpush1.msra.mxu0 0.0
    %4533 = vmatprep.subr.mxu0 0.0
    %4534 = vmatpush1.msra.mxu0 0.0
    %4535 = vmatprep.subr.mxu0 0.0
    %4536 = vmatpush1.msra.mxu0 0.0
    %4537 = vmatprep.subr.mxu0 0.0
    %4538 = vmatpush1.msra.mxu0 0.0
    %4539 = vmatprep.subr.mxu0 0.0
    %4540 = vmatpush1.msra.mxu0 0.0
    %4541 = vmatprep.subr.mxu0 0.0
    %4542 = vmatpush1.msra.mxu0 0.0
    %4543 = vmatprep.subr.mxu0 0.0
    %4544 = vmatpush1.msra.mxu0 0.0
    %4545 = vmatprep.subr.mxu0 0.0
    %4546 = vmatpush1.msra.mxu0 0.0
    %4547 = vmatprep.subr.mxu0 0.0
    %4548 = vmatpush1.msra.mxu0 0.0
    %4549 = vmatprep.subr.mxu0 0.0
    %4550 = vmatpush1.msra.mxu0 0.0
    %4551 = vmatprep.subr.mxu0 0.0
    %4552 = vmatpush1.msra.mxu0 0.0
    %4553 = vmatprep.subr.mxu0 0.0
    %4554 = vmatpush1.msra.mxu0 0.0
    %4555 = vmatprep.subr.mxu0 0.0
    %4556 = vmatpush1.msra.mxu0 0.0
    %4557 = vmatprep.subr.mxu0 0.0
    %4558 = vmatpush1.msra.mxu0 0.0
    %4559 = vmatprep.mubr.f32.mxu0 0.0
    %4560 = vmatmul.mubr.f32.gmra.mrb[0].mxu0 %v4493
    %v4561 = vpop.f32.mrb[0].mxu0
    %v4562 = vadd.f32 0.0, %v4561
    %v4563 = vpop.f32.mrb[0].mxu0
    %4564 = vdwg.mxu0
    %v4565 = vcombine.low %v3467, %v3613
    %v4566 = vcombine.high %v3467, %v3613
    %v4568 = vunpack.c.l.s4 1983009808
    %v4569 = vunpack.c.0.s8 %v4568
    %v4570 = vlaneseq
    %v4571 = vshrl.u32 %v4570, 7
    %v4572 = vsub.s32 %v4569, %v4571
    %v4573 = vrot.slane %v4565, %v4572
    %v4575 = vunpack.c.l.s4 1983009808
    %v4576 = vunpack.c.0.s8 %v4575
    %v4577 = vlaneseq
    %v4578 = vshrl.u32 %v4577, 7
    %v4579 = vsub.s32 %v4576, %v4578
    %v4580 = vrot.slane %v4566, %v4579
    %v4581 = vcombine.low %v3540, %v3686
    %v4582 = vcombine.high %v3540, %v3686
    %v4584 = vunpack.c.l.s4 1983009808
    %v4585 = vunpack.c.0.s8 %v4584
    %v4586 = vlaneseq
    %v4587 = vshrl.u32 %v4586, 7
    %v4588 = vsub.s32 %v4585, %v4587
    %v4589 = vrot.slane %v4581, %v4588
    %v4591 = vunpack.c.l.s4 1983009808
    %v4592 = vunpack.c.0.s8 %v4591
    %v4593 = vlaneseq
    %v4594 = vshrl.u32 %v4593, 7
    %v4595 = vsub.s32 %v4592, %v4594
    %v4596 = vrot.slane %v4582, %v4595
    %v4597 = vcombine.low %v4573, %v4589
    %v4598 = vcombine.high %v4573, %v4589
    %v4600 = vunpack.c.l.s4 1934713408
    %v4601 = vunpack.c.0.s8 %v4600
    %v4602 = vlaneseq
    %v4603 = vshrl.u32 %v4602, 7
    %v4604 = vsub.s32 %v4601, %v4603
    %v4605 = vrot.slane %v4597, %v4604
    %v4607 = vunpack.c.l.s4 1934713408
    %v4608 = vunpack.c.0.s8 %v4607
    %v4609 = vlaneseq
    %v4610 = vshrl.u32 %v4609, 7
    %v4611 = vsub.s32 %v4608, %v4610
    %v4612 = vrot.slane %v4598, %v4611
    %v4613 = vcombine.low %v4580, %v4596
    %v4614 = vcombine.high %v4580, %v4596
    %v4616 = vunpack.c.l.s4 1934713408
    %v4617 = vunpack.c.0.s8 %v4616
    %v4618 = vlaneseq
    %v4619 = vshrl.u32 %v4618, 7
    %v4620 = vsub.s32 %v4617, %v4619
    %v4621 = vrot.slane %v4613, %v4620
    %v4623 = vunpack.c.l.s4 1934713408
    %v4624 = vunpack.c.0.s8 %v4623
    %v4625 = vlaneseq
    %v4626 = vshrl.u32 %v4625, 7
    %v4627 = vsub.s32 %v4624, %v4626
    %v4628 = vrot.slane %v4614, %v4627
    %v4629 = vcombine.high %v4605, 0.0
    %v4630 = vcombine.high %v4612, 0.0
    %v4631 = vcombine.high %v4621, 0.0
    %v4632 = vcombine.high %v4628, 0.0
    %v4633 = vcombine.low %v3759, %v3905
    %v4634 = vcombine.high %v3759, %v3905
    %v4636 = vunpack.c.l.s4 1983009808
    %v4637 = vunpack.c.0.s8 %v4636
    %v4638 = vlaneseq
    %v4639 = vshrl.u32 %v4638, 7
    %v4640 = vsub.s32 %v4637, %v4639
    %v4641 = vrot.slane %v4633, %v4640
    %v4643 = vunpack.c.l.s4 1983009808
    %v4644 = vunpack.c.0.s8 %v4643
    %v4645 = vlaneseq
    %v4646 = vshrl.u32 %v4645, 7
    %v4647 = vsub.s32 %v4644, %v4646
    %v4648 = vrot.slane %v4634, %v4647
    %v4649 = vcombine.low %v3832, %v3978
    %v4650 = vcombine.high %v3832, %v3978
    %v4652 = vunpack.c.l.s4 1983009808
    %v4653 = vunpack.c.0.s8 %v4652
    %v4654 = vlaneseq
    %v4655 = vshrl.u32 %v4654, 7
    %v4656 = vsub.s32 %v4653, %v4655
    %v4657 = vrot.slane %v4649, %v4656
    %v4659 = vunpack.c.l.s4 1983009808
    %v4660 = vunpack.c.0.s8 %v4659
    %v4661 = vlaneseq
    %v4662 = vshrl.u32 %v4661, 7
    %v4663 = vsub.s32 %v4660, %v4662
    %v4664 = vrot.slane %v4650, %v4663
    %v4665 = vcombine.low %v4641, %v4657
    %v4666 = vcombine.high %v4641, %v4657
    %v4668 = vunpack.c.l.s4 1934713408
    %v4669 = vunpack.c.0.s8 %v4668
    %v4670 = vlaneseq
    %v4671 = vshrl.u32 %v4670, 7
    %v4672 = vsub.s32 %v4669, %v4671
    %v4673 = vrot.slane %v4665, %v4672
    %v4675 = vunpack.c.l.s4 1934713408
    %v4676 = vunpack.c.0.s8 %v4675
    %v4677 = vlaneseq
    %v4678 = vshrl.u32 %v4677, 7
    %v4679 = vsub.s32 %v4676, %v4678
    %v4680 = vrot.slane %v4666, %v4679
    %v4681 = vcombine.low %v4648, %v4664
    %v4682 = vcombine.high %v4648, %v4664
    %v4684 = vunpack.c.l.s4 1934713408
    %v4685 = vunpack.c.0.s8 %v4684
    %v4686 = vlaneseq
    %v4687 = vshrl.u32 %v4686, 7
    %v4688 = vsub.s32 %v4685, %v4687
    %v4689 = vrot.slane %v4681, %v4688
    %v4691 = vunpack.c.l.s4 1934713408
    %v4692 = vunpack.c.0.s8 %v4691
    %v4693 = vlaneseq
    %v4694 = vshrl.u32 %v4693, 7
    %v4695 = vsub.s32 %v4692, %v4694
    %v4696 = vrot.slane %v4682, %v4695
    %v4697 = vcombine.high %v4673, 0.0
    %v4698 = vcombine.high %v4680, 0.0
    %v4699 = vcombine.high %v4689, 0.0
    %v4700 = vcombine.high %v4696, 0.0
    %v4701 = vcombine.low %v4051, %v4197
    %v4702 = vcombine.high %v4051, %v4197
    %v4704 = vunpack.c.l.s4 1983009808
    %v4705 = vunpack.c.0.s8 %v4704
    %v4706 = vlaneseq
    %v4707 = vshrl.u32 %v4706, 7
    %v4708 = vsub.s32 %v4705, %v4707
    %v4709 = vrot.slane %v4701, %v4708
    %v4711 = vunpack.c.l.s4 1983009808
    %v4712 = vunpack.c.0.s8 %v4711
    %v4713 = vlaneseq
    %v4714 = vshrl.u32 %v4713, 7
    %v4715 = vsub.s32 %v4712, %v4714
    %v4716 = vrot.slane %v4702, %v4715
    %v4717 = vcombine.low %v4124, %v4270
    %v4718 = vcombine.high %v4124, %v4270
    %v4720 = vunpack.c.l.s4 1983009808
    %v4721 = vunpack.c.0.s8 %v4720
    %v4722 = vlaneseq
    %v4723 = vshrl.u32 %v4722, 7
    %v4724 = vsub.s32 %v4721, %v4723
    %v4725 = vrot.slane %v4717, %v4724
    %v4727 = vunpack.c.l.s4 1983009808
    %v4728 = vunpack.c.0.s8 %v4727
    %v4729 = vlaneseq
    %v4730 = vshrl.u32 %v4729, 7
    %v4731 = vsub.s32 %v4728, %v4730
    %v4732 = vrot.slane %v4718, %v4731
    %v4733 = vcombine.low %v4709, %v4725
    %v4734 = vcombine.high %v4709, %v4725
    %v4736 = vunpack.c.l.s4 1934713408
    %v4737 = vunpack.c.0.s8 %v4736
    %v4738 = vlaneseq
    %v4739 = vshrl.u32 %v4738, 7
    %v4740 = vsub.s32 %v4737, %v4739
    %v4741 = vrot.slane %v4733, %v4740
    %v4743 = vunpack.c.l.s4 1934713408
    %v4744 = vunpack.c.0.s8 %v4743
    %v4745 = vlaneseq
    %v4746 = vshrl.u32 %v4745, 7
    %v4747 = vsub.s32 %v4744, %v4746
    %v4748 = vrot.slane %v4734, %v4747
    %v4749 = vcombine.low %v4716, %v4732
    %v4750 = vcombine.high %v4716, %v4732
    %v4752 = vunpack.c.l.s4 1934713408
    %v4753 = vunpack.c.0.s8 %v4752
    %v4754 = vlaneseq
    %v4755 = vshrl.u32 %v4754, 7
    %v4756 = vsub.s32 %v4753, %v4755
    %v4757 = vrot.slane %v4749, %v4756
    %v4759 = vunpack.c.l.s4 1934713408
    %v4760 = vunpack.c.0.s8 %v4759
    %v4761 = vlaneseq
    %v4762 = vshrl.u32 %v4761, 7
    %v4763 = vsub.s32 %v4760, %v4762
    %v4764 = vrot.slane %v4750, %v4763
    %v4765 = vcombine.high %v4741, 0.0
    %v4766 = vcombine.high %v4748, 0.0
    %v4767 = vcombine.high %v4757, 0.0
    %v4768 = vcombine.high %v4764, 0.0
    %v4769 = vcombine.low %v4343, %v4489
    %v4770 = vcombine.high %v4343, %v4489
    %v4772 = vunpack.c.l.s4 1983009808
    %v4773 = vunpack.c.0.s8 %v4772
    %v4774 = vlaneseq
    %v4775 = vshrl.u32 %v4774, 7
    %v4776 = vsub.s32 %v4773, %v4775
    %v4777 = vrot.slane %v4769, %v4776
    %v4779 = vunpack.c.l.s4 1983009808
    %v4780 = vunpack.c.0.s8 %v4779
    %v4781 = vlaneseq
    %v4782 = vshrl.u32 %v4781, 7
    %v4783 = vsub.s32 %v4780, %v4782
    %v4784 = vrot.slane %v4770, %v4783
    %v4785 = vcombine.low %v4416, %v4562
    %v4786 = vcombine.high %v4416, %v4562
    %v4788 = vunpack.c.l.s4 1983009808
    %v4789 = vunpack.c.0.s8 %v4788
    %v4790 = vlaneseq
    %v4791 = vshrl.u32 %v4790, 7
    %v4792 = vsub.s32 %v4789, %v4791
    %v4793 = vrot.slane %v4785, %v4792
    %v4795 = vunpack.c.l.s4 1983009808
    %v4796 = vunpack.c.0.s8 %v4795
    %v4797 = vlaneseq
    %v4798 = vshrl.u32 %v4797, 7
    %v4799 = vsub.s32 %v4796, %v4798
    %v4800 = vrot.slane %v4786, %v4799
    %v4801 = vcombine.low %v4777, %v4793
    %v4802 = vcombine.high %v4777, %v4793
    %v4804 = vunpack.c.l.s4 1934713408
    %v4805 = vunpack.c.0.s8 %v4804
    %v4806 = vlaneseq
    %v4807 = vshrl.u32 %v4806, 7
    %v4808 = vsub.s32 %v4805, %v4807
    %v4809 = vrot.slane %v4801, %v4808
    %v4811 = vunpack.c.l.s4 1934713408
    %v4812 = vunpack.c.0.s8 %v4811
    %v4813 = vlaneseq
    %v4814 = vshrl.u32 %v4813, 7
    %v4815 = vsub.s32 %v4812, %v4814
    %v4816 = vrot.slane %v4802, %v4815
    %v4817 = vcombine.low %v4784, %v4800
    %v4818 = vcombine.high %v4784, %v4800
    %v4820 = vunpack.c.l.s4 1934713408
    %v4821 = vunpack.c.0.s8 %v4820
    %v4822 = vlaneseq
    %v4823 = vshrl.u32 %v4822, 7
    %v4824 = vsub.s32 %v4821, %v4823
    %v4825 = vrot.slane %v4817, %v4824
    %v4827 = vunpack.c.l.s4 1934713408
    %v4828 = vunpack.c.0.s8 %v4827
    %v4829 = vlaneseq
    %v4830 = vshrl.u32 %v4829, 7
    %v4831 = vsub.s32 %v4828, %v4830
    %v4832 = vrot.slane %v4818, %v4831
    %v4833 = vcombine.high %v4809, 0.0
    %v4834 = vcombine.high %v4816, 0.0
    %v4835 = vcombine.high %v4825, 0.0
    %v4836 = vcombine.high %v4832, 0.0
    %v4837 = vcombine.low %v4605, %v4612
    %v4839 = vunpack.c.l.s4 1983009808
    %v4840 = vunpack.c.0.s8 %v4839
    %v4841 = vlaneseq
    %v4842 = vshrl.u32 %v4841, 7
    %v4843 = vsub.s32 %v4840, %v4842
    %v4844 = vrot.slane %v4837, %v4843
    %v4845 = vcombine.low %v4629, %v4630
    %v4847 = vunpack.c.l.s4 1983009808
    %v4848 = vunpack.c.0.s8 %v4847
    %v4849 = vlaneseq
    %v4850 = vshrl.u32 %v4849, 7
    %v4851 = vsub.s32 %v4848, %v4850
    %v4852 = vrot.slane %v4845, %v4851
    %v4853 = vcombine.low %v4621, %v4628
    %v4855 = vunpack.c.l.s4 1983009808
    %v4856 = vunpack.c.0.s8 %v4855
    %v4857 = vlaneseq
    %v4858 = vshrl.u32 %v4857, 7
    %v4859 = vsub.s32 %v4856, %v4858
    %v4860 = vrot.slane %v4853, %v4859
    %v4861 = vcombine.low %v4631, %v4632
    %v4863 = vunpack.c.l.s4 1983009808
    %v4864 = vunpack.c.0.s8 %v4863
    %v4865 = vlaneseq
    %v4866 = vshrl.u32 %v4865, 7
    %v4867 = vsub.s32 %v4864, %v4866
    %v4868 = vrot.slane %v4861, %v4867
    %v4869 = vcombine.low %v4844, %v4852
    %v4870 = vcombine.high %v4844, %v4852
    %v4872 = vunpack.c.l.s4 1934713408
    %v4873 = vunpack.c.0.s8 %v4872
    %v4874 = vlaneseq
    %v4875 = vshrl.u32 %v4874, 7
    %v4876 = vsub.s32 %v4873, %v4875
    %v4877 = vrot.slane %v4869, %v4876
    %v4879 = vunpack.c.l.s4 1934713408
    %v4880 = vunpack.c.0.s8 %v4879
    %v4881 = vlaneseq
    %v4882 = vshrl.u32 %v4881, 7
    %v4883 = vsub.s32 %v4880, %v4882
    %v4884 = vrot.slane %v4870, %v4883
    %v4885 = vcombine.low %v4860, %v4868
    %v4886 = vcombine.high %v4860, %v4868
    %v4888 = vunpack.c.l.s4 1934713408
    %v4889 = vunpack.c.0.s8 %v4888
    %v4890 = vlaneseq
    %v4891 = vshrl.u32 %v4890, 7
    %v4892 = vsub.s32 %v4889, %v4891
    %v4893 = vrot.slane %v4885, %v4892
    %v4895 = vunpack.c.l.s4 1934713408
    %v4896 = vunpack.c.0.s8 %v4895
    %v4897 = vlaneseq
    %v4898 = vshrl.u32 %v4897, 7
    %v4899 = vsub.s32 %v4896, %v4898
    %v4900 = vrot.slane %v4886, %v4899
    %v4901 = vcombine.low %v4877, %v4893
    %v4902 = vcombine.high %v4877, %v4893
    %v4903 = vcombine.low %v4884, %v4900
    %v4904 = vcombine.high %v4884, %v4900
    %v4905 = vcombine.low %v4673, %v4680
    %v4907 = vunpack.c.l.s4 1983009808
    %v4908 = vunpack.c.0.s8 %v4907
    %v4909 = vlaneseq
    %v4910 = vshrl.u32 %v4909, 7
    %v4911 = vsub.s32 %v4908, %v4910
    %v4912 = vrot.slane %v4905, %v4911
    %v4913 = vcombine.low %v4697, %v4698
    %v4915 = vunpack.c.l.s4 1983009808
    %v4916 = vunpack.c.0.s8 %v4915
    %v4917 = vlaneseq
    %v4918 = vshrl.u32 %v4917, 7
    %v4919 = vsub.s32 %v4916, %v4918
    %v4920 = vrot.slane %v4913, %v4919
    %v4921 = vcombine.low %v4689, %v4696
    %v4923 = vunpack.c.l.s4 1983009808
    %v4924 = vunpack.c.0.s8 %v4923
    %v4925 = vlaneseq
    %v4926 = vshrl.u32 %v4925, 7
    %v4927 = vsub.s32 %v4924, %v4926
    %v4928 = vrot.slane %v4921, %v4927
    %v4929 = vcombine.low %v4699, %v4700
    %v4931 = vunpack.c.l.s4 1983009808
    %v4932 = vunpack.c.0.s8 %v4931
    %v4933 = vlaneseq
    %v4934 = vshrl.u32 %v4933, 7
    %v4935 = vsub.s32 %v4932, %v4934
    %v4936 = vrot.slane %v4929, %v4935
    %v4937 = vcombine.low %v4912, %v4920
    %v4938 = vcombine.high %v4912, %v4920
    %v4940 = vunpack.c.l.s4 1934713408
    %v4941 = vunpack.c.0.s8 %v4940
    %v4942 = vlaneseq
    %v4943 = vshrl.u32 %v4942, 7
    %v4944 = vsub.s32 %v4941, %v4943
    %v4945 = vrot.slane %v4937, %v4944
    %v4947 = vunpack.c.l.s4 1934713408
    %v4948 = vunpack.c.0.s8 %v4947
    %v4949 = vlaneseq
    %v4950 = vshrl.u32 %v4949, 7
    %v4951 = vsub.s32 %v4948, %v4950
    %v4952 = vrot.slane %v4938, %v4951
    %v4953 = vcombine.low %v4928, %v4936
    %v4954 = vcombine.high %v4928, %v4936
    %v4956 = vunpack.c.l.s4 1934713408
    %v4957 = vunpack.c.0.s8 %v4956
    %v4958 = vlaneseq
    %v4959 = vshrl.u32 %v4958, 7
    %v4960 = vsub.s32 %v4957, %v4959
    %v4961 = vrot.slane %v4953, %v4960
    %v4963 = vunpack.c.l.s4 1934713408
    %v4964 = vunpack.c.0.s8 %v4963
    %v4965 = vlaneseq
    %v4966 = vshrl.u32 %v4965, 7
    %v4967 = vsub.s32 %v4964, %v4966
    %v4968 = vrot.slane %v4954, %v4967
    %v4969 = vcombine.low %v4945, %v4961
    %v4970 = vcombine.high %v4945, %v4961
    %v4971 = vcombine.low %v4952, %v4968
    %v4972 = vcombine.high %v4952, %v4968
    %v4973 = vcombine.low %v4741, %v4748
    %v4975 = vunpack.c.l.s4 1983009808
    %v4976 = vunpack.c.0.s8 %v4975
    %v4977 = vlaneseq
    %v4978 = vshrl.u32 %v4977, 7
    %v4979 = vsub.s32 %v4976, %v4978
    %v4980 = vrot.slane %v4973, %v4979
    %v4981 = vcombine.low %v4765, %v4766
    %v4983 = vunpack.c.l.s4 1983009808
    %v4984 = vunpack.c.0.s8 %v4983
    %v4985 = vlaneseq
    %v4986 = vshrl.u32 %v4985, 7
    %v4987 = vsub.s32 %v4984, %v4986
    %v4988 = vrot.slane %v4981, %v4987
    %v4989 = vcombine.low %v4757, %v4764
    %v4991 = vunpack.c.l.s4 1983009808
    %v4992 = vunpack.c.0.s8 %v4991
    %v4993 = vlaneseq
    %v4994 = vshrl.u32 %v4993, 7
    %v4995 = vsub.s32 %v4992, %v4994
    %v4996 = vrot.slane %v4989, %v4995
    %v4997 = vcombine.low %v4767, %v4768
    %v4999 = vunpack.c.l.s4 1983009808
    %v5000 = vunpack.c.0.s8 %v4999
    %v5001 = vlaneseq
    %v5002 = vshrl.u32 %v5001, 7
    %v5003 = vsub.s32 %v5000, %v5002
    %v5004 = vrot.slane %v4997, %v5003
    %v5005 = vcombine.low %v4980, %v4988
    %v5006 = vcombine.high %v4980, %v4988
    %v5008 = vunpack.c.l.s4 1934713408
    %v5009 = vunpack.c.0.s8 %v5008
    %v5010 = vlaneseq
    %v5011 = vshrl.u32 %v5010, 7
    %v5012 = vsub.s32 %v5009, %v5011
    %v5013 = vrot.slane %v5005, %v5012
    %v5015 = vunpack.c.l.s4 1934713408
    %v5016 = vunpack.c.0.s8 %v5015
    %v5017 = vlaneseq
    %v5018 = vshrl.u32 %v5017, 7
    %v5019 = vsub.s32 %v5016, %v5018
    %v5020 = vrot.slane %v5006, %v5019
    %v5021 = vcombine.low %v4996, %v5004
    %v5022 = vcombine.high %v4996, %v5004
    %v5024 = vunpack.c.l.s4 1934713408
    %v5025 = vunpack.c.0.s8 %v5024
    %v5026 = vlaneseq
    %v5027 = vshrl.u32 %v5026, 7
    %v5028 = vsub.s32 %v5025, %v5027
    %v5029 = vrot.slane %v5021, %v5028
    %v5031 = vunpack.c.l.s4 1934713408
    %v5032 = vunpack.c.0.s8 %v5031
    %v5033 = vlaneseq
    %v5034 = vshrl.u32 %v5033, 7
    %v5035 = vsub.s32 %v5032, %v5034
    %v5036 = vrot.slane %v5022, %v5035
    %v5037 = vcombine.low %v5013, %v5029
    %v5038 = vcombine.high %v5013, %v5029
    %v5039 = vcombine.low %v5020, %v5036
    %v5040 = vcombine.high %v5020, %v5036
    %v5041 = vcombine.low %v4809, %v4816
    %v5043 = vunpack.c.l.s4 1983009808
    %v5044 = vunpack.c.0.s8 %v5043
    %v5045 = vlaneseq
    %v5046 = vshrl.u32 %v5045, 7
    %v5047 = vsub.s32 %v5044, %v5046
    %v5048 = vrot.slane %v5041, %v5047
    %v5049 = vcombine.low %v4833, %v4834
    %v5051 = vunpack.c.l.s4 1983009808
    %v5052 = vunpack.c.0.s8 %v5051
    %v5053 = vlaneseq
    %v5054 = vshrl.u32 %v5053, 7
    %v5055 = vsub.s32 %v5052, %v5054
    %v5056 = vrot.slane %v5049, %v5055
    %v5057 = vcombine.low %v4825, %v4832
    %v5059 = vunpack.c.l.s4 1983009808
    %v5060 = vunpack.c.0.s8 %v5059
    %v5061 = vlaneseq
    %v5062 = vshrl.u32 %v5061, 7
    %v5063 = vsub.s32 %v5060, %v5062
    %v5064 = vrot.slane %v5057, %v5063
    %v5065 = vcombine.low %v4835, %v4836
    %v5067 = vunpack.c.l.s4 1983009808
    %v5068 = vunpack.c.0.s8 %v5067
    %v5069 = vlaneseq
    %v5070 = vshrl.u32 %v5069, 7
    %v5071 = vsub.s32 %v5068, %v5070
    %v5072 = vrot.slane %v5065, %v5071
    %v5073 = vcombine.low %v5048, %v5056
    %v5074 = vcombine.high %v5048, %v5056
    %v5076 = vunpack.c.l.s4 1934713408
    %v5077 = vunpack.c.0.s8 %v5076
    %v5078 = vlaneseq
    %v5079 = vshrl.u32 %v5078, 7
    %v5080 = vsub.s32 %v5077, %v5079
    %v5081 = vrot.slane %v5073, %v5080
    %v5083 = vunpack.c.l.s4 1934713408
    %v5084 = vunpack.c.0.s8 %v5083
    %v5085 = vlaneseq
    %v5086 = vshrl.u32 %v5085, 7
    %v5087 = vsub.s32 %v5084, %v5086
    %v5088 = vrot.slane %v5074, %v5087
    %v5089 = vcombine.low %v5064, %v5072
    %v5090 = vcombine.high %v5064, %v5072
    %v5092 = vunpack.c.l.s4 1934713408
    %v5093 = vunpack.c.0.s8 %v5092
    %v5094 = vlaneseq
    %v5095 = vshrl.u32 %v5094, 7
    %v5096 = vsub.s32 %v5093, %v5095
    %v5097 = vrot.slane %v5089, %v5096
    %v5099 = vunpack.c.l.s4 1934713408
    %v5100 = vunpack.c.0.s8 %v5099
    %v5101 = vlaneseq
    %v5102 = vshrl.u32 %v5101, 7
    %v5103 = vsub.s32 %v5100, %v5102
    %v5104 = vrot.slane %v5090, %v5103
    %v5105 = vcombine.low %v5081, %v5097
    %v5106 = vcombine.high %v5081, %v5097
    %v5107 = vcombine.low %v5088, %v5104
    %v5108 = vcombine.high %v5088, %v5104
    %5113 = vrot.lane.b32.xlu0 %v4902, 8
    %v5114 = vpop.permute.xlu0 %5113
    %5115 = vrot.lane.b32.xlu0 %v4970, 8
    %v5116 = vpop.permute.xlu0 %5115
    %5117 = vrot.lane.b32.xlu0 %v5038, 8
    %v5118 = vpop.permute.xlu0 %5117
    %5119 = vrot.lane.b32.xlu0 %v5106, 8
    %v5120 = vpop.permute.xlu0 %5119
    %5129 = vrot.lane.b32.xlu0 %v4903, 16
    %v5130 = vpop.permute.xlu0 %5129
    %5131 = vrot.lane.b32.xlu0 %v4971, 16
    %v5132 = vpop.permute.xlu0 %5131
    %5133 = vrot.lane.b32.xlu0 %v5039, 16
    %v5134 = vpop.permute.xlu0 %5133
    %5135 = vrot.lane.b32.xlu0 %v5107, 16
    %v5136 = vpop.permute.xlu0 %5135
    %5145 = vrot.lane.b32.xlu0 %v4904, 24
    %v5146 = vpop.permute.xlu0 %5145
    %5147 = vrot.lane.b32.xlu0 %v4972, 24
    %v5148 = vpop.permute.xlu0 %5147
    %5149 = vrot.lane.b32.xlu0 %v5040, 24
    %v5150 = vpop.permute.xlu0 %5149
    %5151 = vrot.lane.b32.xlu0 %v5108, 24
    %v5152 = vpop.permute.xlu0 %5151
    %v5157 = vsel %vm2004, %v4901, %v5114
    %v5158 = vsel %vm2004, %v4969, %v5116
    %v5159 = vsel %vm2004, %v5037, %v5118
    %v5160 = vsel %vm2004, %v5105, %v5120
    %vm5161 = vcmask 130048
    %v5162 = vsel %vm5161, %v5157, %v5130
    %v5163 = vsel %vm5161, %v5158, %v5132
    %v5164 = vsel %vm5161, %v5159, %v5134
    %v5165 = vsel %vm5161, %v5160, %v5136
    %vm5166 = vcmask 195584
    %v5167 = vsel %vm5166, %v5162, %v5146
    %v5168 = vsel %vm5166, %v5163, %v5148
    %v5169 = vsel %vm5166, %v5164, %v5150
    %v5170 = vsel %vm5166, %v5165, %v5152
    %v5171 = vld [vmem:[%s4] sm:$0xff]
    %v5172 = vld [vmem:[%s4 + $0x8] sm:$0xff]
    %v5173 = vld [vmem:[%s4 + $0x10] sm:$0xff]
    %v5174 = vld [vmem:[%s4 + $0x18] sm:$0xff]
    %v5175 = vld [vmem:[%s5] sm:$0x1]
    %v5177 = vlaneseq
    %v5178 = vshrl.u32 %v5177, 7
    %v5179 = vsub.s32 0, %v5178
    %v5180 = vrot.slane %v5175, %v5179
    %v5183 = vsel %vm61, %v5167, 0
    %v5186 = vsel %vm61, %v5168, 0
    %v5189 = vsel %vm61, %v5169, 0
    %v5192 = vsel %vm61, %v5170, 0
    %5194 = vmatprep.subr.mxu0 0.0
    %5195 = vmatpush1.msra.mxu0 %v5171
    %5196 = vmatprep.subr.mxu0 0.0
    %5197 = vmatpush1.msra.mxu0 %v5172
    %5198 = vmatprep.subr.mxu0 0.0
    %5199 = vmatpush1.msra.mxu0 %v5173
    %5200 = vmatprep.subr.mxu0 0.0
    %5201 = vmatpush1.msra.mxu0 %v5174
    %5202 = vmatprep.subr.mxu0 0.0
    %5203 = vmatpush1.msra.mxu0 0.0
    %5204 = vmatprep.subr.mxu0 0.0
    %5205 = vmatpush1.msra.mxu0 0.0
    %5206 = vmatprep.subr.mxu0 0.0
    %5207 = vmatpush1.msra.mxu0 0.0
    %5208 = vmatprep.subr.mxu0 0.0
    %5209 = vmatpush1.msra.mxu0 0.0
    %5210 = vmatprep.subr.mxu0 0.0
    %5211 = vmatpush1.msra.mxu0 0.0
    %5212 = vmatprep.subr.mxu0 0.0
    %5213 = vmatpush1.msra.mxu0 0.0
    %5214 = vmatprep.subr.mxu0 0.0
    %5215 = vmatpush1.msra.mxu0 0.0
    %5216 = vmatprep.subr.mxu0 0.0
    %5217 = vmatpush1.msra.mxu0 0.0
    %5218 = vmatprep.subr.mxu0 0.0
    %5219 = vmatpush1.msra.mxu0 0.0
    %5220 = vmatprep.subr.mxu0 0.0
    %5221 = vmatpush1.msra.mxu0 0.0
    %5222 = vmatprep.subr.mxu0 0.0
    %5223 = vmatpush1.msra.mxu0 0.0
    %5224 = vmatprep.subr.mxu0 0.0
    %5225 = vmatpush1.msra.mxu0 0.0
    %5226 = vmatprep.subr.mxu0 0.0
    %5227 = vmatpush1.msra.mxu0 0.0
    %5228 = vmatprep.subr.mxu0 0.0
    %5229 = vmatpush1.msra.mxu0 0.0
    %5230 = vmatprep.subr.mxu0 0.0
    %5231 = vmatpush1.msra.mxu0 0.0
    %5232 = vmatprep.subr.mxu0 0.0
    %5233 = vmatpush1.msra.mxu0 0.0
    %5234 = vmatprep.subr.mxu0 0.0
    %5235 = vmatpush1.msra.mxu0 0.0
    %5236 = vmatprep.subr.mxu0 0.0
    %5237 = vmatpush1.msra.mxu0 0.0
    %5238 = vmatprep.subr.mxu0 0.0
    %5239 = vmatpush1.msra.mxu0 0.0
    %5240 = vmatprep.subr.mxu0 0.0
    %5241 = vmatpush1.msra.mxu0 0.0
    %5242 = vmatprep.subr.mxu0 0.0
    %5243 = vmatpush1.msra.mxu0 0.0
    %5244 = vmatprep.subr.mxu0 0.0
    %5245 = vmatpush1.msra.mxu0 0.0
    %5246 = vmatprep.subr.mxu0 0.0
    %5247 = vmatpush1.msra.mxu0 0.0
    %5248 = vmatprep.subr.mxu0 0.0
    %5249 = vmatpush1.msra.mxu0 0.0
    %5250 = vmatprep.subr.mxu0 0.0
    %5251 = vmatpush1.msra.mxu0 0.0
    %5252 = vmatprep.subr.mxu0 0.0
    %5253 = vmatpush1.msra.mxu0 0.0
    %5254 = vmatprep.subr.mxu0 0.0
    %5255 = vmatpush1.msra.mxu0 0.0
    %5256 = vmatprep.subr.mxu0 0.0
    %5257 = vmatpush1.msra.mxu0 0.0
    %5258 = vmatprep.mubr.f32.mxu0 0.0
    %5259 = vmatmul.mubr.f32.gmra.mrb[0].mxu0 %v5183
    %v5260 = vpop.f32.mrb[0].mxu0
    %v5261 = vadd.f32 %v5180, %v5260
    %v5262 = vpop.f32.mrb[0].mxu0
    %5263 = vmatprep.mubr.f32.mxu0 0.0
    %5264 = vmatmul.mubr.f32.gmra.mrb[0].mxu0 %v5186
    %v5265 = vpop.f32.mrb[0].mxu0
    %v5266 = vadd.f32 %v5180, %v5265
    %v5267 = vpop.f32.mrb[0].mxu0
    %5268 = vmatprep.mubr.f32.mxu0 0.0
    %5269 = vmatmul.mubr.f32.gmra.mrb[0].mxu0 %v5189
    %v5270 = vpop.f32.mrb[0].mxu0
    %v5271 = vadd.f32 %v5180, %v5270
    %v5272 = vpop.f32.mrb[0].mxu0
    %5273 = vmatprep.mubr.f32.mxu0 0.0
    %5274 = vmatmul.mubr.f32.gmra.mrb[0].mxu0 %v5192
    %v5275 = vpop.f32.mrb[0].mxu0
    %v5276 = vadd.f32 %v5180, %v5275
    %v5277 = vpop.f32.mrb[0].mxu0
    %5278 = vdwg.mxu0
    %v5279 = vadd.f32 %v55, %v5261
    %v5280 = vadd.f32 %v56, %v5266
    %v5281 = vadd.f32 %v57, %v5271
    %v5282 = vadd.f32 %v58, %v5276
    %v5283 = vld [vmem:[%s6] sm:$0x1]
    %v5284 = vld [vmem:[%s7] sm:$0x1]
    %v5285 = vsel %vm61, %v5279, 0.0
    %5286 = vadd.xlane.f32.xlu0 %v5285
    %v5287 = vpop.xlane.xlu0 %5286
    %v5288 = vsel %vm61, %v5280, 0.0
    %5289 = vadd.xlane.f32.xlu0 %v5288
    %v5290 = vpop.xlane.xlu0 %5289
    %v5291 = vsel %vm61, %v5281, 0.0
    %5292 = vadd.xlane.f32.xlu0 %v5291
    %v5293 = vpop.xlane.xlu0 %5292
    %v5294 = vsel %vm61, %v5282, 0.0
    %5295 = vadd.xlane.f32.xlu0 %v5294
    %v5296 = vpop.xlane.xlu0 %5295
    %v5297 = vmul.f32 %v5287, %v74
    %v5298 = vmul.f32 %v5290, %v74
    %v5299 = vmul.f32 %v5293, %v74
    %v5300 = vmul.f32 %v5296, %v74
    %v5301 = vsub.f32 %v5279, %v5297
    %v5302 = vsub.f32 %v5280, %v5298
    %v5303 = vsub.f32 %v5281, %v5299
    %v5304 = vsub.f32 %v5282, %v5300
    %v5305 = vmul.f32 %v5301, %v5301
    %v5306 = vmul.f32 %v5302, %v5302
    %v5307 = vmul.f32 %v5303, %v5303
    %v5308 = vmul.f32 %v5304, %v5304
    %v5309 = vsel %vm61, %v5305, 0.0
    %5310 = vadd.xlane.f32.xlu0 %v5309
    %v5311 = vpop.xlane.xlu0 %5310
    %v5312 = vsel %vm61, %v5306, 0.0
    %5313 = vadd.xlane.f32.xlu0 %v5312
    %v5314 = vpop.xlane.xlu0 %5313
    %v5315 = vsel %vm61, %v5307, 0.0
    %5316 = vadd.xlane.f32.xlu0 %v5315
    %v5317 = vpop.xlane.xlu0 %5316
    %v5318 = vsel %vm61, %v5308, 0.0
    %5319 = vadd.xlane.f32.xlu0 %v5318
    %v5320 = vpop.xlane.xlu0 %5319
    %v5321 = vmul.f32 %v5311, %v74
    %v5322 = vmul.f32 %v5314, %v74
    %v5323 = vmul.f32 %v5317, %v74
    %v5324 = vmul.f32 %v5320, %v74
    %v5325 = vadd.f32 %v5321, 1e-05
    %v5326 = vadd.f32 %v5322, 1e-05
    %v5327 = vadd.f32 %v5323, 1e-05
    %v5328 = vadd.f32 %v5324, 1e-05
    %v5329 = vrsqrt.pop %v5325
    %v5330 = vrsqrt.pop %v5326
    %v5331 = vrsqrt.pop %v5327
    %v5332 = vrsqrt.pop %v5328
    %v5333 = vmul.f32 %v5301, %v5329
    %v5334 = vmul.f32 %v5302, %v5330
    %v5335 = vmul.f32 %v5303, %v5331
    %v5336 = vmul.f32 %v5304, %v5332
    %v5338 = vlaneseq
    %v5339 = vshrl.u32 %v5338, 7
    %v5340 = vsub.s32 0, %v5339
    %v5341 = vrot.slane %v5283, %v5340
    %v5343 = vmul.f32 %v5333, %v5341
    %v5344 = vmul.f32 %v5334, %v5341
    %v5345 = vmul.f32 %v5335, %v5341
    %v5346 = vmul.f32 %v5336, %v5341
    %v5348 = vlaneseq
    %v5349 = vshrl.u32 %v5348, 7
    %v5350 = vsub.s32 0, %v5349
    %v5351 = vrot.slane %v5284, %v5350
    %v5353 = vadd.f32 %v5343, %v5351
    %v5354 = vadd.f32 %v5344, %v5351
    %v5355 = vadd.f32 %v5345, %v5351
    %v5356 = vadd.f32 %v5346, %v5351
    %v5357 = vld [vmem:[%s8] sm:$0xff]
    %v5358 = vld [vmem:[%s8 + $0x8] sm:$0xff]
    %v5359 = vld [vmem:[%s8 + $0x10] sm:$0xff]
    %v5360 = vld [vmem:[%s8 + $0x18] sm:$0xff]
    %v5361 = vld [vmem:[%s9] sm:$0x1]
    %v5363 = vlaneseq
    %v5364 = vshrl.u32 %v5363, 7
    %v5365 = vsub.s32 0, %v5364
    %v5366 = vrot.slane %v5361, %v5365
    %v5369 = vsel %vm61, %v5353, 0
    %v5372 = vsel %vm61, %v5354, 0
    %v5375 = vsel %vm61, %v5355, 0
    %v5378 = vsel %vm61, %v5356, 0
    %5380 = vmatprep.subr.mxu0 0.0
    %5381 = vmatpush1.msra.mxu0 %v5357
    %5382 = vmatprep.subr.mxu0 0.0
    %5383 = vmatpush1.msra.mxu0 %v5358
    %5384 = vmatprep.subr.mxu0 0.0
    %5385 = vmatpush1.msra.mxu0 %v5359
    %5386 = vmatprep.subr.mxu0 0.0
    %5387 = vmatpush1.msra.mxu0 %v5360
    %5388 = vmatprep.subr.mxu0 0.0
    %5389 = vmatpush1.msra.mxu0 0.0
    %5390 = vmatprep.subr.mxu0 0.0
    %5391 = vmatpush1.msra.mxu0 0.0
    %5392 = vmatprep.subr.mxu0 0.0
    %5393 = vmatpush1.msra.mxu0 0.0
    %5394 = vmatprep.subr.mxu0 0.0
    %5395 = vmatpush1.msra.mxu0 0.0
    %5396 = vmatprep.subr.mxu0 0.0
    %5397 = vmatpush1.msra.mxu0 0.0
    %5398 = vmatprep.subr.mxu0 0.0
    %5399 = vmatpush1.msra.mxu0 0.0
    %5400 = vmatprep.subr.mxu0 0.0
    %5401 = vmatpush1.msra.mxu0 0.0
    %5402 = vmatprep.subr.mxu0 0.0
    %5403 = vmatpush1.msra.mxu0 0.0
    %5404 = vmatprep.subr.mxu0 0.0
    %5405 = vmatpush1.msra.mxu0 0.0
    %5406 = vmatprep.subr.mxu0 0.0
    %5407 = vmatpush1.msra.mxu0 0.0
    %5408 = vmatprep.subr.mxu0 0.0
    %5409 = vmatpush1.msra.mxu0 0.0
    %5410 = vmatprep.subr.mxu0 0.0
    %5411 = vmatpush1.msra.mxu0 0.0
    %5412 = vmatprep.subr.mxu0 0.0
    %5413 = vmatpush1.msra.mxu0 0.0
    %5414 = vmatprep.subr.mxu0 0.0
    %5415 = vmatpush1.msra.mxu0 0.0
    %5416 = vmatprep.subr.mxu0 0.0
    %5417 = vmatpush1.msra.mxu0 0.0
    %5418 = vmatprep.subr.mxu0 0.0
    %5419 = vmatpush1.msra.mxu0 0.0
    %5420 = vmatprep.subr.mxu0 0.0
    %5421 = vmatpush1.msra.mxu0 0.0
    %5422 = vmatprep.subr.mxu0 0.0
    %5423 = vmatpush1.msra.mxu0 0.0
    %5424 = vmatprep.subr.mxu0 0.0
    %5425 = vmatpush1.msra.mxu0 0.0
    %5426 = vmatprep.subr.mxu0 0.0
    %5427 = vmatpush1.msra.mxu0 0.0
    %5428 = vmatprep.subr.mxu0 0.0
    %5429 = vmatpush1.msra.mxu0 0.0
    %5430 = vmatprep.subr.mxu0 0.0
    %5431 = vmatpush1.msra.mxu0 0.0
    %5432 = vmatprep.subr.mxu0 0.0
    %5433 = vmatpush1.msra.mxu0 0.0
    %5434 = vmatprep.subr.mxu0 0.0
    %5435 = vmatpush1.msra.mxu0 0.0
    %5436 = vmatprep.subr.mxu0 0.0
    %5437 = vmatpush1.msra.mxu0 0.0
    %5438 = vmatprep.subr.mxu0 0.0
    %5439 = vmatpush1.msra.mxu0 0.0
    %5440 = vmatprep.subr.mxu0 0.0
    %5441 = vmatpush1.msra.mxu0 0.0
    %5442 = vmatprep.subr.mxu0 0.0
    %5443 = vmatpush1.msra.mxu0 0.0
    %5444 = vmatprep.mubr.f32.mxu0 0.0
    %5445 = vmatmul.mubr.f32.gmra.mrb[0].mxu0 %v5369
    %v5446 = vpop.f32.mrb[0].mxu0
    %v5447 = vadd.f32 %v5366, %v5446
    %v5448 = vpop.f32.mrb[0].mxu0
    %5449 = vmatprep.mubr.f32.mxu0 0.0
    %5450 = vmatmul.mubr.f32.gmra.mrb[0].mxu0 %v5372
    %v5451 = vpop.f32.mrb[0].mxu0
    %v5452 = vadd.f32 %v5366, %v5451
    %v5453 = vpop.f32.mrb[0].mxu0
    %5454 = vmatprep.mubr.f32.mxu0 0.0
    %5455 = vmatmul.mubr.f32.gmra.mrb[0].mxu0 %v5375
    %v5456 = vpop.f32.mrb[0].mxu0
    %v5457 = vadd.f32 %v5366, %v5456
    %v5458 = vpop.f32.mrb[0].mxu0
    %5459 = vmatprep.mubr.f32.mxu0 0.0
    %5460 = vmatmul.mubr.f32.gmra.mrb[0].mxu0 %v5378
    %v5461 = vpop.f32.mrb[0].mxu0
    %v5462 = vadd.f32 %v5366, %v5461
    %v5463 = vpop.f32.mrb[0].mxu0
    %5464 = vdwg.mxu0
    %v5465 = vmul.f32 %v5447, %v5447
    %v5466 = vmul.f32 %v5452, %v5452
    %v5467 = vmul.f32 %v5457, %v5457
    %v5468 = vmul.f32 %v5462, %v5462
    %v5469 = vmul.f32 %v5447, %v5465
    %v5470 = vmul.f32 %v5452, %v5466
    %v5471 = vmul.f32 %v5457, %v5467
    %v5472 = vmul.f32 %v5462, %v5468
    %v5473 = vmul.f32 %v5469, 0.044715
    %v5474 = vmul.f32 %v5470, 0.044715
    %v5475 = vmul.f32 %v5471, 0.044715
    %v5476 = vmul.f32 %v5472, 0.044715
    %v5477 = vadd.f32 %v5447, %v5473
    %v5478 = vadd.f32 %v5452, %v5474
    %v5479 = vadd.f32 %v5457, %v5475
    %v5480 = vadd.f32 %v5462, %v5476
    %v5481 = vmul.f32 %v5477, 0.7978846
    %v5482 = vmul.f32 %v5478, 0.7978846
    %v5483 = vmul.f32 %v5479, 0.7978846
    %v5484 = vmul.f32 %v5480, 0.7978846
    %v5485 = vtanh.pop %v5481
    %v5486 = vtanh.pop %v5482
    %v5487 = vtanh.pop %v5483
    %v5488 = vtanh.pop %v5484
    %v5489 = vadd.f32 %v5485, 1.0
    %v5490 = vadd.f32 %v5486, 1.0
    %v5491 = vadd.f32 %v5487, 1.0
    %v5492 = vadd.f32 %v5488, 1.0
    %v5493 = vmul.f32 %v5489, 0.5
    %v5494 = vmul.f32 %v5490, 0.5
    %v5495 = vmul.f32 %v5491, 0.5
    %v5496 = vmul.f32 %v5492, 0.5
    %v5497 = vmul.f32 %v5447, %v5493
    %v5498 = vmul.f32 %v5452, %v5494
    %v5499 = vmul.f32 %v5457, %v5495
    %v5500 = vmul.f32 %v5462, %v5496
    %v5501 = vld [vmem:[%s10] sm:$0xff]
    %v5502 = vld [vmem:[%s10 + $0x8] sm:$0xff]
    %v5503 = vld [vmem:[%s10 + $0x10] sm:$0xff]
    %v5504 = vld [vmem:[%s10 + $0x18] sm:$0xff]
    %v5505 = vld [vmem:[%s10 + $0x20] sm:$0xff]
    %v5506 = vld [vmem:[%s10 + $0x28] sm:$0xff]
    %v5507 = vld [vmem:[%s10 + $0x30] sm:$0xff]
    %v5508 = vld [vmem:[%s10 + $0x38] sm:$0xff]
    %v5509 = vld [vmem:[%s10 + $0x40] sm:$0xff]
    %v5510 = vld [vmem:[%s10 + $0x48] sm:$0xff]
    %v5511 = vld [vmem:[%s10 + $0x50] sm:$0xff]
    %v5512 = vld [vmem:[%s10 + $0x58] sm:$0xff]
    %v5513 = vld [vmem:[%s10 + $0x60] sm:$0xff]
    %v5514 = vld [vmem:[%s10 + $0x68] sm:$0xff]
    %v5515 = vld [vmem:[%s10 + $0x70] sm:$0xff]
    %v5516 = vld [vmem:[%s10 + $0x78] sm:$0xff]
    %v5517 = vld [vmem:[%s11] sm:$0x1]
    %v5519 = vlaneseq
    %v5520 = vshrl.u32 %v5519, 7
    %v5521 = vsub.s32 0, %v5520
    %v5522 = vrot.slane %v5517, %v5521
    %5524 = vmatprep.subr.mxu0 0.0
    %5525 = vmatpush1.msra.mxu0 %v5501
    %5526 = vmatprep.subr.mxu0 0.0
    %5527 = vmatpush1.msra.mxu0 %v5502
    %5528 = vmatprep.subr.mxu0 0.0
    %5529 = vmatpush1.msra.mxu0 %v5503
    %5530 = vmatprep.subr.mxu0 0.0
    %5531 = vmatpush1.msra.mxu0 %v5504
    %5532 = vmatprep.subr.mxu0 0.0
    %5533 = vmatpush1.msra.mxu0 %v5505
    %5534 = vmatprep.subr.mxu0 0.0
    %5535 = vmatpush1.msra.mxu0 %v5506
    %5536 = vmatprep.subr.mxu0 0.0
    %5537 = vmatpush1.msra.mxu0 %v5507
    %5538 = vmatprep.subr.mxu0 0.0
    %5539 = vmatpush1.msra.mxu0 %v5508
    %5540 = vmatprep.subr.mxu0 0.0
    %5541 = vmatpush1.msra.mxu0 %v5509
    %5542 = vmatprep.subr.mxu0 0.0
    %5543 = vmatpush1.msra.mxu0 %v5510
    %5544 = vmatprep.subr.mxu0 0.0
    %5545 = vmatpush1.msra.mxu0 %v5511
    %5546 = vmatprep.subr.mxu0 0.0
    %5547 = vmatpush1.msra.mxu0 %v5512
    %5548 = vmatprep.subr.mxu0 0.0
    %5549 = vmatpush1.msra.mxu0 %v5513
    %5550 = vmatprep.subr.mxu0 0.0
    %5551 = vmatpush1.msra.mxu0 %v5514
    %5552 = vmatprep.subr.mxu0 0.0
    %5553 = vmatpush1.msra.mxu0 %v5515
    %5554 = vmatprep.subr.mxu0 0.0
    %5555 = vmatpush1.msra.mxu0 %v5516
    %5556 = vmatprep.subr.mxu0 0.0
    %5557 = vmatpush1.msra.mxu0 0.0
    %5558 = vmatprep.subr.mxu0 0.0
    %5559 = vmatpush1.msra.mxu0 0.0
    %5560 = vmatprep.subr.mxu0 0.0
    %5561 = vmatpush1.msra.mxu0 0.0
    %5562 = vmatprep.subr.mxu0 0.0
    %5563 = vmatpush1.msra.mxu0 0.0
    %5564 = vmatprep.subr.mxu0 0.0
    %5565 = vmatpush1.msra.mxu0 0.0
    %5566 = vmatprep.subr.mxu0 0.0
    %5567 = vmatpush1.msra.mxu0 0.0
    %5568 = vmatprep.subr.mxu0 0.0
    %5569 = vmatpush1.msra.mxu0 0.0
    %5570 = vmatprep.subr.mxu0 0.0
    %5571 = vmatpush1.msra.mxu0 0.0
    %5572 = vmatprep.subr.mxu0 0.0
    %5573 = vmatpush1.msra.mxu0 0.0
    %5574 = vmatprep.subr.mxu0 0.0
    %5575 = vmatpush1.msra.mxu0 0.0
    %5576 = vmatprep.subr.mxu0 0.0
    %5577 = vmatpush1.msra.mxu0 0.0
    %5578 = vmatprep.subr.mxu0 0.0
    %5579 = vmatpush1.msra.mxu0 0.0
    %5580 = vmatprep.subr.mxu0 0.0
    %5581 = vmatpush1.msra.mxu0 0.0
    %5582 = vmatprep.subr.mxu0 0.0
    %5583 = vmatpush1.msra.mxu0 0.0
    %5584 = vmatprep.subr.mxu0 0.0
    %5585 = vmatpush1.msra.mxu0 0.0
    %5586 = vmatprep.subr.mxu0 0.0
    %5587 = vmatpush1.msra.mxu0 0.0
    %5588 = vmatprep.mubr.f32.mxu0 0.0
    %5589 = vmatmul.mubr.f32.gmra.mrb[0].mxu0 %v5497
    %v5590 = vpop.f32.mrb[0].mxu0
    %v5591 = vadd.f32 %v5522, %v5590
    %v5592 = vpop.f32.mrb[0].mxu0
    %5593 = vmatprep.mubr.f32.mxu0 0.0
    %5594 = vmatmul.mubr.f32.gmra.mrb[0].mxu0 %v5498
    %v5595 = vpop.f32.mrb[0].mxu0
    %v5596 = vadd.f32 %v5522, %v5595
    %v5597 = vpop.f32.mrb[0].mxu0
    %5598 = vmatprep.mubr.f32.mxu0 0.0
    %5599 = vmatmul.mubr.f32.gmra.mrb[0].mxu0 %v5499
    %v5600 = vpop.f32.mrb[0].mxu0
    %v5601 = vadd.f32 %v5522, %v5600
    %v5602 = vpop.f32.mrb[0].mxu0
    %5603 = vmatprep.mubr.f32.mxu0 0.0
    %5604 = vmatmul.mubr.f32.gmra.mrb[0].mxu0 %v5500
    %v5605 = vpop.f32.mrb[0].mxu0
    %v5606 = vadd.f32 %v5522, %v5605
    %v5607 = vpop.f32.mrb[0].mxu0
    %5608 = vdwg.mxu0
    %v5609 = vadd.f32 %v5279, %v5591
    %v5610 = vadd.f32 %v5280, %v5596
    %v5611 = vadd.f32 %v5281, %v5601
    %v5612 = vadd.f32 %v5282, %v5606
    %5613 = vst.msk [vmem:[#allocation2] sm:$0xff] %vm61, %v5609
    %5614 = vst.msk [vmem:[#allocation2 + $0x8] sm:$0xff] %vm61, %v5610
    %5615 = vst.msk [vmem:[#allocation2 + $0x10] sm:$0xff] %vm61, %v5611
    %5616 = vst.msk [vmem:[#allocation2 + $0x18] sm:$0xff] %vm61, %v5612
    // Predicated region
    $region54: #{tpu_custom_call.1} parent=1 // pred_check
      %p5617 = pneg %p42
    $region55: #{tpu_custom_call.1} parent=1 // pred_check_branch
      %5619 = sbr.rel (%p5617) target = $region57
    $region56: #{tpu_custom_call.1} parent=1 // pred_region
      %5620 = vst.msk [vmem:[#allocation3] sm:$0xff] %vm61, %v5609
      %5621 = vst.msk [vmem:[#allocation3 + $0x8] sm:$0xff] %vm61, %v5610
      %5622 = vst.msk [vmem:[#allocation3 + $0x10] sm:$0xff] %vm61, %v5611
      %5623 = vst.msk [vmem:[#allocation3 + $0x18] sm:$0xff] %vm61, %v5612
    $region57: #{tpu_custom_call.1} parent=1 // pred_fallthru
      _
    // Predicated region
    $region58: #{tpu_custom_call.1} parent=1 // pred_check
      _
    $region59: #{tpu_custom_call.1} parent=1 // pred_check_branch
      %5625 = sbr.rel (0) target = $region61
    $region60: #{tpu_custom_call.1} parent=1 // pred_region
      %s5627 = ssub.s32 512, 512
      %5628 = vsyncadd [#allocation4], %s5627
      %s5629 = sshll.u32 [#allocation3], 4
      %s5630 = int_to_ptr.vmem [resolvable:$true] %s5629
      %5635 = dma.vmem_to_hbm [thread:$0]  %s5630, 512, %s12, [#allocation4], 128, 128, 8
    $region61: #{tpu_custom_call.1} parent=1 // pred_fallthru
      _
    // Predicated region
    $region62: #{tpu_custom_call.1} parent=1 // pred_check
      _
    $region63: #{tpu_custom_call.1} parent=1 // pred_check_branch
      %5637 = sbr.rel (0) target = $region65
    $region64: #{tpu_custom_call.1} parent=1 // pred_region
      %5638 = dma.done [#allocation4], 512
    $region65: #{tpu_custom_call.1} parent=1 // pred_fallthru
      _
    %5639 = vsyncpa [#allocation4], 1

</llo_original>
